<compile_context>
chip_gen: v7x
topology: tpu7x:2x2x1
jax: 0.10.0
libtpu: 0.0.40
codegen_flags: <defaults>
</compile_context>

<pallas_src>
import functools

import jax
import jax.numpy as jnp
from jax.experimental import pallas as pl
from jax.experimental.pallas import tpu as pltpu


LANE_PAD = 128                 # lane-dense pad width; keep 128 on all generations
VMEM_LIMIT = 64 * 1024 * 1024  # explicit scoped-VMEM limit (v5e default is 16 MiB)


# --------------------------------------------------------------------------- #
# Kernel 1: fused input projection   HP = X @ [W_gl | W1 | 0]    (row-tiled)
# --------------------------------------------------------------------------- #
def _project_kernel(x_ref, wcat_ref, hp_ref):
    hp_ref[...] = jnp.dot(x_ref[...], wcat_ref[...],
                          preferred_element_type=jnp.float32)


# --------------------------------------------------------------------------- #
# Kernel 2: sparse graph learning (masked edge softmax) + GraphConv 1
#           + hoisted W2 projection (pre2 = ReLU(S @ HP) @ W2pad)
# --------------------------------------------------------------------------- #
def _graph_learn_kernel(hgl_blk_ref, hgl_t_ref, hp_full_ref, adj_ref,
                        w2pad_ref, a_ref, sgraph_ref, pre2_ref, *, hidden_gl):
    h_blk = hgl_blk_ref[...]                         # (TM, Hgl) f32 rows of X@W_gl
    h_t = hgl_t_ref[...]                             # (Hgl, N)  f32, precomputed T

    tm = sgraph_ref.shape[0]
    n = sgraph_ref.shape[1]

    # Pairwise edge scores, accumulated plane-by-plane (only one (TM, N)
    # accumulator live; never materializes the (Hgl, N, N) diff tensor):
    #   score[i, j] = sum_k a_k * |h[i, k] - h[j, k]|
    score = jnp.zeros((tm, n), jnp.float32)
    for k in range(hidden_gl):                       # static unroll, Hgl is small
        col = h_blk[:, k:k + 1]                      # (TM, 1)
        row = h_t[k:k + 1, :]                        # (1,  N)
        score = score + a_ref[k] * jnp.abs(col - row)
    score = jnp.maximum(score, 0.0)                  # act = ReLU

    # sparse softmax over existing edges == masked row softmax (int8-native mask)
    mask = adj_ref[...] != 0                         # (TM, N) bool
    neg_inf = jnp.float32(-1e30)
    logits = jnp.where(mask, score, neg_inf)
    m = jnp.max(logits, axis=1, keepdims=True)
    e = jnp.where(mask, jnp.exp(logits - m), 0.0)
    denom = jnp.maximum(jnp.sum(e, axis=1, keepdims=True), jnp.float32(1e-30))
    sgraph = (e * pl.reciprocal(denom, approx=True)).astype(jnp.bfloat16)
    sgraph_ref[...] = sgraph

    # GraphConv 1 + hoisted GraphConv-2 projection:
    #   pre2 = ReLU(S @ (X @ [W_gl|W1|0])) @ W2pad
    # The zero rows of W2pad kill the columns that do not belong to X@W1, so no
    # garbage lanes leak into pre2 (its lanes >= C are exactly zero).
    h1 = jnp.dot(sgraph, hp_full_ref[...], preferred_element_type=jnp.float32)
    h1 = jnp.maximum(h1, 0.0).astype(jnp.bfloat16)
    pre2 = jnp.dot(h1, w2pad_ref[...], preferred_element_type=jnp.float32)
    pre2_ref[...] = pre2.astype(jnp.bfloat16)


# --------------------------------------------------------------------------- #
# Kernel 3: GraphConv 2 propagation (S @ pre2) + class softmax (lane-padded)
# --------------------------------------------------------------------------- #
def _conv2_softmax_kernel(sg_ref, pre2_full_ref, probs_ref, *, num_classes):
    h2 = jnp.dot(sg_ref[...], pre2_full_ref[...],
                 preferred_element_type=jnp.float32)          # (TM, P) f32

    lane = jax.lax.broadcasted_iota(jnp.int32, h2.shape, 1)
    cmask = lane < num_classes
    neg_inf = jnp.float32(-1e30)
    logits = jnp.where(cmask, h2, neg_inf)
    m = jnp.max(logits, axis=1, keepdims=True)
    e = jnp.where(cmask, jnp.exp(logits - m), 0.0)
    denom = jnp.maximum(jnp.sum(e, axis=1, keepdims=True), jnp.float32(1e-30))
    probs_ref[...] = e * pl.reciprocal(denom, approx=True)


# --------------------------------------------------------------------------- #
# Wrapper
# --------------------------------------------------------------------------- #
@functools.partial(jax.jit, static_argnames=("block_m", "block_m_lin"))
def sglcn_forward(features, adj_mask, w_gl, a, w1, w2, *,
                  block_m=128, block_m_lin=256):
    """features: (1, N, F); adj_mask: (N, N).

    Returns (x_gl f32, sgraph bf16, probs f32)."""
    x = features[0]                                  # (N, F)
    n, f = x.shape
    hgl = w_gl.shape[1]
    hgcn = w1.shape[1]
    c = w2.shape[1]
    p = LANE_PAD
    assert n % block_m == 0 and block_m % 32 == 0    # int8 adj needs 32-sublane tiles
    assert hgl + hgcn <= p and c <= p
    # bigger row tiles for the cheap MXU-only kernels (amortize per-step overhead);
    # kernel 2 stays at block_m (vreg-pressure bound).
    bm_lin = block_m_lin if (block_m_lin <= n and n % block_m_lin == 0) else block_m

    # Fused / padded weights (wrapper-side, traced under jit).
    wcat = jnp.zeros((f, p), jnp.float32)
    wcat = wcat.at[:, :hgl].set(w_gl).at[:, hgl:hgl + hgcn].set(w1)
    w2pad = jnp.zeros((p, p), jnp.float32)
    w2pad = w2pad.at[hgl:hgl + hgcn, :c].set(w2)
    w2pad = w2pad.astype(jnp.bfloat16)

    adj_i8 = (adj_mask != 0).astype(jnp.int8)        # 4x smaller adjacency DMA
    a_vec = a.reshape(-1).astype(jnp.float32)        # (Hgl,) scalar table -> SMEM

    par = pltpu.CompilerParams(dimension_semantics=("parallel",),
                               vmem_limit_bytes=VMEM_LIMIT)

    # --- 1: HP = X @ [W_gl | W1 | 0] -----------------------------------------
    hp = pl.pallas_call(
        _project_kernel,
        out_shape=jax.ShapeDtypeStruct((n, p), jnp.float32),
        grid_spec=pltpu.PrefetchScalarGridSpec(
            num_scalar_prefetch=0,
            grid=(n // bm_lin,),
            in_specs=[pl.BlockSpec((bm_lin, f), lambda i: (i, 0)),
                      pl.BlockSpec((f, p), lambda i: (0, 0))],
            out_specs=pl.BlockSpec((bm_lin, p), lambda i: (i, 0))),
        compiler_params=par,
    )(x, wcat)

    # One-time wrapper-side prep of kernel-2's grid-invariant operands.
    h_gl = hp[:, :hgl]                               # (N, Hgl) f32  (= module's x)
    h_gl_t = h_gl.T                                  # (Hgl, N) f32  (one transpose)
    hp_bf16 = hp.astype(jnp.bfloat16)                # (N, P)   bf16 (one cast)

    # --- 2: graph learn (sgraph bf16) + GraphConv1 + hoisted W2 projection ----
    sgraph, pre2 = pl.pallas_call(
        functools.partial(_graph_learn_kernel, hidden_gl=hgl),
        out_shape=(jax.ShapeDtypeStruct((n, n), jnp.bfloat16),
                   jax.ShapeDtypeStruct((n, p), jnp.bfloat16)),
        grid_spec=pltpu.PrefetchScalarGridSpec(
            num_scalar_prefetch=0,
            grid=(n // block_m,),
            in_specs=[pl.BlockSpec((block_m, hgl), lambda i: (i, 0)),   # X@Wgl rows
                      pl.BlockSpec((hgl, n), lambda i: (0, 0)),         # (X@Wgl)^T
                      pl.BlockSpec((n, p), lambda i: (0, 0)),           # HP full bf16
                      pl.BlockSpec((block_m, n), lambda i: (i, 0)),     # adj rows i8
                      pl.BlockSpec((p, p), lambda i: (0, 0)),           # W2 padded
                      pl.BlockSpec(memory_space=pltpu.MemorySpace.SMEM)],
            out_specs=[pl.BlockSpec((block_m, n), lambda i: (i, 0)),
                       pl.BlockSpec((block_m, p), lambda i: (i, 0))]),
        compiler_params=par,
    )(h_gl, h_gl_t, hp_bf16, adj_i8, w2pad, a_vec)

    # --- 3: GraphConv 2 propagation + class softmax ----------------------------
    probs_pad = pl.pallas_call(
        functools.partial(_conv2_softmax_kernel, num_classes=c),
        out_shape=jax.ShapeDtypeStruct((n, p), jnp.float32),
        grid_spec=pltpu.PrefetchScalarGridSpec(
            num_scalar_prefetch=0,
            grid=(n // bm_lin,),
            in_specs=[pl.BlockSpec((bm_lin, n), lambda i: (i, 0)),      # sgraph rows
                      pl.BlockSpec((n, p), lambda i: (0, 0))],          # pre2 full
            out_specs=pl.BlockSpec((bm_lin, p), lambda i: (i, 0))),
        compiler_params=par,
    )(sgraph, pre2)

    probs = probs_pad[:, :c]      # softmax(H2)
    return h_gl, sgraph, probs


# ---------------------------- plain-JAX glue ------------------------------- #
def masked_accuracy(preds, labels, mask):
    correct = (jnp.argmax(preds, axis=1) == jnp.argmax(labels, axis=1)).astype(jnp.float32)
    m = mask.astype(jnp.float32)
    m = m / jnp.mean(m)
    return jnp.mean(correct * m)


def xavier_uniform(key, shape, gain):
    fan_in, fan_out = shape[0], shape[1]
    limit = gain * jnp.sqrt(6.0 / (fan_in + fan_out))
    return jax.random.uniform(key, shape, jnp.float32, -limit, limit)


def sglcn_reference(features, adj_mask, w_gl, a, w1, w2):
    """Pure-JAX reference of the same forward (f32, dense-mask softmax)."""
    x = features[0]
    h = x @ w_gl
    diff = jnp.abs(h[:, None, :] - h[None, :, :])          # (N, N, Hgl)
    score = jnp.maximum(jnp.einsum("ijk,k->ij", diff, a.reshape(-1)), 0.0)
    mask = adj_mask > 0
    logits = jnp.where(mask, score, -1e30)
    e = jnp.exp(logits - jnp.max(logits, axis=1, keepdims=True)) * mask
    sgraph = e / jnp.maximum(jnp.sum(e, axis=1, keepdims=True), 1e-30)
    h1 = jax.nn.relu(sgraph @ (x @ w1))
    h2 = sgraph @ (h1 @ w2)
    return h, sgraph, jax.nn.softmax(h2, axis=1)


if __name__ == "__main__":
    # Small, tile-friendly shapes consistent with the module's forward.
    N = 256        # num_nodes (kernel-2 blocks of 128, kernel-1/3 blocks of 256)
    F = 32         # input_dim
    HGL = 16       # hidden_gl
    HGCN = 32      # hidden_gcn
    C = 8          # output_dim (num classes)

    key = jax.random.PRNGKey(0)
    k_feat, k_adj, k_lab, k_mask, k_wgl, k_a, k_w1, k_w2 = jax.random.split(key, 8)

    features = jax.random.normal(k_feat, (1, N, F), jnp.float32)
    # sparse edge list of the original, modeled as a dense 0/1 mask with
    # self-loops so every row has at least one edge.
    adj_mask = (jax.random.uniform(k_adj, (N, N)) < 0.1).astype(jnp.float32)
    adj_mask = jnp.maximum(adj_mask, jnp.eye(N, dtype=jnp.float32))
    labels = jax.nn.one_hot(jax.random.randint(k_lab, (N,), 0, C), C, dtype=jnp.float32)
    labels_mask = (jax.random.uniform(k_mask, (N,)) < 0.5).astype(jnp.float32)
    labels_mask = labels_mask.at[0].set(1.0)

    gain = jnp.sqrt(2.0)   # relu gain, matching the torch init
    w_gl = xavier_uniform(k_wgl, (F, HGL), gain)
    a = xavier_uniform(k_a, (HGL, 1), gain)
    w1 = xavier_uniform(k_w1, (F, HGCN), gain)
    w2 = xavier_uniform(k_w2, (HGCN, C), gain)

    x_gl, sgraph, outputs = sglcn_forward(features, adj_mask, w_gl, a, w1, w2)
    acc = masked_accuracy(outputs, labels, labels_mask)
    jax.block_until_ready((x_gl, sgraph, outputs, acc))

    # sanity checks (sgraph is stored in bf16 by design; compare in f32)
    assert x_gl.shape == (N, HGL)
    assert sgraph.shape == (N, N)
    assert outputs.shape == (N, C)
    sg_f32 = sgraph.astype(jnp.float32)
    assert jnp.allclose(jnp.sum(sg_f32, axis=1), 1.0, atol=2e-2)
    assert jnp.allclose(jnp.sum(outputs, axis=1), 1.0, atol=2e-2)
    assert jnp.isfinite(acc)

    # loose reference check (kernel uses bf16 matmuls/storage + approx reciprocal)
    x_ref, sg_ref, p_ref = sglcn_reference(features, adj_mask, w_gl, a, w1, w2)
    assert jnp.max(jnp.abs(x_gl - x_ref)) < 1e-2
    assert jnp.max(jnp.abs(sg_f32 - sg_ref)) < 2e-2
    assert jnp.max(jnp.abs(outputs - p_ref)) < 5e-2

    print("KERNEL_OK")
</pallas_src>

<mosaic_0001>
module attributes {stable_mosaic.version = 11 : i64} {
  func.func @_project_kernel(%arg0: i32, %arg1: memref<256x32xf32, #tpu.memory_space<vmem>>, %arg2: memref<32x128xf32, #tpu.memory_space<vmem>>, %arg3: memref<256x128xf32, #tpu.memory_space<vmem>>) attributes {dimension_semantics = [#tpu.dimension_semantics<parallel>], iteration_bounds = array<i64: 1>, scalar_prefetch = 0 : i64, scratch_operands = 0 : i64, tpu.core_type = #tpu.core_type<tc>, window_params = [{transform_indices = @transform_0, window_bounds = array<i64: 256, 32>}, {pipeline_mode = #tpu.pipeline_mode<synchronous>, transform_indices = @transform_1, window_bounds = array<i64: 32, 128>}, {transform_indices = @transform_2, window_bounds = array<i64: 256, 128>}]} {
    %c0 = arith.constant 0 : index
    %c0_0 = arith.constant 0 : index
    %0 = vector.load %arg1[%c0, %c0_0] : memref<256x32xf32, #tpu.memory_space<vmem>>, vector<256x32xf32>
    %c0_1 = arith.constant 0 : index
    %c0_2 = arith.constant 0 : index
    %1 = vector.load %arg2[%c0_1, %c0_2] : memref<32x128xf32, #tpu.memory_space<vmem>>, vector<32x128xf32>
    %cst = arith.constant dense<0.000000e+00> : vector<256x128xf32>
    %2 = tpu.matmul %0, %1, %cst {dimension_numbers = #tpu.dot_dimension_numbers<[1], [0], [0], [1], [0, 0, 1, 1], [], []>} : vector<256x32xf32>, vector<32x128xf32>, vector<256x128xf32> -> vector<256x128xf32>
    %c0_3 = arith.constant 0 : index
    %c0_4 = arith.constant 0 : index
    %3 = vector.load %arg3[%c0_3, %c0_4] : memref<256x128xf32, #tpu.memory_space<vmem>>, vector<256x128xf32>
    tpu.vector_store %arg3[%c0_3, %c0_4], %2 {strides = array<i32>} : memref<256x128xf32, #tpu.memory_space<vmem>>, vector<256x128xf32>,
    return
  }
  func.func @transform_0(%arg0: i32) -> (i32, i32) {
    %c0_i32 = arith.constant 0 : i32
    %c0_i32_0 = arith.constant 0 : i32
    return %arg0, %c0_i32 : i32, i32
  }
  func.func @transform_1(%arg0: i32) -> (i32, i32) {
    %c0_i32 = arith.constant 0 : i32
    %c0_i32_0 = arith.constant 0 : i32
    %c0_i32_1 = arith.constant 0 : i32
    return %c0_i32, %c0_i32_0 : i32, i32
  }
  func.func @transform_2(%arg0: i32) -> (i32, i32) {
    %c0_i32 = arith.constant 0 : i32
    %c0_i32_0 = arith.constant 0 : i32
    return %arg0, %c0_i32 : i32, i32
  }
}

module attributes {stable_mosaic.version = 11 : i64} {
  func.func @_conv2_softmax_kernel(%arg0: i32, %arg1: memref<256x256xbf16, #tpu.memory_space<vmem>>, %arg2: memref<256x128xbf16, #tpu.memory_space<vmem>>, %arg3: memref<256x128xf32, #tpu.memory_space<vmem>>) attributes {dimension_semantics = [#tpu.dimension_semantics<parallel>], iteration_bounds = array<i64: 1>, scalar_prefetch = 0 : i64, scratch_operands = 0 : i64, tpu.core_type = #tpu.core_type<tc>, window_params = [{transform_indices = @transform_0, window_bounds = array<i64: 256, 256>}, {pipeline_mode = #tpu.pipeline_mode<synchronous>, transform_indices = @transform_1, window_bounds = array<i64: 256, 128>}, {transform_indices = @transform_2, window_bounds = array<i64: 256, 128>}]} {
    %c0 = arith.constant 0 : index
    %c0_0 = arith.constant 0 : index
    %0 = vector.load %arg1[%c0, %c0_0] : memref<256x256xbf16, #tpu.memory_space<vmem>>, vector<256x256xbf16>
    %c0_1 = arith.constant 0 : index
    %c0_2 = arith.constant 0 : index
    %1 = vector.load %arg2[%c0_1, %c0_2] : memref<256x128xbf16, #tpu.memory_space<vmem>>, vector<256x128xbf16>
    %cst = arith.constant dense<0.000000e+00> : vector<256x128xf32>
    %2 = tpu.matmul %0, %1, %cst {dimension_numbers = #tpu.dot_dimension_numbers<[1], [0], [0], [1], [0, 0, 1, 1], [], []>} : vector<256x256xbf16>, vector<256x128xbf16>, vector<256x128xf32> -> vector<256x128xf32>
    %3 = tpu.iota {dimensions = array<i32: 1>} : vector<256x128xi32>
    %c8_i32 = arith.constant 8 : i32
    %4 = vector.broadcast %c8_i32 : i32 to vector<256x128xi32>
    %5 = arith.cmpi slt, %3, %4 : vector<256x128xi32>
    %cst_3 = arith.constant -1.000000e+30 : f32
    %6 = vector.broadcast %cst_3 : f32 to vector<256x128xf32>
    %7 = arith.select %5, %2, %6 : vector<256x128xi1>, vector<256x128xf32>
    %cst_4 = arith.constant dense<0xFF800000> : vector<256xf32>
    %8 = vector.multi_reduction <maximumf>, %7, %cst_4 [1] : vector<256x128xf32> to vector<256xf32>
    %9 = vector.shape_cast %8 : vector<256xf32> to vector<256x1xf32>
    %10 = vector.broadcast %9 : vector<256x1xf32> to vector<256x128xf32>
    %11 = arith.subf %7, %10 : vector<256x128xf32>
    %12 = math.exp %11 : vector<256x128xf32>
    %cst_5 = arith.constant 0.000000e+00 : f32
    %13 = vector.broadcast %cst_5 : f32 to vector<256x128xf32>
    %14 = arith.select %5, %12, %13 : vector<256x128xi1>, vector<256x128xf32>
    %cst_6 = arith.constant dense<0.000000e+00> : vector<256xf32>
    %15 = vector.multi_reduction <add>, %14, %cst_6 [1] : vector<256x128xf32> to vector<256xf32>
    %16 = vector.shape_cast %15 : vector<256xf32> to vector<256x1xf32>
    %cst_7 = arith.constant 1.000000e-30 : f32
    %17 = vector.broadcast %cst_7 : f32 to vector<256x1xf32>
    %18 = arith.maximumf %16, %17 : vector<256x1xf32>
    %19 = tpu.reciprocal %18 {approx = true} : vector<256x1xf32> -> vector<256x1xf32>
    %20 = vector.broadcast %19 : vector<256x1xf32> to vector<256x128xf32>
    %21 = arith.mulf %14, %20 : vector<256x128xf32>
    %c0_8 = arith.constant 0 : index
    %c0_9 = arith.constant 0 : index
    %22 = vector.load %arg3[%c0_8, %c0_9] : memref<256x128xf32, #tpu.memory_space<vmem>>, vector<256x128xf32>
    tpu.vector_store %arg3[%c0_8, %c0_9], %21 {strides = array<i32>} : memref<256x128xf32, #tpu.memory_space<vmem>>, vector<256x128xf32>,
    return
  }
  func.func @transform_0(%arg0: i32) -> (i32, i32) {
    %c0_i32 = arith.constant 0 : i32
    %c0_i32_0 = arith.constant 0 : i32
    return %arg0, %c0_i32 : i32, i32
  }
  func.func @transform_1(%arg0: i32) -> (i32, i32) {
    %c0_i32 = arith.constant 0 : i32
    %c0_i32_0 = arith.constant 0 : i32
    %c0_i32_1 = arith.constant 0 : i32
    return %c0_i32, %c0_i32_0 : i32, i32
  }
  func.func @transform_2(%arg0: i32) -> (i32, i32) {
    %c0_i32 = arith.constant 0 : i32
    %c0_i32_0 = arith.constant 0 : i32
    return %arg0, %c0_i32 : i32, i32
  }
}

module attributes {stable_mosaic.version = 11 : i64} {
  func.func @_graph_learn_kernel(%arg0: i32, %arg1: memref<128x16xf32, #tpu.memory_space<vmem>>, %arg2: memref<16x256xf32, #tpu.memory_space<vmem>>, %arg3: memref<256x128xbf16, #tpu.memory_space<vmem>>, %arg4: memref<128x256xi8, #tpu.memory_space<vmem>>, %arg5: memref<128x128xbf16, #tpu.memory_space<vmem>>, %arg6: memref<16xf32, #tpu.memory_space<smem>>, %arg7: memref<128x256xbf16, #tpu.memory_space<vmem>>, %arg8: memref<128x128xbf16, #tpu.memory_space<vmem>>) attributes {dimension_semantics = [#tpu.dimension_semantics<parallel>], iteration_bounds = array<i64: 2>, scalar_prefetch = 0 : i64, scratch_operands = 0 : i64, tpu.core_type = #tpu.core_type<tc>, window_params = [{transform_indices = @transform_0, window_bounds = array<i64: 128, 16>}, {pipeline_mode = #tpu.pipeline_mode<synchronous>, transform_indices = @transform_1, window_bounds = array<i64: 16, 256>}, {pipeline_mode = #tpu.pipeline_mode<synchronous>, transform_indices = @transform_2, window_bounds = array<i64: 256, 128>}, {transform_indices = @transform_3, window_bounds = array<i64: 128, 256>}, {pipeline_mode = #tpu.pipeline_mode<synchronous>, transform_indices = @transform_4, window_bounds = array<i64: 128, 128>}, {transform_indices = @transform_5, window_bounds = array<i64: 16>}, {transform_indices = @transform_6, window_bounds = array<i64: 128, 256>}, {transform_indices = @transform_7, window_bounds = array<i64: 128, 128>}]} {
    %c0 = arith.constant 0 : index
    %c0_0 = arith.constant 0 : index
    %0 = vector.load %arg1[%c0, %c0_0] : memref<128x16xf32, #tpu.memory_space<vmem>>, vector<128x16xf32>
    %c0_1 = arith.constant 0 : index
    %c0_2 = arith.constant 0 : index
    %1 = vector.load %arg2[%c0_1, %c0_2] : memref<16x256xf32, #tpu.memory_space<vmem>>, vector<16x256xf32>
    %cst = arith.constant 0.000000e+00 : f32
    %2 = vector.broadcast %cst : f32 to vector<128x256xf32>
    %3 = vector.extract_strided_slice %0 {offsets = [0, 0], sizes = [128, 1], strides = [1, 1]} : vector<128x16xf32> to vector<128x1xf32>
    %4 = vector.extract_strided_slice %1 {offsets = [0, 0], sizes = [1, 256], strides = [1, 1]} : vector<16x256xf32> to vector<1x256xf32>
    %c0_3 = arith.constant 0 : index
    %5 = memref.load %arg6[%c0_3] : memref<16xf32, #tpu.memory_space<smem>>
    %6 = vector.broadcast %3 : vector<128x1xf32> to vector<128x256xf32>
    %7 = vector.broadcast %4 : vector<1x256xf32> to vector<128x256xf32>
    %8 = arith.subf %6, %7 : vector<128x256xf32>
    %9 = math.absf %8 : vector<128x256xf32>
    %10 = vector.broadcast %5 : f32 to vector<128x256xf32>
    %11 = arith.mulf %10, %9 : vector<128x256xf32>
    %12 = arith.addf %2, %11 : vector<128x256xf32>
    %13 = vector.extract_strided_slice %0 {offsets = [0, 1], sizes = [128, 1], strides = [1, 1]} : vector<128x16xf32> to vector<128x1xf32>
    %14 = vector.extract_strided_slice %1 {offsets = [1, 0], sizes = [1, 256], strides = [1, 1]} : vector<16x256xf32> to vector<1x256xf32>
    %c1 = arith.constant 1 : index
    %15 = memref.load %arg6[%c1] : memref<16xf32, #tpu.memory_space<smem>>
    %16 = vector.broadcast %13 : vector<128x1xf32> to vector<128x256xf32>
    %17 = vector.broadcast %14 : vector<1x256xf32> to vector<128x256xf32>
    %18 = arith.subf %16, %17 : vector<128x256xf32>
    %19 = math.absf %18 : vector<128x256xf32>
    %20 = vector.broadcast %15 : f32 to vector<128x256xf32>
    %21 = arith.mulf %20, %19 : vector<128x256xf32>
    %22 = arith.addf %12, %21 : vector<128x256xf32>
    %23 = vector.extract_strided_slice %0 {offsets = [0, 2], sizes = [128, 1], strides = [1, 1]} : vector<128x16xf32> to vector<128x1xf32>
    %24 = vector.extract_strided_slice %1 {offsets = [2, 0], sizes = [1, 256], strides = [1, 1]} : vector<16x256xf32> to vector<1x256xf32>
    %c2 = arith.constant 2 : index
    %25 = memref.load %arg6[%c2] : memref<16xf32, #tpu.memory_space<smem>>
    %26 = vector.broadcast %23 : vector<128x1xf32> to vector<128x256xf32>
    %27 = vector.broadcast %24 : vector<1x256xf32> to vector<128x256xf32>
    %28 = arith.subf %26, %27 : vector<128x256xf32>
    %29 = math.absf %28 : vector<128x256xf32>
    %30 = vector.broadcast %25 : f32 to vector<128x256xf32>
    %31 = arith.mulf %30, %29 : vector<128x256xf32>
    %32 = arith.addf %22, %31 : vector<128x256xf32>
    %33 = vector.extract_strided_slice %0 {offsets = [0, 3], sizes = [128, 1], strides = [1, 1]} : vector<128x16xf32> to vector<128x1xf32>
    %34 = vector.extract_strided_slice %1 {offsets = [3, 0], sizes = [1, 256], strides = [1, 1]} : vector<16x256xf32> to vector<1x256xf32>
    %c3 = arith.constant 3 : index
    %35 = memref.load %arg6[%c3] : memref<16xf32, #tpu.memory_space<smem>>
    %36 = vector.broadcast %33 : vector<128x1xf32> to vector<128x256xf32>
    %37 = vector.broadcast %34 : vector<1x256xf32> to vector<128x256xf32>
    %38 = arith.subf %36, %37 : vector<128x256xf32>
    %39 = math.absf %38 : vector<128x256xf32>
    %40 = vector.broadcast %35 : f32 to vector<128x256xf32>
    %41 = arith.mulf %40, %39 : vector<128x256xf32>
    %42 = arith.addf %32, %41 : vector<128x256xf32>
    %43 = vector.extract_strided_slice %0 {offsets = [0, 4], sizes = [128, 1], strides = [1, 1]} : vector<128x16xf32> to vector<128x1xf32>
    %44 = vector.extract_strided_slice %1 {offsets = [4, 0], sizes = [1, 256], strides = [1, 1]} : vector<16x256xf32> to vector<1x256xf32>
    %c4 = arith.constant 4 : index
    %45 = memref.load %arg6[%c4] : memref<16xf32, #tpu.memory_space<smem>>
    %46 = vector.broadcast %43 : vector<128x1xf32> to vector<128x256xf32>
    %47 = vector.broadcast %44 : vector<1x256xf32> to vector<128x256xf32>
    %48 = arith.subf %46, %47 : vector<128x256xf32>
    %49 = math.absf %48 : vector<128x256xf32>
    %50 = vector.broadcast %45 : f32 to vector<128x256xf32>
    %51 = arith.mulf %50, %49 : vector<128x256xf32>
    %52 = arith.addf %42, %51 : vector<128x256xf32>
    %53 = vector.extract_strided_slice %0 {offsets = [0, 5], sizes = [128, 1], strides = [1, 1]} : vector<128x16xf32> to vector<128x1xf32>
    %54 = vector.extract_strided_slice %1 {offsets = [5, 0], sizes = [1, 256], strides = [1, 1]} : vector<16x256xf32> to vector<1x256xf32>
    %c5 = arith.constant 5 : index
    %55 = memref.load %arg6[%c5] : memref<16xf32, #tpu.memory_space<smem>>
    %56 = vector.broadcast %53 : vector<128x1xf32> to vector<128x256xf32>
    %57 = vector.broadcast %54 : vector<1x256xf32> to vector<128x256xf32>
    %58 = arith.subf %56, %57 : vector<128x256xf32>
    %59 = math.absf %58 : vector<128x256xf32>
    %60 = vector.broadcast %55 : f32 to vector<128x256xf32>
    %61 = arith.mulf %60, %59 : vector<128x256xf32>
    %62 = arith.addf %52, %61 : vector<128x256xf32>
    %63 = vector.extract_strided_slice %0 {offsets = [0, 6], sizes = [128, 1], strides = [1, 1]} : vector<128x16xf32> to vector<128x1xf32>
    %64 = vector.extract_strided_slice %1 {offsets = [6, 0], sizes = [1, 256], strides = [1, 1]} : vector<16x256xf32> to vector<1x256xf32>
    %c6 = arith.constant 6 : index
    %65 = memref.load %arg6[%c6] : memref<16xf32, #tpu.memory_space<smem>>
    %66 = vector.broadcast %63 : vector<128x1xf32> to vector<128x256xf32>
    %67 = vector.broadcast %64 : vector<1x256xf32> to vector<128x256xf32>
    %68 = arith.subf %66, %67 : vector<128x256xf32>
    %69 = math.absf %68 : vector<128x256xf32>
    %70 = vector.broadcast %65 : f32 to vector<128x256xf32>
    %71 = arith.mulf %70, %69 : vector<128x256xf32>
    %72 = arith.addf %62, %71 : vector<128x256xf32>
    %73 = vector.extract_strided_slice %0 {offsets = [0, 7], sizes = [128, 1], strides = [1, 1]} : vector<128x16xf32> to vector<128x1xf32>
    %74 = vector.extract_strided_slice %1 {offsets = [7, 0], sizes = [1, 256], strides = [1, 1]} : vector<16x256xf32> to vector<1x256xf32>
    %c7 = arith.constant 7 : index
    %75 = memref.load %arg6[%c7] : memref<16xf32, #tpu.memory_space<smem>>
    %76 = vector.broadcast %73 : vector<128x1xf32> to vector<128x256xf32>
    %77 = vector.broadcast %74 : vector<1x256xf32> to vector<128x256xf32>
    %78 = arith.subf %76, %77 : vector<128x256xf32>
    %79 = math.absf %78 : vector<128x256xf32>
    %80 = vector.broadcast %75 : f32 to vector<128x256xf32>
    %81 = arith.mulf %80, %79 : vector<128x256xf32>
    %82 = arith.addf %72, %81 : vector<128x256xf32>
    %83 = vector.extract_strided_slice %0 {offsets = [0, 8], sizes = [128, 1], strides = [1, 1]} : vector<128x16xf32> to vector<128x1xf32>
    %84 = vector.extract_strided_slice %1 {offsets = [8, 0], sizes = [1, 256], strides = [1, 1]} : vector<16x256xf32> to vector<1x256xf32>
    %c8 = arith.constant 8 : index
    %85 = memref.load %arg6[%c8] : memref<16xf32, #tpu.memory_space<smem>>
    %86 = vector.broadcast %83 : vector<128x1xf32> to vector<128x256xf32>
    %87 = vector.broadcast %84 : vector<1x256xf32> to vector<128x256xf32>
    %88 = arith.subf %86, %87 : vector<128x256xf32>
    %89 = math.absf %88 : vector<128x256xf32>
    %90 = vector.broadcast %85 : f32 to vector<128x256xf32>
    %91 = arith.mulf %90, %89 : vector<128x256xf32>
    %92 = arith.addf %82, %91 : vector<128x256xf32>
    %93 = vector.extract_strided_slice %0 {offsets = [0, 9], sizes = [128, 1], strides = [1, 1]} : vector<128x16xf32> to vector<128x1xf32>
    %94 = vector.extract_strided_slice %1 {offsets = [9, 0], sizes = [1, 256], strides = [1, 1]} : vector<16x256xf32> to vector<1x256xf32>
    %c9 = arith.constant 9 : index
    %95 = memref.load %arg6[%c9] : memref<16xf32, #tpu.memory_space<smem>>
    %96 = vector.broadcast %93 : vector<128x1xf32> to vector<128x256xf32>
    %97 = vector.broadcast %94 : vector<1x256xf32> to vector<128x256xf32>
    %98 = arith.subf %96, %97 : vector<128x256xf32>
    %99 = math.absf %98 : vector<128x256xf32>
    %100 = vector.broadcast %95 : f32 to vector<128x256xf32>
    %101 = arith.mulf %100, %99 : vector<128x256xf32>
    %102 = arith.addf %92, %101 : vector<128x256xf32>
    %103 = vector.extract_strided_slice %0 {offsets = [0, 10], sizes = [128, 1], strides = [1, 1]} : vector<128x16xf32> to vector<128x1xf32>
    %104 = vector.extract_strided_slice %1 {offsets = [10, 0], sizes = [1, 256], strides = [1, 1]} : vector<16x256xf32> to vector<1x256xf32>
    %c10 = arith.constant 10 : index
    %105 = memref.load %arg6[%c10] : memref<16xf32, #tpu.memory_space<smem>>
    %106 = vector.broadcast %103 : vector<128x1xf32> to vector<128x256xf32>
    %107 = vector.broadcast %104 : vector<1x256xf32> to vector<128x256xf32>
    %108 = arith.subf %106, %107 : vector<128x256xf32>
    %109 = math.absf %108 : vector<128x256xf32>
    %110 = vector.broadcast %105 : f32 to vector<128x256xf32>
    %111 = arith.mulf %110, %109 : vector<128x256xf32>
    %112 = arith.addf %102, %111 : vector<128x256xf32>
    %113 = vector.extract_strided_slice %0 {offsets = [0, 11], sizes = [128, 1], strides = [1, 1]} : vector<128x16xf32> to vector<128x1xf32>
    %114 = vector.extract_strided_slice %1 {offsets = [11, 0], sizes = [1, 256], strides = [1, 1]} : vector<16x256xf32> to vector<1x256xf32>
    %c11 = arith.constant 11 : index
    %115 = memref.load %arg6[%c11] : memref<16xf32, #tpu.memory_space<smem>>
    %116 = vector.broadcast %113 : vector<128x1xf32> to vector<128x256xf32>
    %117 = vector.broadcast %114 : vector<1x256xf32> to vector<128x256xf32>
    %118 = arith.subf %116, %117 : vector<128x256xf32>
    %119 = math.absf %118 : vector<128x256xf32>
    %120 = vector.broadcast %115 : f32 to vector<128x256xf32>
    %121 = arith.mulf %120, %119 : vector<128x256xf32>
    %122 = arith.addf %112, %121 : vector<128x256xf32>
    %123 = vector.extract_strided_slice %0 {offsets = [0, 12], sizes = [128, 1], strides = [1, 1]} : vector<128x16xf32> to vector<128x1xf32>
    %124 = vector.extract_strided_slice %1 {offsets = [12, 0], sizes = [1, 256], strides = [1, 1]} : vector<16x256xf32> to vector<1x256xf32>
    %c12 = arith.constant 12 : index
    %125 = memref.load %arg6[%c12] : memref<16xf32, #tpu.memory_space<smem>>
    %126 = vector.broadcast %123 : vector<128x1xf32> to vector<128x256xf32>
    %127 = vector.broadcast %124 : vector<1x256xf32> to vector<128x256xf32>
    %128 = arith.subf %126, %127 : vector<128x256xf32>
    %129 = math.absf %128 : vector<128x256xf32>
    %130 = vector.broadcast %125 : f32 to vector<128x256xf32>
    %131 = arith.mulf %130, %129 : vector<128x256xf32>
    %132 = arith.addf %122, %131 : vector<128x256xf32>
    %133 = vector.extract_strided_slice %0 {offsets = [0, 13], sizes = [128, 1], strides = [1, 1]} : vector<128x16xf32> to vector<128x1xf32>
    %134 = vector.extract_strided_slice %1 {offsets = [13, 0], sizes = [1, 256], strides = [1, 1]} : vector<16x256xf32> to vector<1x256xf32>
    %c13 = arith.constant 13 : index
    %135 = memref.load %arg6[%c13] : memref<16xf32, #tpu.memory_space<smem>>
    %136 = vector.broadcast %133 : vector<128x1xf32> to vector<128x256xf32>
    %137 = vector.broadcast %134 : vector<1x256xf32> to vector<128x256xf32>
    %138 = arith.subf %136, %137 : vector<128x256xf32>
    %139 = math.absf %138 : vector<128x256xf32>
    %140 = vector.broadcast %135 : f32 to vector<128x256xf32>
    %141 = arith.mulf %140, %139 : vector<128x256xf32>
    %142 = arith.addf %132, %141 : vector<128x256xf32>
    %143 = vector.extract_strided_slice %0 {offsets = [0, 14], sizes = [128, 1], strides = [1, 1]} : vector<128x16xf32> to vector<128x1xf32>
    %144 = vector.extract_strided_slice %1 {offsets = [14, 0], sizes = [1, 256], strides = [1, 1]} : vector<16x256xf32> to vector<1x256xf32>
    %c14 = arith.constant 14 : index
    %145 = memref.load %arg6[%c14] : memref<16xf32, #tpu.memory_space<smem>>
    %146 = vector.broadcast %143 : vector<128x1xf32> to vector<128x256xf32>
    %147 = vector.broadcast %144 : vector<1x256xf32> to vector<128x256xf32>
    %148 = arith.subf %146, %147 : vector<128x256xf32>
    %149 = math.absf %148 : vector<128x256xf32>
    %150 = vector.broadcast %145 : f32 to vector<128x256xf32>
    %151 = arith.mulf %150, %149 : vector<128x256xf32>
    %152 = arith.addf %142, %151 : vector<128x256xf32>
    %153 = vector.extract_strided_slice %0 {offsets = [0, 15], sizes = [128, 1], strides = [1, 1]} : vector<128x16xf32> to vector<128x1xf32>
    %154 = vector.extract_strided_slice %1 {offsets = [15, 0], sizes = [1, 256], strides = [1, 1]} : vector<16x256xf32> to vector<1x256xf32>
    %c15 = arith.constant 15 : index
    %155 = memref.load %arg6[%c15] : memref<16xf32, #tpu.memory_space<smem>>
    %156 = vector.broadcast %153 : vector<128x1xf32> to vector<128x256xf32>
    %157 = vector.broadcast %154 : vector<1x256xf32> to vector<128x256xf32>
    %158 = arith.subf %156, %157 : vector<128x256xf32>
    %159 = math.absf %158 : vector<128x256xf32>
    %160 = vector.broadcast %155 : f32 to vector<128x256xf32>
    %161 = arith.mulf %160, %159 : vector<128x256xf32>
    %162 = arith.addf %152, %161 : vector<128x256xf32>
    %cst_4 = arith.constant 0.000000e+00 : f32
    %163 = vector.broadcast %cst_4 : f32 to vector<128x256xf32>
    %164 = arith.maximumf %162, %163 : vector<128x256xf32>
    %c0_5 = arith.constant 0 : index
    %c0_6 = arith.constant 0 : index
    %165 = vector.load %arg4[%c0_5, %c0_6] : memref<128x256xi8, #tpu.memory_space<vmem>>, vector<128x256xi8>
    %c0_i8 = arith.constant 0 : i8
    %166 = vector.broadcast %c0_i8 : i8 to vector<128x256xi8>
    %167 = arith.cmpi ne, %165, %166 : vector<128x256xi8>
    %cst_7 = arith.constant -1.000000e+30 : f32
    %168 = vector.broadcast %cst_7 : f32 to vector<128x256xf32>
    %169 = arith.select %167, %164, %168 : vector<128x256xi1>, vector<128x256xf32>
    %cst_8 = arith.constant dense<0xFF800000> : vector<128xf32>
    %170 = vector.multi_reduction <maximumf>, %169, %cst_8 [1] : vector<128x256xf32> to vector<128xf32>
    %171 = vector.shape_cast %170 : vector<128xf32> to vector<128x1xf32>
    %172 = vector.broadcast %171 : vector<128x1xf32> to vector<128x256xf32>
    %173 = arith.subf %169, %172 : vector<128x256xf32>
    %174 = math.exp %173 : vector<128x256xf32>
    %cst_9 = arith.constant 0.000000e+00 : f32
    %175 = vector.broadcast %cst_9 : f32 to vector<128x256xf32>
    %176 = arith.select %167, %174, %175 : vector<128x256xi1>, vector<128x256xf32>
    %cst_10 = arith.constant dense<0.000000e+00> : vector<128xf32>
    %177 = vector.multi_reduction <add>, %176, %cst_10 [1] : vector<128x256xf32> to vector<128xf32>
    %178 = vector.shape_cast %177 : vector<128xf32> to vector<128x1xf32>
    %cst_11 = arith.constant 1.000000e-30 : f32
    %179 = vector.broadcast %cst_11 : f32 to vector<128x1xf32>
    %180 = arith.maximumf %178, %179 : vector<128x1xf32>
    %181 = tpu.reciprocal %180 {approx = true} : vector<128x1xf32> -> vector<128x1xf32>
    %182 = vector.broadcast %181 : vector<128x1xf32> to vector<128x256xf32>
    %183 = arith.mulf %176, %182 : vector<128x256xf32>
    %184 = arith.truncf %183 : vector<128x256xf32> to vector<128x256xbf16>
    %c0_12 = arith.constant 0 : index
    %c0_13 = arith.constant 0 : index
    %185 = vector.load %arg7[%c0_12, %c0_13] : memref<128x256xbf16, #tpu.memory_space<vmem>>, vector<128x256xbf16>
    tpu.vector_store %arg7[%c0_12, %c0_13], %184 {strides = array<i32>} : memref<128x256xbf16, #tpu.memory_space<vmem>>, vector<128x256xbf16>,
    %c0_14 = arith.constant 0 : index
    %c0_15 = arith.constant 0 : index
    %186 = vector.load %arg3[%c0_14, %c0_15] : memref<256x128xbf16, #tpu.memory_space<vmem>>, vector<256x128xbf16>
    %cst_16 = arith.constant dense<0.000000e+00> : vector<128x128xf32>
    %187 = tpu.matmul %184, %186, %cst_16 {dimension_numbers = #tpu.dot_dimension_numbers<[1], [0], [0], [1], [0, 0, 1, 1], [], []>} : vector<128x256xbf16>, vector<256x128xbf16>, vector<128x128xf32> -> vector<128x128xf32>
    %cst_17 = arith.constant 0.000000e+00 : f32
    %188 = vector.broadcast %cst_17 : f32 to vector<128x128xf32>
    %189 = arith.maximumf %187, %188 : vector<128x128xf32>
    %190 = arith.truncf %189 : vector<128x128xf32> to vector<128x128xbf16>
    %c0_18 = arith.constant 0 : index
    %c0_19 = arith.constant 0 : index
    %191 = vector.load %arg5[%c0_18, %c0_19] : memref<128x128xbf16, #tpu.memory_space<vmem>>, vector<128x128xbf16>
    %cst_20 = arith.constant dense<0.000000e+00> : vector<128x128xf32>
    %192 = tpu.matmul %190, %191, %cst_20 {dimension_numbers = #tpu.dot_dimension_numbers<[1], [0], [0], [1], [0, 0, 1, 1], [], []>} : vector<128x128xbf16>, vector<128x128xbf16>, vector<128x128xf32> -> vector<128x128xf32>
    %193 = arith.truncf %192 : vector<128x128xf32> to vector<128x128xbf16>
    %c0_21 = arith.constant 0 : index
    %c0_22 = arith.constant 0 : index
    %194 = vector.load %arg8[%c0_21, %c0_22] : memref<128x128xbf16, #tpu.memory_space<vmem>>, vector<128x128xbf16>
    tpu.vector_store %arg8[%c0_21, %c0_22], %193 {strides = array<i32>} : memref<128x128xbf16, #tpu.memory_space<vmem>>, vector<128x128xbf16>,
    return
  }
  func.func @transform_0(%arg0: i32) -> (i32, i32) {
    %c0_i32 = arith.constant 0 : i32
    %c0_i32_0 = arith.constant 0 : i32
    return %arg0, %c0_i32 : i32, i32
  }
  func.func @transform_1(%arg0: i32) -> (i32, i32) {
    %c0_i32 = arith.constant 0 : i32
    %c0_i32_0 = arith.constant 0 : i32
    %c0_i32_1 = arith.constant 0 : i32
    return %c0_i32, %c0_i32_0 : i32, i32
  }
  func.func @transform_2(%arg0: i32) -> (i32, i32) {
    %c0_i32 = arith.constant 0 : i32
    %c0_i32_0 = arith.constant 0 : i32
    %c0_i32_1 = arith.constant 0 : i32
    return %c0_i32, %c0_i32_0 : i32, i32
  }
  func.func @transform_3(%arg0: i32) -> (i32, i32) {
    %c0_i32 = arith.constant 0 : i32
    %c0_i32_0 = arith.constant 0 : i32
    return %arg0, %c0_i32 : i32, i32
  }
  func.func @transform_4(%arg0: i32) -> (i32, i32) {
    %c0_i32 = arith.constant 0 : i32
    %c0_i32_0 = arith.constant 0 : i32
    %c0_i32_1 = arith.constant 0 : i32
    return %c0_i32, %c0_i32_0 : i32, i32
  }
  func.func @transform_5(%arg0: i32) -> i32 {
    %c0_i32 = arith.constant 0 : i32
    %c0_i32_0 = arith.constant 0 : i32
    return %c0_i32 : i32
  }
  func.func @transform_6(%arg0: i32) -> (i32, i32) {
    %c0_i32 = arith.constant 0 : i32
    %c0_i32_0 = arith.constant 0 : i32
    return %arg0, %c0_i32 : i32, i32
  }
  func.func @transform_7(%arg0: i32) -> (i32, i32) {
    %c0_i32 = arith.constant 0 : i32
    %c0_i32_0 = arith.constant 0 : i32
    return %arg0, %c0_i32 : i32, i32
  }
}

</mosaic_0001>

<llo_original>
// kernel: sglcn_forward.3
$region0: #{sglcn_forward.3}
  #allocation0 [shape = 'u32[]', space=smem, size = 0x4, offset = 0x4, fixed_abs, tag = 'smem constant byte address 0x4 - core index']
  #allocation1 [shape = 'u32[144,128]{1,0:T(1,128)}', space=vmem, size = 0x12000, scoped, tag = 'internal scratch']
  %s0 = inlined_call_operand.hbm [shape: f32[256,32], index: 0, kind: input, shape index: {}]
  %s1 = inlined_call_operand.hbm [shape: f32[32,128], index: 1, kind: input, shape index: {}]
  %s2 = inlined_call_operand.hbm [shape: f32[256,128], index: 2, kind: output, shape index: {}]
  %s3 = sld [smem:[#allocation0]]
  $region26: #{sglcn_forward.3} parent=0
    _
  %s5 = ssub.s32 1, %s3
  %s6 = scalar_select 0, %s5, %s3
  $region1: #{sglcn_forward.3} parent=0
    #allocation2 [shape = 'u8[131072]{0}', space=vmem, size = 0x20000, scoped, tag = 'input window, operand 0, single buffered']
    #allocation3 [shape = 's32[1]{0}', space=sflag, size = 0x4, scoped, tag = 'scoped memory for sglcn_forward.3']
    #allocation4 [shape = 's32[1]{0}', space=sflag, size = 0x4, scoped, tag = 'scoped memory for sglcn_forward.3']
    #allocation5 [shape = 'u8[16384]{0}', space=vmem, size = 0x4000, scoped, tag = 'input window, operand 1, single buffered']
    #allocation6 [shape = 's32[1]{0}', space=sflag, size = 0x4, scoped, tag = 'scoped memory for sglcn_forward.3']
    #allocation7 [shape = 'u8[131072]{0}', space=vmem, size = 0x20000, scoped, tag = 'output window, operand 0, single buffered']
    %7 = vsyncpa [#allocation3], 0
    %8 = vsyncpa [#allocation6], 0
    %9 = vsyncpa [#allocation4], 0
    // Predicated region
    $region2: #{sglcn_forward.3} parent=1 // pred_check
      _
    $region3: #{sglcn_forward.3} parent=1 // pred_check_branch
      %11 = sbr.rel (0) target = $region5
    $region4: #{sglcn_forward.3} parent=1 // pred_region
      %s13 = ssub.s32 4096, 4096
      %14 = vsyncadd [#allocation3], %s13
      %s15 = sshll.u32 [#allocation2], 4
      %s16 = int_to_ptr.vmem [resolvable:$true] %s15
      %21 = dma.hbm_to_vmem [thread:$0]  %s0, 4096, %s16, [#allocation3], 128, 128, 8
    $region5: #{sglcn_forward.3} parent=1 // pred_fallthru
      _
    // Predicated region
    $region6: #{sglcn_forward.3} parent=1 // pred_check
      _
    $region7: #{sglcn_forward.3} parent=1 // pred_check_branch
      %23 = sbr.rel (0) target = $region9
    $region8: #{sglcn_forward.3} parent=1 // pred_region
      %s25 = ssub.s32 512, 512
      %26 = vsyncadd [#allocation6], %s25
      %s27 = sshll.u32 [#allocation5], 4
      %s28 = int_to_ptr.vmem [resolvable:$true] %s27
      %33 = dma.hbm_to_vmem [thread:$0]  %s1, 512, %s28, [#allocation6], 128, 128, 8
    $region9: #{sglcn_forward.3} parent=1 // pred_fallthru
      _
    // Predicated region
    $region10: #{sglcn_forward.3} parent=1 // pred_check
      _
    $region11: #{sglcn_forward.3} parent=1 // pred_check_branch
      %35 = sbr.rel (0) target = $region13
    $region12: #{sglcn_forward.3} parent=1 // pred_region
      %36 = dma.done [#allocation3], 4096
    $region13: #{sglcn_forward.3} parent=1 // pred_fallthru
      _
    // Predicated region
    $region14: #{sglcn_forward.3} parent=1 // pred_check
      _
    $region15: #{sglcn_forward.3} parent=1 // pred_check_branch
      %38 = sbr.rel (0) target = $region17
    $region16: #{sglcn_forward.3} parent=1 // pred_region
      %39 = dma.done [#allocation6], 512
    $region17: #{sglcn_forward.3} parent=1 // pred_fallthru
      _
    %v40 = vld [vmem:[#allocation2] sm:$0xff]
    %v41 = vld [vmem:[#allocation2 + $0x8] sm:$0xff]
    %v42 = vld [vmem:[#allocation2 + $0x10] sm:$0xff]
    %v43 = vld [vmem:[#allocation2 + $0x18] sm:$0xff]
    %v44 = vld [vmem:[#allocation2 + $0x20] sm:$0xff]
    %v45 = vld [vmem:[#allocation2 + $0x28] sm:$0xff]
    %v46 = vld [vmem:[#allocation2 + $0x30] sm:$0xff]
    %v47 = vld [vmem:[#allocation2 + $0x38] sm:$0xff]
    %v48 = vld [vmem:[#allocation2 + $0x40] sm:$0xff]
    %v49 = vld [vmem:[#allocation2 + $0x48] sm:$0xff]
    %v50 = vld [vmem:[#allocation2 + $0x50] sm:$0xff]
    %v51 = vld [vmem:[#allocation2 + $0x58] sm:$0xff]
    %v52 = vld [vmem:[#allocation2 + $0x60] sm:$0xff]
    %v53 = vld [vmem:[#allocation2 + $0x68] sm:$0xff]
    %v54 = vld [vmem:[#allocation2 + $0x70] sm:$0xff]
    %v55 = vld [vmem:[#allocation2 + $0x78] sm:$0xff]
    %v56 = vld [vmem:[#allocation2 + $0x80] sm:$0xff]
    %v57 = vld [vmem:[#allocation2 + $0x88] sm:$0xff]
    %v58 = vld [vmem:[#allocation2 + $0x90] sm:$0xff]
    %v59 = vld [vmem:[#allocation2 + $0x98] sm:$0xff]
    %v60 = vld [vmem:[#allocation2 + $0xa0] sm:$0xff]
    %v61 = vld [vmem:[#allocation2 + $0xa8] sm:$0xff]
    %v62 = vld [vmem:[#allocation2 + $0xb0] sm:$0xff]
    %v63 = vld [vmem:[#allocation2 + $0xb8] sm:$0xff]
    %v64 = vld [vmem:[#allocation2 + $0xc0] sm:$0xff]
    %v65 = vld [vmem:[#allocation2 + $0xc8] sm:$0xff]
    %v66 = vld [vmem:[#allocation2 + $0xd0] sm:$0xff]
    %v67 = vld [vmem:[#allocation2 + $0xd8] sm:$0xff]
    %v68 = vld [vmem:[#allocation2 + $0xe0] sm:$0xff]
    %v69 = vld [vmem:[#allocation2 + $0xe8] sm:$0xff]
    %v70 = vld [vmem:[#allocation2 + $0xf0] sm:$0xff]
    %v71 = vld [vmem:[#allocation2 + $0xf8] sm:$0xff]
    %v72 = vld [vmem:[#allocation5] sm:$0xff]
    %v73 = vld [vmem:[#allocation5 + $0x8] sm:$0xff]
    %v74 = vld [vmem:[#allocation5 + $0x10] sm:$0xff]
    %v75 = vld [vmem:[#allocation5 + $0x18] sm:$0xff]
    %vm76 = vcmask 261120
    %v78 = vsel %vm76, %v40, 0
    %v81 = vsel %vm76, %v41, 0
    %v84 = vsel %vm76, %v42, 0
    %v87 = vsel %vm76, %v43, 0
    %v90 = vsel %vm76, %v44, 0
    %v93 = vsel %vm76, %v45, 0
    %v96 = vsel %vm76, %v46, 0
    %v99 = vsel %vm76, %v47, 0
    %v102 = vsel %vm76, %v48, 0
    %v105 = vsel %vm76, %v49, 0
    %v108 = vsel %vm76, %v50, 0
    %v111 = vsel %vm76, %v51, 0
    %v114 = vsel %vm76, %v52, 0
    %v117 = vsel %vm76, %v53, 0
    %v120 = vsel %vm76, %v54, 0
    %v123 = vsel %vm76, %v55, 0
    %v126 = vsel %vm76, %v56, 0
    %v129 = vsel %vm76, %v57, 0
    %v132 = vsel %vm76, %v58, 0
    %v135 = vsel %vm76, %v59, 0
    %v138 = vsel %vm76, %v60, 0
    %v141 = vsel %vm76, %v61, 0
    %v144 = vsel %vm76, %v62, 0
    %v147 = vsel %vm76, %v63, 0
    %v150 = vsel %vm76, %v64, 0
    %v153 = vsel %vm76, %v65, 0
    %v156 = vsel %vm76, %v66, 0
    %v159 = vsel %vm76, %v67, 0
    %v162 = vsel %vm76, %v68, 0
    %v165 = vsel %vm76, %v69, 0
    %v168 = vsel %vm76, %v70, 0
    %v171 = vsel %vm76, %v71, 0
    %173 = vmatprep.subr.mxu0 0.0
    %174 = vmatpush1.msra.mxu0 %v72
    %175 = vmatprep.subr.mxu0 0.0
    %176 = vmatpush1.msra.mxu0 %v73
    %177 = vmatprep.subr.mxu0 0.0
    %178 = vmatpush1.msra.mxu0 %v74
    %179 = vmatprep.subr.mxu0 0.0
    %180 = vmatpush1.msra.mxu0 %v75
    %181 = vmatprep.subr.mxu0 0.0
    %182 = vmatpush1.msra.mxu0 0.0
    %183 = vmatprep.subr.mxu0 0.0
    %184 = vmatpush1.msra.mxu0 0.0
    %185 = vmatprep.subr.mxu0 0.0
    %186 = vmatpush1.msra.mxu0 0.0
    %187 = vmatprep.subr.mxu0 0.0
    %188 = vmatpush1.msra.mxu0 0.0
    %189 = vmatprep.subr.mxu0 0.0
    %190 = vmatpush1.msra.mxu0 0.0
    %191 = vmatprep.subr.mxu0 0.0
    %192 = vmatpush1.msra.mxu0 0.0
    %193 = vmatprep.subr.mxu0 0.0
    %194 = vmatpush1.msra.mxu0 0.0
    %195 = vmatprep.subr.mxu0 0.0
    %196 = vmatpush1.msra.mxu0 0.0
    %197 = vmatprep.subr.mxu0 0.0
    %198 = vmatpush1.msra.mxu0 0.0
    %199 = vmatprep.subr.mxu0 0.0
    %200 = vmatpush1.msra.mxu0 0.0
    %201 = vmatprep.subr.mxu0 0.0
    %202 = vmatpush1.msra.mxu0 0.0
    %203 = vmatprep.subr.mxu0 0.0
    %204 = vmatpush1.msra.mxu0 0.0
    %205 = vmatprep.subr.mxu0 0.0
    %206 = vmatpush1.msra.mxu0 0.0
    %207 = vmatprep.subr.mxu0 0.0
    %208 = vmatpush1.msra.mxu0 0.0
    %209 = vmatprep.subr.mxu0 0.0
    %210 = vmatpush1.msra.mxu0 0.0
    %211 = vmatprep.subr.mxu0 0.0
    %212 = vmatpush1.msra.mxu0 0.0
    %213 = vmatprep.subr.mxu0 0.0
    %214 = vmatpush1.msra.mxu0 0.0
    %215 = vmatprep.subr.mxu0 0.0
    %216 = vmatpush1.msra.mxu0 0.0
    %217 = vmatprep.subr.mxu0 0.0
    %218 = vmatpush1.msra.mxu0 0.0
    %219 = vmatprep.subr.mxu0 0.0
    %220 = vmatpush1.msra.mxu0 0.0
    %221 = vmatprep.subr.mxu0 0.0
    %222 = vmatpush1.msra.mxu0 0.0
    %223 = vmatprep.subr.mxu0 0.0
    %224 = vmatpush1.msra.mxu0 0.0
    %225 = vmatprep.subr.mxu0 0.0
    %226 = vmatpush1.msra.mxu0 0.0
    %227 = vmatprep.subr.mxu0 0.0
    %228 = vmatpush1.msra.mxu0 0.0
    %229 = vmatprep.subr.mxu0 0.0
    %230 = vmatpush1.msra.mxu0 0.0
    %231 = vmatprep.subr.mxu0 0.0
    %232 = vmatpush1.msra.mxu0 0.0
    %233 = vmatprep.subr.mxu0 0.0
    %234 = vmatpush1.msra.mxu0 0.0
    %235 = vmatprep.subr.mxu0 0.0
    %236 = vmatpush1.msra.mxu0 0.0
    %237 = vmatprep.mubr.f32.mxu0 0.0
    %238 = vmatmul.mubr.f32.gmra.mrb[0].mxu0 %v78
    %v239 = vpop.f32.mrb[0].mxu0
    %v240 = vadd.f32 0.0, %v239
    %v241 = vpop.f32.mrb[0].mxu0
    %242 = vmatprep.mubr.f32.mxu0 0.0
    %243 = vmatmul.mubr.f32.gmra.mrb[0].mxu0 %v81
    %v244 = vpop.f32.mrb[0].mxu0
    %v245 = vadd.f32 0.0, %v244
    %v246 = vpop.f32.mrb[0].mxu0
    %247 = vmatprep.mubr.f32.mxu0 0.0
    %248 = vmatmul.mubr.f32.gmra.mrb[0].mxu0 %v84
    %v249 = vpop.f32.mrb[0].mxu0
    %v250 = vadd.f32 0.0, %v249
    %v251 = vpop.f32.mrb[0].mxu0
    %252 = vmatprep.mubr.f32.mxu0 0.0
    %253 = vmatmul.mubr.f32.gmra.mrb[0].mxu0 %v87
    %v254 = vpop.f32.mrb[0].mxu0
    %v255 = vadd.f32 0.0, %v254
    %v256 = vpop.f32.mrb[0].mxu0
    %257 = vmatprep.mubr.f32.mxu0 0.0
    %258 = vmatmul.mubr.f32.gmra.mrb[0].mxu0 %v90
    %v259 = vpop.f32.mrb[0].mxu0
    %v260 = vadd.f32 0.0, %v259
    %v261 = vpop.f32.mrb[0].mxu0
    %262 = vmatprep.mubr.f32.mxu0 0.0
    %263 = vmatmul.mubr.f32.gmra.mrb[0].mxu0 %v93
    %v264 = vpop.f32.mrb[0].mxu0
    %v265 = vadd.f32 0.0, %v264
    %v266 = vpop.f32.mrb[0].mxu0
    %267 = vmatprep.mubr.f32.mxu0 0.0
    %268 = vmatmul.mubr.f32.gmra.mrb[0].mxu0 %v96
    %v269 = vpop.f32.mrb[0].mxu0
    %v270 = vadd.f32 0.0, %v269
    %v271 = vpop.f32.mrb[0].mxu0
    %272 = vmatprep.mubr.f32.mxu0 0.0
    %273 = vmatmul.mubr.f32.gmra.mrb[0].mxu0 %v99
    %v274 = vpop.f32.mrb[0].mxu0
    %v275 = vadd.f32 0.0, %v274
    %v276 = vpop.f32.mrb[0].mxu0
    %277 = vmatprep.mubr.f32.mxu0 0.0
    %278 = vmatmul.mubr.f32.gmra.mrb[0].mxu0 %v102
    %v279 = vpop.f32.mrb[0].mxu0
    %v280 = vadd.f32 0.0, %v279
    %v281 = vpop.f32.mrb[0].mxu0
    %282 = vmatprep.mubr.f32.mxu0 0.0
    %283 = vmatmul.mubr.f32.gmra.mrb[0].mxu0 %v105
    %v284 = vpop.f32.mrb[0].mxu0
    %v285 = vadd.f32 0.0, %v284
    %v286 = vpop.f32.mrb[0].mxu0
    %287 = vmatprep.mubr.f32.mxu0 0.0
    %288 = vmatmul.mubr.f32.gmra.mrb[0].mxu0 %v108
    %v289 = vpop.f32.mrb[0].mxu0
    %v290 = vadd.f32 0.0, %v289
    %v291 = vpop.f32.mrb[0].mxu0
    %292 = vmatprep.mubr.f32.mxu0 0.0
    %293 = vmatmul.mubr.f32.gmra.mrb[0].mxu0 %v111
    %v294 = vpop.f32.mrb[0].mxu0
    %v295 = vadd.f32 0.0, %v294
    %v296 = vpop.f32.mrb[0].mxu0
    %297 = vmatprep.mubr.f32.mxu0 0.0
    %298 = vmatmul.mubr.f32.gmra.mrb[0].mxu0 %v114
    %v299 = vpop.f32.mrb[0].mxu0
    %v300 = vadd.f32 0.0, %v299
    %v301 = vpop.f32.mrb[0].mxu0
    %302 = vmatprep.mubr.f32.mxu0 0.0
    %303 = vmatmul.mubr.f32.gmra.mrb[0].mxu0 %v117
    %v304 = vpop.f32.mrb[0].mxu0
    %v305 = vadd.f32 0.0, %v304
    %v306 = vpop.f32.mrb[0].mxu0
    %307 = vmatprep.mubr.f32.mxu0 0.0
    %308 = vmatmul.mubr.f32.gmra.mrb[0].mxu0 %v120
    %v309 = vpop.f32.mrb[0].mxu0
    %v310 = vadd.f32 0.0, %v309
    %v311 = vpop.f32.mrb[0].mxu0
    %312 = vmatprep.mubr.f32.mxu0 0.0
    %313 = vmatmul.mubr.f32.gmra.mrb[0].mxu0 %v123
    %v314 = vpop.f32.mrb[0].mxu0
    %v315 = vadd.f32 0.0, %v314
    %v316 = vpop.f32.mrb[0].mxu0
    %317 = vmatprep.mubr.f32.mxu0 0.0
    %318 = vmatmul.mubr.f32.gmra.mrb[0].mxu0 %v126
    %v319 = vpop.f32.mrb[0].mxu0
    %v320 = vadd.f32 0.0, %v319
    %v321 = vpop.f32.mrb[0].mxu0
    %322 = vmatprep.mubr.f32.mxu0 0.0
    %323 = vmatmul.mubr.f32.gmra.mrb[0].mxu0 %v129
    %v324 = vpop.f32.mrb[0].mxu0
    %v325 = vadd.f32 0.0, %v324
    %v326 = vpop.f32.mrb[0].mxu0
    %327 = vmatprep.mubr.f32.mxu0 0.0
    %328 = vmatmul.mubr.f32.gmra.mrb[0].mxu0 %v132
    %v329 = vpop.f32.mrb[0].mxu0
    %v330 = vadd.f32 0.0, %v329
    %v331 = vpop.f32.mrb[0].mxu0
    %332 = vmatprep.mubr.f32.mxu0 0.0
    %333 = vmatmul.mubr.f32.gmra.mrb[0].mxu0 %v135
    %v334 = vpop.f32.mrb[0].mxu0
    %v335 = vadd.f32 0.0, %v334
    %v336 = vpop.f32.mrb[0].mxu0
    %337 = vmatprep.mubr.f32.mxu0 0.0
    %338 = vmatmul.mubr.f32.gmra.mrb[0].mxu0 %v138
    %v339 = vpop.f32.mrb[0].mxu0
    %v340 = vadd.f32 0.0, %v339
    %v341 = vpop.f32.mrb[0].mxu0
    %342 = vmatprep.mubr.f32.mxu0 0.0
    %343 = vmatmul.mubr.f32.gmra.mrb[0].mxu0 %v141
    %v344 = vpop.f32.mrb[0].mxu0
    %v345 = vadd.f32 0.0, %v344
    %v346 = vpop.f32.mrb[0].mxu0
    %347 = vmatprep.mubr.f32.mxu0 0.0
    %348 = vmatmul.mubr.f32.gmra.mrb[0].mxu0 %v144
    %v349 = vpop.f32.mrb[0].mxu0
    %v350 = vadd.f32 0.0, %v349
    %v351 = vpop.f32.mrb[0].mxu0
    %352 = vmatprep.mubr.f32.mxu0 0.0
    %353 = vmatmul.mubr.f32.gmra.mrb[0].mxu0 %v147
    %v354 = vpop.f32.mrb[0].mxu0
    %v355 = vadd.f32 0.0, %v354
    %v356 = vpop.f32.mrb[0].mxu0
    %357 = vmatprep.mubr.f32.mxu0 0.0
    %358 = vmatmul.mubr.f32.gmra.mrb[0].mxu0 %v150
    %v359 = vpop.f32.mrb[0].mxu0
    %v360 = vadd.f32 0.0, %v359
    %v361 = vpop.f32.mrb[0].mxu0
    %362 = vmatprep.mubr.f32.mxu0 0.0
    %363 = vmatmul.mubr.f32.gmra.mrb[0].mxu0 %v153
    %v364 = vpop.f32.mrb[0].mxu0
    %v365 = vadd.f32 0.0, %v364
    %v366 = vpop.f32.mrb[0].mxu0
    %367 = vmatprep.mubr.f32.mxu0 0.0
    %368 = vmatmul.mubr.f32.gmra.mrb[0].mxu0 %v156
    %v369 = vpop.f32.mrb[0].mxu0
    %v370 = vadd.f32 0.0, %v369
    %v371 = vpop.f32.mrb[0].mxu0
    %372 = vmatprep.mubr.f32.mxu0 0.0
    %373 = vmatmul.mubr.f32.gmra.mrb[0].mxu0 %v159
    %v374 = vpop.f32.mrb[0].mxu0
    %v375 = vadd.f32 0.0, %v374
    %v376 = vpop.f32.mrb[0].mxu0
    %377 = vmatprep.mubr.f32.mxu0 0.0
    %378 = vmatmul.mubr.f32.gmra.mrb[0].mxu0 %v162
    %v379 = vpop.f32.mrb[0].mxu0
    %v380 = vadd.f32 0.0, %v379
    %v381 = vpop.f32.mrb[0].mxu0
    %382 = vmatprep.mubr.f32.mxu0 0.0
    %383 = vmatmul.mubr.f32.gmra.mrb[0].mxu0 %v165
    %v384 = vpop.f32.mrb[0].mxu0
    %v385 = vadd.f32 0.0, %v384
    %v386 = vpop.f32.mrb[0].mxu0
    %387 = vmatprep.mubr.f32.mxu0 0.0
    %388 = vmatmul.mubr.f32.gmra.mrb[0].mxu0 %v168
    %v389 = vpop.f32.mrb[0].mxu0
    %v390 = vadd.f32 0.0, %v389
    %v391 = vpop.f32.mrb[0].mxu0
    %392 = vmatprep.mubr.f32.mxu0 0.0
    %393 = vmatmul.mubr.f32.gmra.mrb[0].mxu0 %v171
    %v394 = vpop.f32.mrb[0].mxu0
    %v395 = vadd.f32 0.0, %v394
    %v396 = vpop.f32.mrb[0].mxu0
    %397 = vdwg.mxu0
    %398 = vst [vmem:[#allocation7] sm:$0xff] %v240
    %399 = vst [vmem:[#allocation7 + $0x8] sm:$0xff] %v245
    %400 = vst [vmem:[#allocation7 + $0x10] sm:$0xff] %v250
    %401 = vst [vmem:[#allocation7 + $0x18] sm:$0xff] %v255
    %402 = vst [vmem:[#allocation7 + $0x20] sm:$0xff] %v260
    %403 = vst [vmem:[#allocation7 + $0x28] sm:$0xff] %v265
    %404 = vst [vmem:[#allocation7 + $0x30] sm:$0xff] %v270
    %405 = vst [vmem:[#allocation7 + $0x38] sm:$0xff] %v275
    %406 = vst [vmem:[#allocation7 + $0x40] sm:$0xff] %v280
    %407 = vst [vmem:[#allocation7 + $0x48] sm:$0xff] %v285
    %408 = vst [vmem:[#allocation7 + $0x50] sm:$0xff] %v290
    %409 = vst [vmem:[#allocation7 + $0x58] sm:$0xff] %v295
    %410 = vst [vmem:[#allocation7 + $0x60] sm:$0xff] %v300
    %411 = vst [vmem:[#allocation7 + $0x68] sm:$0xff] %v305
    %412 = vst [vmem:[#allocation7 + $0x70] sm:$0xff] %v310
    %413 = vst [vmem:[#allocation7 + $0x78] sm:$0xff] %v315
    %414 = vst [vmem:[#allocation7 + $0x80] sm:$0xff] %v320
    %415 = vst [vmem:[#allocation7 + $0x88] sm:$0xff] %v325
    %416 = vst [vmem:[#allocation7 + $0x90] sm:$0xff] %v330
    %417 = vst [vmem:[#allocation7 + $0x98] sm:$0xff] %v335
    %418 = vst [vmem:[#allocation7 + $0xa0] sm:$0xff] %v340
    %419 = vst [vmem:[#allocation7 + $0xa8] sm:$0xff] %v345
    %420 = vst [vmem:[#allocation7 + $0xb0] sm:$0xff] %v350
    %421 = vst [vmem:[#allocation7 + $0xb8] sm:$0xff] %v355
    %422 = vst [vmem:[#allocation7 + $0xc0] sm:$0xff] %v360
    %423 = vst [vmem:[#allocation7 + $0xc8] sm:$0xff] %v365
    %424 = vst [vmem:[#allocation7 + $0xd0] sm:$0xff] %v370
    %425 = vst [vmem:[#allocation7 + $0xd8] sm:$0xff] %v375
    %426 = vst [vmem:[#allocation7 + $0xe0] sm:$0xff] %v380
    %427 = vst [vmem:[#allocation7 + $0xe8] sm:$0xff] %v385
    %428 = vst [vmem:[#allocation7 + $0xf0] sm:$0xff] %v390
    %429 = vst [vmem:[#allocation7 + $0xf8] sm:$0xff] %v395
    // Predicated region
    $region18: #{sglcn_forward.3} parent=1 // pred_check
      _
    $region19: #{sglcn_forward.3} parent=1 // pred_check_branch
      %431 = sbr.rel (0) target = $region21
    $region20: #{sglcn_forward.3} parent=1 // pred_region
      %s433 = ssub.s32 4096, 4096
      %434 = vsyncadd [#allocation4], %s433
      %s435 = sshll.u32 [#allocation7], 4
      %s436 = int_to_ptr.vmem [resolvable:$true] %s435
      %441 = dma.vmem_to_hbm [thread:$0]  %s436, 4096, %s2, [#allocation4], 128, 128, 8
    $region21: #{sglcn_forward.3} parent=1 // pred_fallthru
      _
    // Predicated region
    $region22: #{sglcn_forward.3} parent=1 // pred_check
      _
    $region23: #{sglcn_forward.3} parent=1 // pred_check_branch
      %443 = sbr.rel (0) target = $region25
    $region24: #{sglcn_forward.3} parent=1 // pred_region
      %444 = dma.done [#allocation4], 4096
    $region25: #{sglcn_forward.3} parent=1 // pred_fallthru
      _
    %445 = vsyncpa [#allocation3], 1
    %446 = vsyncpa [#allocation6], 1
    %447 = vsyncpa [#allocation4], 1

// kernel: sglcn_forward.5
$region0: #{sglcn_forward.5}
  #allocation0 [shape = 'u32[]', space=smem, size = 0x4, offset = 0x4, fixed_abs, tag = 'smem constant byte address 0x4 - core index']
  #allocation1 [shape = 'u32[144,128]{1,0:T(1,128)}', space=vmem, size = 0x12000, scoped, tag = 'internal scratch']
  %s0 = inlined_call_operand.hbm [shape: bf16[256,256], index: 0, kind: input, shape index: {}]
  %s1 = inlined_call_operand.hbm [shape: bf16[256,128], index: 1, kind: input, shape index: {}]
  %s2 = inlined_call_operand.hbm [shape: f32[256,128], index: 2, kind: output, shape index: {}]
  %s3 = sld [smem:[#allocation0]]
  $region26: #{sglcn_forward.5} parent=0
    _
  %s5 = ssub.s32 1, %s3
  %s6 = scalar_select 0, %s5, %s3
  $region1: #{sglcn_forward.5} parent=0
    #allocation2 [shape = 'u8[131072]{0}', space=vmem, size = 0x20000, scoped, tag = 'input window, operand 0, single buffered']
    #allocation3 [shape = 's32[1]{0}', space=sflag, size = 0x4, scoped, tag = 'scoped memory for sglcn_forward.5']
    #allocation4 [shape = 's32[1]{0}', space=sflag, size = 0x4, scoped, tag = 'scoped memory for sglcn_forward.5']
    #allocation5 [shape = 'u8[65536]{0}', space=vmem, size = 0x10000, scoped, tag = 'input window, operand 1, single buffered']
    #allocation6 [shape = 's32[1]{0}', space=sflag, size = 0x4, scoped, tag = 'scoped memory for sglcn_forward.5']
    #allocation7 [shape = 'u8[131072]{0}', space=vmem, size = 0x20000, scoped, tag = 'output window, operand 0, single buffered']
    %7 = vsyncpa [#allocation3], 0
    %8 = vsyncpa [#allocation6], 0
    %9 = vsyncpa [#allocation4], 0
    // Predicated region
    $region2: #{sglcn_forward.5} parent=1 // pred_check
      _
    $region3: #{sglcn_forward.5} parent=1 // pred_check_branch
      %11 = sbr.rel (0) target = $region5
    $region4: #{sglcn_forward.5} parent=1 // pred_region
      %s13 = ssub.s32 4096, 4096
      %14 = vsyncadd [#allocation3], %s13
      %s15 = sshll.u32 [#allocation2], 4
      %s16 = int_to_ptr.vmem [resolvable:$true] %s15
      %21 = dma.hbm_to_vmem [thread:$0]  %s0, 4096, %s16, [#allocation3], 128, 128, 8
    $region5: #{sglcn_forward.5} parent=1 // pred_fallthru
      _
    // Predicated region
    $region6: #{sglcn_forward.5} parent=1 // pred_check
      _
    $region7: #{sglcn_forward.5} parent=1 // pred_check_branch
      %23 = sbr.rel (0) target = $region9
    $region8: #{sglcn_forward.5} parent=1 // pred_region
      %s25 = ssub.s32 2048, 2048
      %26 = vsyncadd [#allocation6], %s25
      %s27 = sshll.u32 [#allocation5], 4
      %s28 = int_to_ptr.vmem [resolvable:$true] %s27
      %33 = dma.hbm_to_vmem [thread:$0]  %s1, 2048, %s28, [#allocation6], 64, 64, 4
    $region9: #{sglcn_forward.5} parent=1 // pred_fallthru
      _
    // Predicated region
    $region10: #{sglcn_forward.5} parent=1 // pred_check
      _
    $region11: #{sglcn_forward.5} parent=1 // pred_check_branch
      %35 = sbr.rel (0) target = $region13
    $region12: #{sglcn_forward.5} parent=1 // pred_region
      %36 = dma.done [#allocation3], 4096
    $region13: #{sglcn_forward.5} parent=1 // pred_fallthru
      _
    // Predicated region
    $region14: #{sglcn_forward.5} parent=1 // pred_check
      _
    $region15: #{sglcn_forward.5} parent=1 // pred_check_branch
      %38 = sbr.rel (0) target = $region17
    $region16: #{sglcn_forward.5} parent=1 // pred_region
      %39 = dma.done [#allocation6], 2048
    $region17: #{sglcn_forward.5} parent=1 // pred_fallthru
      _
    %v41 = vld [vmem:[#allocation2] sm:$0xff]
    %v42 = vld [vmem:[#allocation2 + $0x8] sm:$0xff]
    %v43 = vld [vmem:[#allocation2 + $0x10] sm:$0xff]
    %v44 = vld [vmem:[#allocation2 + $0x18] sm:$0xff]
    %v45 = vld [vmem:[#allocation2 + $0x20] sm:$0xff]
    %v46 = vld [vmem:[#allocation2 + $0x28] sm:$0xff]
    %v47 = vld [vmem:[#allocation2 + $0x30] sm:$0xff]
    %v48 = vld [vmem:[#allocation2 + $0x38] sm:$0xff]
    %v49 = vld [vmem:[#allocation2 + $0x40] sm:$0xff]
    %v50 = vld [vmem:[#allocation2 + $0x48] sm:$0xff]
    %v51 = vld [vmem:[#allocation2 + $0x50] sm:$0xff]
    %v52 = vld [vmem:[#allocation2 + $0x58] sm:$0xff]
    %v53 = vld [vmem:[#allocation2 + $0x60] sm:$0xff]
    %v54 = vld [vmem:[#allocation2 + $0x68] sm:$0xff]
    %v55 = vld [vmem:[#allocation2 + $0x70] sm:$0xff]
    %v56 = vld [vmem:[#allocation2 + $0x78] sm:$0xff]
    %v57 = vld [vmem:[#allocation2 + $0x80] sm:$0xff]
    %v58 = vld [vmem:[#allocation2 + $0x88] sm:$0xff]
    %v59 = vld [vmem:[#allocation2 + $0x90] sm:$0xff]
    %v60 = vld [vmem:[#allocation2 + $0x98] sm:$0xff]
    %v61 = vld [vmem:[#allocation2 + $0xa0] sm:$0xff]
    %v62 = vld [vmem:[#allocation2 + $0xa8] sm:$0xff]
    %v63 = vld [vmem:[#allocation2 + $0xb0] sm:$0xff]
    %v64 = vld [vmem:[#allocation2 + $0xb8] sm:$0xff]
    %v65 = vld [vmem:[#allocation2 + $0xc0] sm:$0xff]
    %v66 = vld [vmem:[#allocation2 + $0xc8] sm:$0xff]
    %v67 = vld [vmem:[#allocation2 + $0xd0] sm:$0xff]
    %v68 = vld [vmem:[#allocation2 + $0xd8] sm:$0xff]
    %v69 = vld [vmem:[#allocation2 + $0xe0] sm:$0xff]
    %v70 = vld [vmem:[#allocation2 + $0xe8] sm:$0xff]
    %v71 = vld [vmem:[#allocation2 + $0xf0] sm:$0xff]
    %v72 = vld [vmem:[#allocation2 + $0xf8] sm:$0xff]
    %v73 = vld [vmem:[#allocation5] sm:$0xf]
    %v74 = vld [vmem:[#allocation5 + $0x4] sm:$0xf]
    %v75 = vld [vmem:[#allocation5 + $0x8] sm:$0xf]
    %v76 = vld [vmem:[#allocation5 + $0xc] sm:$0xf]
    %v77 = vld [vmem:[#allocation5 + $0x10] sm:$0xf]
    %v78 = vld [vmem:[#allocation5 + $0x14] sm:$0xf]
    %v79 = vld [vmem:[#allocation5 + $0x18] sm:$0xf]
    %v80 = vld [vmem:[#allocation5 + $0x1c] sm:$0xf]
    %v81 = vld [vmem:[#allocation5 + $0x20] sm:$0xf]
    %v82 = vld [vmem:[#allocation5 + $0x24] sm:$0xf]
    %v83 = vld [vmem:[#allocation5 + $0x28] sm:$0xf]
    %v84 = vld [vmem:[#allocation5 + $0x2c] sm:$0xf]
    %v85 = vld [vmem:[#allocation5 + $0x30] sm:$0xf]
    %v86 = vld [vmem:[#allocation5 + $0x34] sm:$0xf]
    %v87 = vld [vmem:[#allocation5 + $0x38] sm:$0xf]
    %v88 = vld [vmem:[#allocation5 + $0x3c] sm:$0xf]
    %v89 = vld [vmem:[#allocation5 + $0x40] sm:$0xf]
    %v90 = vld [vmem:[#allocation5 + $0x44] sm:$0xf]
    %v91 = vld [vmem:[#allocation5 + $0x48] sm:$0xf]
    %v92 = vld [vmem:[#allocation5 + $0x4c] sm:$0xf]
    %v93 = vld [vmem:[#allocation5 + $0x50] sm:$0xf]
    %v94 = vld [vmem:[#allocation5 + $0x54] sm:$0xf]
    %v95 = vld [vmem:[#allocation5 + $0x58] sm:$0xf]
    %v96 = vld [vmem:[#allocation5 + $0x5c] sm:$0xf]
    %v97 = vld [vmem:[#allocation5 + $0x60] sm:$0xf]
    %v98 = vld [vmem:[#allocation5 + $0x64] sm:$0xf]
    %v99 = vld [vmem:[#allocation5 + $0x68] sm:$0xf]
    %v100 = vld [vmem:[#allocation5 + $0x6c] sm:$0xf]
    %v101 = vld [vmem:[#allocation5 + $0x70] sm:$0xf]
    %v102 = vld [vmem:[#allocation5 + $0x74] sm:$0xf]
    %v103 = vld [vmem:[#allocation5 + $0x78] sm:$0xf]
    %v104 = vld [vmem:[#allocation5 + $0x7c] sm:$0xf]
    %v137 = vunpack.c.l.b16 %v41
    %v138 = vunpack.c.h.b16 %v41
    %v139 = vunpack.c.l.b16 %v42
    %v140 = vunpack.c.h.b16 %v42
    %v141 = vunpack.c.l.b16 %v43
    %v142 = vunpack.c.h.b16 %v43
    %v143 = vunpack.c.l.b16 %v44
    %v144 = vunpack.c.h.b16 %v44
    %v145 = vunpack.c.l.b16 %v45
    %v146 = vunpack.c.h.b16 %v45
    %v147 = vunpack.c.l.b16 %v46
    %v148 = vunpack.c.h.b16 %v46
    %v149 = vunpack.c.l.b16 %v47
    %v150 = vunpack.c.h.b16 %v47
    %v151 = vunpack.c.l.b16 %v48
    %v152 = vunpack.c.h.b16 %v48
    %v153 = vunpack.c.l.b16 %v49
    %v154 = vunpack.c.h.b16 %v49
    %v155 = vunpack.c.l.b16 %v50
    %v156 = vunpack.c.h.b16 %v50
    %v157 = vunpack.c.l.b16 %v51
    %v158 = vunpack.c.h.b16 %v51
    %v159 = vunpack.c.l.b16 %v52
    %v160 = vunpack.c.h.b16 %v52
    %v161 = vunpack.c.l.b16 %v53
    %v162 = vunpack.c.h.b16 %v53
    %v163 = vunpack.c.l.b16 %v54
    %v164 = vunpack.c.h.b16 %v54
    %v165 = vunpack.c.l.b16 %v55
    %v166 = vunpack.c.h.b16 %v55
    %v167 = vunpack.c.l.b16 %v56
    %v168 = vunpack.c.h.b16 %v56
    %v169 = vunpack.c.l.b16 %v57
    %v170 = vunpack.c.h.b16 %v57
    %v171 = vunpack.c.l.b16 %v58
    %v172 = vunpack.c.h.b16 %v58
    %v173 = vunpack.c.l.b16 %v59
    %v174 = vunpack.c.h.b16 %v59
    %v175 = vunpack.c.l.b16 %v60
    %v176 = vunpack.c.h.b16 %v60
    %v177 = vunpack.c.l.b16 %v61
    %v178 = vunpack.c.h.b16 %v61
    %v179 = vunpack.c.l.b16 %v62
    %v180 = vunpack.c.h.b16 %v62
    %v181 = vunpack.c.l.b16 %v63
    %v182 = vunpack.c.h.b16 %v63
    %v183 = vunpack.c.l.b16 %v64
    %v184 = vunpack.c.h.b16 %v64
    %v185 = vunpack.c.l.b16 %v65
    %v186 = vunpack.c.h.b16 %v65
    %v187 = vunpack.c.l.b16 %v66
    %v188 = vunpack.c.h.b16 %v66
    %v189 = vunpack.c.l.b16 %v67
    %v190 = vunpack.c.h.b16 %v67
    %v191 = vunpack.c.l.b16 %v68
    %v192 = vunpack.c.h.b16 %v68
    %v193 = vunpack.c.l.b16 %v69
    %v194 = vunpack.c.h.b16 %v69
    %v195 = vunpack.c.l.b16 %v70
    %v196 = vunpack.c.h.b16 %v70
    %v197 = vunpack.c.l.b16 %v71
    %v198 = vunpack.c.h.b16 %v71
    %v199 = vunpack.c.l.b16 %v72
    %v200 = vunpack.c.h.b16 %v72
    %v201 = vpack.c.b16 %v139, %v137
    %v202 = vpack.c.b16 %v140, %v138
    %v203 = vpack.c.b16 %v143, %v141
    %v204 = vpack.c.b16 %v144, %v142
    %v205 = vpack.c.b16 %v147, %v145
    %v206 = vpack.c.b16 %v148, %v146
    %v207 = vpack.c.b16 %v151, %v149
    %v208 = vpack.c.b16 %v152, %v150
    %v209 = vpack.c.b16 %v155, %v153
    %v210 = vpack.c.b16 %v156, %v154
    %v211 = vpack.c.b16 %v159, %v157
    %v212 = vpack.c.b16 %v160, %v158
    %v213 = vpack.c.b16 %v163, %v161
    %v214 = vpack.c.b16 %v164, %v162
    %v215 = vpack.c.b16 %v167, %v165
    %v216 = vpack.c.b16 %v168, %v166
    %v217 = vpack.c.b16 %v171, %v169
    %v218 = vpack.c.b16 %v172, %v170
    %v219 = vpack.c.b16 %v175, %v173
    %v220 = vpack.c.b16 %v176, %v174
    %v221 = vpack.c.b16 %v179, %v177
    %v222 = vpack.c.b16 %v180, %v178
    %v223 = vpack.c.b16 %v183, %v181
    %v224 = vpack.c.b16 %v184, %v182
    %v225 = vpack.c.b16 %v187, %v185
    %v226 = vpack.c.b16 %v188, %v186
    %v227 = vpack.c.b16 %v191, %v189
    %v228 = vpack.c.b16 %v192, %v190
    %v229 = vpack.c.b16 %v195, %v193
    %v230 = vpack.c.b16 %v196, %v194
    %v231 = vpack.c.b16 %v199, %v197
    %v232 = vpack.c.b16 %v200, %v198
    %v297 = vunpack.c.l.b16 %v73
    %v298 = vunpack.c.l.b16 %v74
    %v299 = vunpack.c.l.b16 %v75
    %v300 = vunpack.c.l.b16 %v76
    %v301 = vunpack.c.l.b16 %v77
    %v302 = vunpack.c.l.b16 %v78
    %v303 = vunpack.c.l.b16 %v79
    %v304 = vunpack.c.l.b16 %v80
    %v305 = vunpack.c.l.b16 %v81
    %v306 = vunpack.c.l.b16 %v82
    %v307 = vunpack.c.l.b16 %v83
    %v308 = vunpack.c.l.b16 %v84
    %v309 = vunpack.c.l.b16 %v85
    %v310 = vunpack.c.l.b16 %v86
    %v311 = vunpack.c.l.b16 %v87
    %v312 = vunpack.c.l.b16 %v88
    %v313 = vunpack.c.l.b16 %v89
    %v314 = vunpack.c.l.b16 %v90
    %v315 = vunpack.c.l.b16 %v91
    %v316 = vunpack.c.l.b16 %v92
    %v317 = vunpack.c.l.b16 %v93
    %v318 = vunpack.c.l.b16 %v94
    %v319 = vunpack.c.l.b16 %v95
    %v320 = vunpack.c.l.b16 %v96
    %v321 = vunpack.c.l.b16 %v97
    %v322 = vunpack.c.l.b16 %v98
    %v323 = vunpack.c.l.b16 %v99
    %v324 = vunpack.c.l.b16 %v100
    %v325 = vunpack.c.l.b16 %v101
    %v326 = vunpack.c.l.b16 %v102
    %v327 = vunpack.c.l.b16 %v103
    %v328 = vunpack.c.l.b16 %v104
    %v329 = vpack.c.b16 %v298, %v297
    %v330 = vpack.c.b16 %v300, %v299
    %v331 = vpack.c.b16 %v302, %v301
    %v332 = vpack.c.b16 %v304, %v303
    %v333 = vpack.c.b16 %v306, %v305
    %v334 = vpack.c.b16 %v308, %v307
    %v335 = vpack.c.b16 %v310, %v309
    %v336 = vpack.c.b16 %v312, %v311
    %v337 = vpack.c.b16 %v314, %v313
    %v338 = vpack.c.b16 %v316, %v315
    %v339 = vpack.c.b16 %v318, %v317
    %v340 = vpack.c.b16 %v320, %v319
    %v341 = vpack.c.b16 %v322, %v321
    %v342 = vpack.c.b16 %v324, %v323
    %v343 = vpack.c.b16 %v326, %v325
    %v344 = vpack.c.b16 %v328, %v327
    %361 = vmatprep.subr.bf16.mxu0 0
    %362 = vmatpush1.bf16.msra.mxu0 %v329
    %363 = vmatprep.subr.bf16.mxu0 0
    %364 = vmatpush1.bf16.msra.mxu0 %v330
    %365 = vmatprep.subr.bf16.mxu0 0
    %366 = vmatpush1.bf16.msra.mxu0 %v331
    %367 = vmatprep.subr.bf16.mxu0 0
    %368 = vmatpush1.bf16.msra.mxu0 %v332
    %369 = vmatprep.subr.bf16.mxu0 0
    %370 = vmatpush1.bf16.msra.mxu0 %v333
    %371 = vmatprep.subr.bf16.mxu0 0
    %372 = vmatpush1.bf16.msra.mxu0 %v334
    %373 = vmatprep.subr.bf16.mxu0 0
    %374 = vmatpush1.bf16.msra.mxu0 %v335
    %375 = vmatprep.subr.bf16.mxu0 0
    %376 = vmatpush1.bf16.msra.mxu0 %v336
    %377 = vmatprep.subr.bf16.mxu0 0
    %378 = vmatpush1.bf16.msra.mxu0 %v337
    %379 = vmatprep.subr.bf16.mxu0 0
    %380 = vmatpush1.bf16.msra.mxu0 %v338
    %381 = vmatprep.subr.bf16.mxu0 0
    %382 = vmatpush1.bf16.msra.mxu0 %v339
    %383 = vmatprep.subr.bf16.mxu0 0
    %384 = vmatpush1.bf16.msra.mxu0 %v340
    %385 = vmatprep.subr.bf16.mxu0 0
    %386 = vmatpush1.bf16.msra.mxu0 %v341
    %387 = vmatprep.subr.bf16.mxu0 0
    %388 = vmatpush1.bf16.msra.mxu0 %v342
    %389 = vmatprep.subr.bf16.mxu0 0
    %390 = vmatpush1.bf16.msra.mxu0 %v343
    %391 = vmatprep.subr.bf16.mxu0 0
    %392 = vmatpush1.bf16.msra.mxu0 %v344
    %393 = vmatprep.mubr.bf16.mxu0 %v202
    %394 = vmatmul.mubr.bf16.gmra.mrb[0].mxu0 %v201
    %v395 = vpop.f32.mrb[0].mxu0
    %v396 = vadd.f32 0.0, %v395
    %v397 = vpop.f32.mrb[0].mxu0
    %v398 = vpop.f32.mrb[0].mxu0
    %v399 = vadd.f32 0.0, %v398
    %v400 = vpop.f32.mrb[0].mxu0
    %401 = vmatprep.mubr.bf16.mxu0 %v204
    %402 = vmatmul.mubr.bf16.gmra.mrb[0].mxu0 %v203
    %v403 = vpop.f32.mrb[0].mxu0
    %v404 = vadd.f32 0.0, %v403
    %v405 = vpop.f32.mrb[0].mxu0
    %v406 = vpop.f32.mrb[0].mxu0
    %v407 = vadd.f32 0.0, %v406
    %v408 = vpop.f32.mrb[0].mxu0
    %409 = vmatprep.mubr.bf16.mxu0 %v206
    %410 = vmatmul.mubr.bf16.gmra.mrb[0].mxu0 %v205
    %v411 = vpop.f32.mrb[0].mxu0
    %v412 = vadd.f32 0.0, %v411
    %v413 = vpop.f32.mrb[0].mxu0
    %v414 = vpop.f32.mrb[0].mxu0
    %v415 = vadd.f32 0.0, %v414
    %v416 = vpop.f32.mrb[0].mxu0
    %417 = vmatprep.mubr.bf16.mxu0 %v208
    %418 = vmatmul.mubr.bf16.gmra.mrb[0].mxu0 %v207
    %v419 = vpop.f32.mrb[0].mxu0
    %v420 = vadd.f32 0.0, %v419
    %v421 = vpop.f32.mrb[0].mxu0
    %v422 = vpop.f32.mrb[0].mxu0
    %v423 = vadd.f32 0.0, %v422
    %v424 = vpop.f32.mrb[0].mxu0
    %425 = vmatprep.mubr.bf16.mxu0 %v210
    %426 = vmatmul.mubr.bf16.gmra.mrb[0].mxu0 %v209
    %v427 = vpop.f32.mrb[0].mxu0
    %v428 = vadd.f32 0.0, %v427
    %v429 = vpop.f32.mrb[0].mxu0
    %v430 = vpop.f32.mrb[0].mxu0
    %v431 = vadd.f32 0.0, %v430
    %v432 = vpop.f32.mrb[0].mxu0
    %433 = vmatprep.mubr.bf16.mxu0 %v212
    %434 = vmatmul.mubr.bf16.gmra.mrb[0].mxu0 %v211
    %v435 = vpop.f32.mrb[0].mxu0
    %v436 = vadd.f32 0.0, %v435
    %v437 = vpop.f32.mrb[0].mxu0
    %v438 = vpop.f32.mrb[0].mxu0
    %v439 = vadd.f32 0.0, %v438
    %v440 = vpop.f32.mrb[0].mxu0
    %441 = vmatprep.mubr.bf16.mxu0 %v214
    %442 = vmatmul.mubr.bf16.gmra.mrb[0].mxu0 %v213
    %v443 = vpop.f32.mrb[0].mxu0
    %v444 = vadd.f32 0.0, %v443
    %v445 = vpop.f32.mrb[0].mxu0
    %v446 = vpop.f32.mrb[0].mxu0
    %v447 = vadd.f32 0.0, %v446
    %v448 = vpop.f32.mrb[0].mxu0
    %449 = vmatprep.mubr.bf16.mxu0 %v216
    %450 = vmatmul.mubr.bf16.gmra.mrb[0].mxu0 %v215
    %v451 = vpop.f32.mrb[0].mxu0
    %v452 = vadd.f32 0.0, %v451
    %v453 = vpop.f32.mrb[0].mxu0
    %v454 = vpop.f32.mrb[0].mxu0
    %v455 = vadd.f32 0.0, %v454
    %v456 = vpop.f32.mrb[0].mxu0
    %457 = vmatprep.mubr.bf16.mxu0 %v218
    %458 = vmatmul.mubr.bf16.gmra.mrb[0].mxu0 %v217
    %v459 = vpop.f32.mrb[0].mxu0
    %v460 = vadd.f32 0.0, %v459
    %v461 = vpop.f32.mrb[0].mxu0
    %v462 = vpop.f32.mrb[0].mxu0
    %v463 = vadd.f32 0.0, %v462
    %v464 = vpop.f32.mrb[0].mxu0
    %465 = vmatprep.mubr.bf16.mxu0 %v220
    %466 = vmatmul.mubr.bf16.gmra.mrb[0].mxu0 %v219
    %v467 = vpop.f32.mrb[0].mxu0
    %v468 = vadd.f32 0.0, %v467
    %v469 = vpop.f32.mrb[0].mxu0
    %v470 = vpop.f32.mrb[0].mxu0
    %v471 = vadd.f32 0.0, %v470
    %v472 = vpop.f32.mrb[0].mxu0
    %473 = vmatprep.mubr.bf16.mxu0 %v222
    %474 = vmatmul.mubr.bf16.gmra.mrb[0].mxu0 %v221
    %v475 = vpop.f32.mrb[0].mxu0
    %v476 = vadd.f32 0.0, %v475
    %v477 = vpop.f32.mrb[0].mxu0
    %v478 = vpop.f32.mrb[0].mxu0
    %v479 = vadd.f32 0.0, %v478
    %v480 = vpop.f32.mrb[0].mxu0
    %481 = vmatprep.mubr.bf16.mxu0 %v224
    %482 = vmatmul.mubr.bf16.gmra.mrb[0].mxu0 %v223
    %v483 = vpop.f32.mrb[0].mxu0
    %v484 = vadd.f32 0.0, %v483
    %v485 = vpop.f32.mrb[0].mxu0
    %v486 = vpop.f32.mrb[0].mxu0
    %v487 = vadd.f32 0.0, %v486
    %v488 = vpop.f32.mrb[0].mxu0
    %489 = vmatprep.mubr.bf16.mxu0 %v226
    %490 = vmatmul.mubr.bf16.gmra.mrb[0].mxu0 %v225
    %v491 = vpop.f32.mrb[0].mxu0
    %v492 = vadd.f32 0.0, %v491
    %v493 = vpop.f32.mrb[0].mxu0
    %v494 = vpop.f32.mrb[0].mxu0
    %v495 = vadd.f32 0.0, %v494
    %v496 = vpop.f32.mrb[0].mxu0
    %497 = vmatprep.mubr.bf16.mxu0 %v228
    %498 = vmatmul.mubr.bf16.gmra.mrb[0].mxu0 %v227
    %v499 = vpop.f32.mrb[0].mxu0
    %v500 = vadd.f32 0.0, %v499
    %v501 = vpop.f32.mrb[0].mxu0
    %v502 = vpop.f32.mrb[0].mxu0
    %v503 = vadd.f32 0.0, %v502
    %v504 = vpop.f32.mrb[0].mxu0
    %505 = vmatprep.mubr.bf16.mxu0 %v230
    %506 = vmatmul.mubr.bf16.gmra.mrb[0].mxu0 %v229
    %v507 = vpop.f32.mrb[0].mxu0
    %v508 = vadd.f32 0.0, %v507
    %v509 = vpop.f32.mrb[0].mxu0
    %v510 = vpop.f32.mrb[0].mxu0
    %v511 = vadd.f32 0.0, %v510
    %v512 = vpop.f32.mrb[0].mxu0
    %513 = vmatprep.mubr.bf16.mxu0 %v232
    %514 = vmatmul.mubr.bf16.gmra.mrb[0].mxu0 %v231
    %v515 = vpop.f32.mrb[0].mxu0
    %v516 = vadd.f32 0.0, %v515
    %v517 = vpop.f32.mrb[0].mxu0
    %v518 = vpop.f32.mrb[0].mxu0
    %v519 = vadd.f32 0.0, %v518
    %v520 = vpop.f32.mrb[0].mxu0
    %521 = vdwg.mxu0
    %v522 = vlaneseq
    %v523 = vand.u32 %v522, 127
    %vm524 = vcmp.lt.s32.totalorder %v523, 8
    %v525 = vsel %vm524, %v396, -1e+30
    %v526 = vsel %vm524, %v399, -1e+30
    %v527 = vsel %vm524, %v404, -1e+30
    %v528 = vsel %vm524, %v407, -1e+30
    %v529 = vsel %vm524, %v412, -1e+30
    %v530 = vsel %vm524, %v415, -1e+30
    %v531 = vsel %vm524, %v420, -1e+30
    %v532 = vsel %vm524, %v423, -1e+30
    %v533 = vsel %vm524, %v428, -1e+30
    %v534 = vsel %vm524, %v431, -1e+30
    %v535 = vsel %vm524, %v436, -1e+30
    %v536 = vsel %vm524, %v439, -1e+30
    %v537 = vsel %vm524, %v444, -1e+30
    %v538 = vsel %vm524, %v447, -1e+30
    %v539 = vsel %vm524, %v452, -1e+30
    %v540 = vsel %vm524, %v455, -1e+30
    %v541 = vsel %vm524, %v460, -1e+30
    %v542 = vsel %vm524, %v463, -1e+30
    %v543 = vsel %vm524, %v468, -1e+30
    %v544 = vsel %vm524, %v471, -1e+30
    %v545 = vsel %vm524, %v476, -1e+30
    %v546 = vsel %vm524, %v479, -1e+30
    %v547 = vsel %vm524, %v484, -1e+30
    %v548 = vsel %vm524, %v487, -1e+30
    %v549 = vsel %vm524, %v492, -1e+30
    %v550 = vsel %vm524, %v495, -1e+30
    %v551 = vsel %vm524, %v500, -1e+30
    %v552 = vsel %vm524, %v503, -1e+30
    %v553 = vsel %vm524, %v508, -1e+30
    %v554 = vsel %vm524, %v511, -1e+30
    %v555 = vsel %vm524, %v516, -1e+30
    %v556 = vsel %vm524, %v519, -1e+30
    %557 = vmax.xlane.f32.xlu0 %v525
    %v558 = vpop.xlane.xlu0 %557
    %559 = vmax.xlane.f32.xlu0 %v526
    %v560 = vpop.xlane.xlu0 %559
    %561 = vmax.xlane.f32.xlu0 %v527
    %v562 = vpop.xlane.xlu0 %561
    %563 = vmax.xlane.f32.xlu0 %v528
    %v564 = vpop.xlane.xlu0 %563
    %565 = vmax.xlane.f32.xlu0 %v529
    %v566 = vpop.xlane.xlu0 %565
    %567 = vmax.xlane.f32.xlu0 %v530
    %v568 = vpop.xlane.xlu0 %567
    %569 = vmax.xlane.f32.xlu0 %v531
    %v570 = vpop.xlane.xlu0 %569
    %571 = vmax.xlane.f32.xlu0 %v532
    %v572 = vpop.xlane.xlu0 %571
    %573 = vmax.xlane.f32.xlu0 %v533
    %v574 = vpop.xlane.xlu0 %573
    %575 = vmax.xlane.f32.xlu0 %v534
    %v576 = vpop.xlane.xlu0 %575
    %577 = vmax.xlane.f32.xlu0 %v535
    %v578 = vpop.xlane.xlu0 %577
    %579 = vmax.xlane.f32.xlu0 %v536
    %v580 = vpop.xlane.xlu0 %579
    %581 = vmax.xlane.f32.xlu0 %v537
    %v582 = vpop.xlane.xlu0 %581
    %583 = vmax.xlane.f32.xlu0 %v538
    %v584 = vpop.xlane.xlu0 %583
    %585 = vmax.xlane.f32.xlu0 %v539
    %v586 = vpop.xlane.xlu0 %585
    %587 = vmax.xlane.f32.xlu0 %v540
    %v588 = vpop.xlane.xlu0 %587
    %589 = vmax.xlane.f32.xlu0 %v541
    %v590 = vpop.xlane.xlu0 %589
    %591 = vmax.xlane.f32.xlu0 %v542
    %v592 = vpop.xlane.xlu0 %591
    %593 = vmax.xlane.f32.xlu0 %v543
    %v594 = vpop.xlane.xlu0 %593
    %595 = vmax.xlane.f32.xlu0 %v544
    %v596 = vpop.xlane.xlu0 %595
    %597 = vmax.xlane.f32.xlu0 %v545
    %v598 = vpop.xlane.xlu0 %597
    %599 = vmax.xlane.f32.xlu0 %v546
    %v600 = vpop.xlane.xlu0 %599
    %601 = vmax.xlane.f32.xlu0 %v547
    %v602 = vpop.xlane.xlu0 %601
    %603 = vmax.xlane.f32.xlu0 %v548
    %v604 = vpop.xlane.xlu0 %603
    %605 = vmax.xlane.f32.xlu0 %v549
    %v606 = vpop.xlane.xlu0 %605
    %607 = vmax.xlane.f32.xlu0 %v550
    %v608 = vpop.xlane.xlu0 %607
    %609 = vmax.xlane.f32.xlu0 %v551
    %v610 = vpop.xlane.xlu0 %609
    %611 = vmax.xlane.f32.xlu0 %v552
    %v612 = vpop.xlane.xlu0 %611
    %613 = vmax.xlane.f32.xlu0 %v553
    %v614 = vpop.xlane.xlu0 %613
    %615 = vmax.xlane.f32.xlu0 %v554
    %v616 = vpop.xlane.xlu0 %615
    %617 = vmax.xlane.f32.xlu0 %v555
    %v618 = vpop.xlane.xlu0 %617
    %619 = vmax.xlane.f32.xlu0 %v556
    %v620 = vpop.xlane.xlu0 %619
    %v621 = vsub.f32 %v525, %v558
    %v622 = vsub.f32 %v526, %v560
    %v623 = vsub.f32 %v527, %v562
    %v624 = vsub.f32 %v528, %v564
    %v625 = vsub.f32 %v529, %v566
    %v626 = vsub.f32 %v530, %v568
    %v627 = vsub.f32 %v531, %v570
    %v628 = vsub.f32 %v532, %v572
    %v629 = vsub.f32 %v533, %v574
    %v630 = vsub.f32 %v534, %v576
    %v631 = vsub.f32 %v535, %v578
    %v632 = vsub.f32 %v536, %v580
    %v633 = vsub.f32 %v537, %v582
    %v634 = vsub.f32 %v538, %v584
    %v635 = vsub.f32 %v539, %v586
    %v636 = vsub.f32 %v540, %v588
    %v637 = vsub.f32 %v541, %v590
    %v638 = vsub.f32 %v542, %v592
    %v639 = vsub.f32 %v543, %v594
    %v640 = vsub.f32 %v544, %v596
    %v641 = vsub.f32 %v545, %v598
    %v642 = vsub.f32 %v546, %v600
    %v643 = vsub.f32 %v547, %v602
    %v644 = vsub.f32 %v548, %v604
    %v645 = vsub.f32 %v549, %v606
    %v646 = vsub.f32 %v550, %v608
    %v647 = vsub.f32 %v551, %v610
    %v648 = vsub.f32 %v552, %v612
    %v649 = vsub.f32 %v553, %v614
    %v650 = vsub.f32 %v554, %v616
    %v651 = vsub.f32 %v555, %v618
    %v652 = vsub.f32 %v556, %v620
    %v653 = vmul.f32 %v621, 1.442695
    %v654 = vpow.pop %v653
    %v655 = vmul.f32 %v622, 1.442695
    %v656 = vpow.pop %v655
    %v657 = vmul.f32 %v623, 1.442695
    %v658 = vpow.pop %v657
    %v659 = vmul.f32 %v624, 1.442695
    %v660 = vpow.pop %v659
    %v661 = vmul.f32 %v625, 1.442695
    %v662 = vpow.pop %v661
    %v663 = vmul.f32 %v626, 1.442695
    %v664 = vpow.pop %v663
    %v665 = vmul.f32 %v627, 1.442695
    %v666 = vpow.pop %v665
    %v667 = vmul.f32 %v628, 1.442695
    %v668 = vpow.pop %v667
    %v669 = vmul.f32 %v629, 1.442695
    %v670 = vpow.pop %v669
    %v671 = vmul.f32 %v630, 1.442695
    %v672 = vpow.pop %v671
    %v673 = vmul.f32 %v631, 1.442695
    %v674 = vpow.pop %v673
    %v675 = vmul.f32 %v632, 1.442695
    %v676 = vpow.pop %v675
    %v677 = vmul.f32 %v633, 1.442695
    %v678 = vpow.pop %v677
    %v679 = vmul.f32 %v634, 1.442695
    %v680 = vpow.pop %v679
    %v681 = vmul.f32 %v635, 1.442695
    %v682 = vpow.pop %v681
    %v683 = vmul.f32 %v636, 1.442695
    %v684 = vpow.pop %v683
    %v685 = vmul.f32 %v637, 1.442695
    %v686 = vpow.pop %v685
    %v687 = vmul.f32 %v638, 1.442695
    %v688 = vpow.pop %v687
    %v689 = vmul.f32 %v639, 1.442695
    %v690 = vpow.pop %v689
    %v691 = vmul.f32 %v640, 1.442695
    %v692 = vpow.pop %v691
    %v693 = vmul.f32 %v641, 1.442695
    %v694 = vpow.pop %v693
    %v695 = vmul.f32 %v642, 1.442695
    %v696 = vpow.pop %v695
    %v697 = vmul.f32 %v643, 1.442695
    %v698 = vpow.pop %v697
    %v699 = vmul.f32 %v644, 1.442695
    %v700 = vpow.pop %v699
    %v701 = vmul.f32 %v645, 1.442695
    %v702 = vpow.pop %v701
    %v703 = vmul.f32 %v646, 1.442695
    %v704 = vpow.pop %v703
    %v705 = vmul.f32 %v647, 1.442695
    %v706 = vpow.pop %v705
    %v707 = vmul.f32 %v648, 1.442695
    %v708 = vpow.pop %v707
    %v709 = vmul.f32 %v649, 1.442695
    %v710 = vpow.pop %v709
    %v711 = vmul.f32 %v650, 1.442695
    %v712 = vpow.pop %v711
    %v713 = vmul.f32 %v651, 1.442695
    %v714 = vpow.pop %v713
    %v715 = vmul.f32 %v652, 1.442695
    %v716 = vpow.pop %v715
    %v717 = vsel %vm524, %v654, 0.0
    %v718 = vsel %vm524, %v656, 0.0
    %v719 = vsel %vm524, %v658, 0.0
    %v720 = vsel %vm524, %v660, 0.0
    %v721 = vsel %vm524, %v662, 0.0
    %v722 = vsel %vm524, %v664, 0.0
    %v723 = vsel %vm524, %v666, 0.0
    %v724 = vsel %vm524, %v668, 0.0
    %v725 = vsel %vm524, %v670, 0.0
    %v726 = vsel %vm524, %v672, 0.0
    %v727 = vsel %vm524, %v674, 0.0
    %v728 = vsel %vm524, %v676, 0.0
    %v729 = vsel %vm524, %v678, 0.0
    %v730 = vsel %vm524, %v680, 0.0
    %v731 = vsel %vm524, %v682, 0.0
    %v732 = vsel %vm524, %v684, 0.0
    %v733 = vsel %vm524, %v686, 0.0
    %v734 = vsel %vm524, %v688, 0.0
    %v735 = vsel %vm524, %v690, 0.0
    %v736 = vsel %vm524, %v692, 0.0
    %v737 = vsel %vm524, %v694, 0.0
    %v738 = vsel %vm524, %v696, 0.0
    %v739 = vsel %vm524, %v698, 0.0
    %v740 = vsel %vm524, %v700, 0.0
    %v741 = vsel %vm524, %v702, 0.0
    %v742 = vsel %vm524, %v704, 0.0
    %v743 = vsel %vm524, %v706, 0.0
    %v744 = vsel %vm524, %v708, 0.0
    %v745 = vsel %vm524, %v710, 0.0
    %v746 = vsel %vm524, %v712, 0.0
    %v747 = vsel %vm524, %v714, 0.0
    %v748 = vsel %vm524, %v716, 0.0
    %749 = vadd.xlane.f32.xlu0 %v717
    %v750 = vpop.xlane.xlu0 %749
    %751 = vadd.xlane.f32.xlu0 %v718
    %v752 = vpop.xlane.xlu0 %751
    %753 = vadd.xlane.f32.xlu0 %v719
    %v754 = vpop.xlane.xlu0 %753
    %755 = vadd.xlane.f32.xlu0 %v720
    %v756 = vpop.xlane.xlu0 %755
    %757 = vadd.xlane.f32.xlu0 %v721
    %v758 = vpop.xlane.xlu0 %757
    %759 = vadd.xlane.f32.xlu0 %v722
    %v760 = vpop.xlane.xlu0 %759
    %761 = vadd.xlane.f32.xlu0 %v723
    %v762 = vpop.xlane.xlu0 %761
    %763 = vadd.xlane.f32.xlu0 %v724
    %v764 = vpop.xlane.xlu0 %763
    %765 = vadd.xlane.f32.xlu0 %v725
    %v766 = vpop.xlane.xlu0 %765
    %767 = vadd.xlane.f32.xlu0 %v726
    %v768 = vpop.xlane.xlu0 %767
    %769 = vadd.xlane.f32.xlu0 %v727
    %v770 = vpop.xlane.xlu0 %769
    %771 = vadd.xlane.f32.xlu0 %v728
    %v772 = vpop.xlane.xlu0 %771
    %773 = vadd.xlane.f32.xlu0 %v729
    %v774 = vpop.xlane.xlu0 %773
    %775 = vadd.xlane.f32.xlu0 %v730
    %v776 = vpop.xlane.xlu0 %775
    %777 = vadd.xlane.f32.xlu0 %v731
    %v778 = vpop.xlane.xlu0 %777
    %779 = vadd.xlane.f32.xlu0 %v732
    %v780 = vpop.xlane.xlu0 %779
    %781 = vadd.xlane.f32.xlu0 %v733
    %v782 = vpop.xlane.xlu0 %781
    %783 = vadd.xlane.f32.xlu0 %v734
    %v784 = vpop.xlane.xlu0 %783
    %785 = vadd.xlane.f32.xlu0 %v735
    %v786 = vpop.xlane.xlu0 %785
    %787 = vadd.xlane.f32.xlu0 %v736
    %v788 = vpop.xlane.xlu0 %787
    %789 = vadd.xlane.f32.xlu0 %v737
    %v790 = vpop.xlane.xlu0 %789
    %791 = vadd.xlane.f32.xlu0 %v738
    %v792 = vpop.xlane.xlu0 %791
    %793 = vadd.xlane.f32.xlu0 %v739
    %v794 = vpop.xlane.xlu0 %793
    %795 = vadd.xlane.f32.xlu0 %v740
    %v796 = vpop.xlane.xlu0 %795
    %797 = vadd.xlane.f32.xlu0 %v741
    %v798 = vpop.xlane.xlu0 %797
    %799 = vadd.xlane.f32.xlu0 %v742
    %v800 = vpop.xlane.xlu0 %799
    %801 = vadd.xlane.f32.xlu0 %v743
    %v802 = vpop.xlane.xlu0 %801
    %803 = vadd.xlane.f32.xlu0 %v744
    %v804 = vpop.xlane.xlu0 %803
    %805 = vadd.xlane.f32.xlu0 %v745
    %v806 = vpop.xlane.xlu0 %805
    %807 = vadd.xlane.f32.xlu0 %v746
    %v808 = vpop.xlane.xlu0 %807
    %809 = vadd.xlane.f32.xlu0 %v747
    %v810 = vpop.xlane.xlu0 %809
    %811 = vadd.xlane.f32.xlu0 %v748
    %v812 = vpop.xlane.xlu0 %811
    %v813 = vmax.f32 %v750, 1e-30
    %v814 = vmax.f32 %v752, 1e-30
    %v815 = vmax.f32 %v754, 1e-30
    %v816 = vmax.f32 %v756, 1e-30
    %v817 = vmax.f32 %v758, 1e-30
    %v818 = vmax.f32 %v760, 1e-30
    %v819 = vmax.f32 %v762, 1e-30
    %v820 = vmax.f32 %v764, 1e-30
    %v821 = vmax.f32 %v766, 1e-30
    %v822 = vmax.f32 %v768, 1e-30
    %v823 = vmax.f32 %v770, 1e-30
    %v824 = vmax.f32 %v772, 1e-30
    %v825 = vmax.f32 %v774, 1e-30
    %v826 = vmax.f32 %v776, 1e-30
    %v827 = vmax.f32 %v778, 1e-30
    %v828 = vmax.f32 %v780, 1e-30
    %v829 = vmax.f32 %v782, 1e-30
    %v830 = vmax.f32 %v784, 1e-30
    %v831 = vmax.f32 %v786, 1e-30
    %v832 = vmax.f32 %v788, 1e-30
    %v833 = vmax.f32 %v790, 1e-30
    %v834 = vmax.f32 %v792, 1e-30
    %v835 = vmax.f32 %v794, 1e-30
    %v836 = vmax.f32 %v796, 1e-30
    %v837 = vmax.f32 %v798, 1e-30
    %v838 = vmax.f32 %v800, 1e-30
    %v839 = vmax.f32 %v802, 1e-30
    %v840 = vmax.f32 %v804, 1e-30
    %v841 = vmax.f32 %v806, 1e-30
    %v842 = vmax.f32 %v808, 1e-30
    %v843 = vmax.f32 %v810, 1e-30
    %v844 = vmax.f32 %v812, 1e-30
    %v845 = vrcp.pop %v813
    %v846 = vrcp.pop %v814
    %v847 = vrcp.pop %v815
    %v848 = vrcp.pop %v816
    %v849 = vrcp.pop %v817
    %v850 = vrcp.pop %v818
    %v851 = vrcp.pop %v819
    %v852 = vrcp.pop %v820
    %v853 = vrcp.pop %v821
    %v854 = vrcp.pop %v822
    %v855 = vrcp.pop %v823
    %v856 = vrcp.pop %v824
    %v857 = vrcp.pop %v825
    %v858 = vrcp.pop %v826
    %v859 = vrcp.pop %v827
    %v860 = vrcp.pop %v828
    %v861 = vrcp.pop %v829
    %v862 = vrcp.pop %v830
    %v863 = vrcp.pop %v831
    %v864 = vrcp.pop %v832
    %v865 = vrcp.pop %v833
    %v866 = vrcp.pop %v834
    %v867 = vrcp.pop %v835
    %v868 = vrcp.pop %v836
    %v869 = vrcp.pop %v837
    %v870 = vrcp.pop %v838
    %v871 = vrcp.pop %v839
    %v872 = vrcp.pop %v840
    %v873 = vrcp.pop %v841
    %v874 = vrcp.pop %v842
    %v875 = vrcp.pop %v843
    %v876 = vrcp.pop %v844
    %v877 = vmul.f32 %v717, %v845
    %v878 = vmul.f32 %v718, %v846
    %v879 = vmul.f32 %v719, %v847
    %v880 = vmul.f32 %v720, %v848
    %v881 = vmul.f32 %v721, %v849
    %v882 = vmul.f32 %v722, %v850
    %v883 = vmul.f32 %v723, %v851
    %v884 = vmul.f32 %v724, %v852
    %v885 = vmul.f32 %v725, %v853
    %v886 = vmul.f32 %v726, %v854
    %v887 = vmul.f32 %v727, %v855
    %v888 = vmul.f32 %v728, %v856
    %v889 = vmul.f32 %v729, %v857
    %v890 = vmul.f32 %v730, %v858
    %v891 = vmul.f32 %v731, %v859
    %v892 = vmul.f32 %v732, %v860
    %v893 = vmul.f32 %v733, %v861
    %v894 = vmul.f32 %v734, %v862
    %v895 = vmul.f32 %v735, %v863
    %v896 = vmul.f32 %v736, %v864
    %v897 = vmul.f32 %v737, %v865
    %v898 = vmul.f32 %v738, %v866
    %v899 = vmul.f32 %v739, %v867
    %v900 = vmul.f32 %v740, %v868
    %v901 = vmul.f32 %v741, %v869
    %v902 = vmul.f32 %v742, %v870
    %v903 = vmul.f32 %v743, %v871
    %v904 = vmul.f32 %v744, %v872
    %v905 = vmul.f32 %v745, %v873
    %v906 = vmul.f32 %v746, %v874
    %v907 = vmul.f32 %v747, %v875
    %v908 = vmul.f32 %v748, %v876
    %909 = vst [vmem:[#allocation7] sm:$0xff] %v877
    %910 = vst [vmem:[#allocation7 + $0x8] sm:$0xff] %v878
    %911 = vst [vmem:[#allocation7 + $0x10] sm:$0xff] %v879
    %912 = vst [vmem:[#allocation7 + $0x18] sm:$0xff] %v880
    %913 = vst [vmem:[#allocation7 + $0x20] sm:$0xff] %v881
    %914 = vst [vmem:[#allocation7 + $0x28] sm:$0xff] %v882
    %915 = vst [vmem:[#allocation7 + $0x30] sm:$0xff] %v883
    %916 = vst [vmem:[#allocation7 + $0x38] sm:$0xff] %v884
    %917 = vst [vmem:[#allocation7 + $0x40] sm:$0xff] %v885
    %918 = vst [vmem:[#allocation7 + $0x48] sm:$0xff] %v886
    %919 = vst [vmem:[#allocation7 + $0x50] sm:$0xff] %v887
    %920 = vst [vmem:[#allocation7 + $0x58] sm:$0xff] %v888
    %921 = vst [vmem:[#allocation7 + $0x60] sm:$0xff] %v889
    %922 = vst [vmem:[#allocation7 + $0x68] sm:$0xff] %v890
    %923 = vst [vmem:[#allocation7 + $0x70] sm:$0xff] %v891
    %924 = vst [vmem:[#allocation7 + $0x78] sm:$0xff] %v892
    %925 = vst [vmem:[#allocation7 + $0x80] sm:$0xff] %v893
    %926 = vst [vmem:[#allocation7 + $0x88] sm:$0xff] %v894
    %927 = vst [vmem:[#allocation7 + $0x90] sm:$0xff] %v895
    %928 = vst [vmem:[#allocation7 + $0x98] sm:$0xff] %v896
    %929 = vst [vmem:[#allocation7 + $0xa0] sm:$0xff] %v897
    %930 = vst [vmem:[#allocation7 + $0xa8] sm:$0xff] %v898
    %931 = vst [vmem:[#allocation7 + $0xb0] sm:$0xff] %v899
    %932 = vst [vmem:[#allocation7 + $0xb8] sm:$0xff] %v900
    %933 = vst [vmem:[#allocation7 + $0xc0] sm:$0xff] %v901
    %934 = vst [vmem:[#allocation7 + $0xc8] sm:$0xff] %v902
    %935 = vst [vmem:[#allocation7 + $0xd0] sm:$0xff] %v903
    %936 = vst [vmem:[#allocation7 + $0xd8] sm:$0xff] %v904
    %937 = vst [vmem:[#allocation7 + $0xe0] sm:$0xff] %v905
    %938 = vst [vmem:[#allocation7 + $0xe8] sm:$0xff] %v906
    %939 = vst [vmem:[#allocation7 + $0xf0] sm:$0xff] %v907
    %940 = vst [vmem:[#allocation7 + $0xf8] sm:$0xff] %v908
    // Predicated region
    $region18: #{sglcn_forward.5} parent=1 // pred_check
      _
    $region19: #{sglcn_forward.5} parent=1 // pred_check_branch
      %942 = sbr.rel (0) target = $region21
    $region20: #{sglcn_forward.5} parent=1 // pred_region
      %s944 = ssub.s32 4096, 4096
      %945 = vsyncadd [#allocation4], %s944
      %s946 = sshll.u32 [#allocation7], 4
      %s947 = int_to_ptr.vmem [resolvable:$true] %s946
      %952 = dma.vmem_to_hbm [thread:$0]  %s947, 4096, %s2, [#allocation4], 128, 128, 8
    $region21: #{sglcn_forward.5} parent=1 // pred_fallthru
      _
    // Predicated region
    $region22: #{sglcn_forward.5} parent=1 // pred_check
      _
    $region23: #{sglcn_forward.5} parent=1 // pred_check_branch
      %954 = sbr.rel (0) target = $region25
    $region24: #{sglcn_forward.5} parent=1 // pred_region
      %955 = dma.done [#allocation4], 4096
    $region25: #{sglcn_forward.5} parent=1 // pred_fallthru
      _
    %956 = vsyncpa [#allocation3], 1
    %957 = vsyncpa [#allocation6], 1
    %958 = vsyncpa [#allocation4], 1

// kernel: sglcn_forward.4
$region0: #{sglcn_forward.4}
  #allocation0 [shape = 'u32[]', space=smem, size = 0x4, offset = 0x4, fixed_abs, tag = 'smem constant byte address 0x4 - core index']
  #allocation1 [shape = 'u32[144,128]{1,0:T(1,128)}', space=vmem, size = 0x12000, scoped, tag = 'internal scratch']
  %s0 = inlined_call_operand.hbm [shape: f32[256,16], index: 0, kind: input, shape index: {}]
  %s1 = inlined_call_operand.hbm [shape: f32[16,256], index: 1, kind: input, shape index: {}]
  %s2 = inlined_call_operand.hbm [shape: bf16[256,128], index: 2, kind: input, shape index: {}]
  %s3 = inlined_call_operand.hbm [shape: s8[256,256], index: 3, kind: input, shape index: {}]
  %s4 = inlined_call_operand.hbm [shape: bf16[128,128], index: 4, kind: input, shape index: {}]
  %s5 = inlined_call_operand.hbm [shape: f32[16], index: 5, kind: input, shape index: {}]
  %s6 = inlined_call_operand.hbm [shape: bf16[256,256], index: 6, kind: output, shape index: {0}]
  %s7 = inlined_call_operand.hbm [shape: bf16[256,128], index: 7, kind: output, shape index: {1}]
  %8 = xla_tuple %s6, %s7
  %s9 = sld [smem:[#allocation0]]
  $region89: #{sglcn_forward.4} parent=0
    _
  %s11 = ssub.s32 1, %s9
  %s12 = scalar_select 0, %s11, %s9
  $region1: #{sglcn_forward.4} parent=0
    #allocation2 [shape = 'u8[131072]{0}', space=vmem, size = 0x20000, scoped, tag = 'input window, operand 0']
    #allocation3 [shape = 's32[2]{0}', space=sflag, size = 0x8, scoped, tag = 'scoped memory for sglcn_forward.4']
    #allocation4 [shape = 's32[2]{0}', space=sflag, size = 0x8, scoped, tag = 'scoped memory for sglcn_forward.4']
    #allocation5 [shape = 's32[2]{0}', space=sflag, size = 0x8, scoped, tag = 'scoped memory for sglcn_forward.4']
    #allocation6 [shape = 'u8[16384]{0}', space=vmem, size = 0x4000, scoped, tag = 'input window, operand 1, single buffered']
    #allocation7 [shape = 's32[1]{0}', space=sflag, size = 0x4, scoped, tag = 'scoped memory for sglcn_forward.4']
    #allocation8 [shape = 'u8[65536]{0}', space=vmem, size = 0x10000, scoped, tag = 'input window, operand 2, single buffered']
    #allocation9 [shape = 'u8[65536]{0}', space=vmem, size = 0x10000, scoped, tag = 'input window, operand 3']
    #allocation10 [shape = 's32[2]{0}', space=sflag, size = 0x8, scoped, tag = 'scoped memory for sglcn_forward.4']
    #allocation11 [shape = 'u8[32768]{0}', space=vmem, size = 0x8000, scoped, tag = 'input window, operand 4, single buffered']
    #allocation12 [shape = 'u8[512]{0}', space=smem, size = 0x200, scoped, tag = 'input window, operand 5, single buffered']
    #allocation13 [shape = 'u8[131072]{0}', space=vmem, size = 0x20000, scoped, tag = 'output window, operand 0']
    #allocation14 [shape = 'u8[65536]{0}', space=vmem, size = 0x10000, scoped, tag = 'output window, operand 1']
    #allocation15 [shape = 's32[2]{0}', space=sflag, size = 0x8, scoped, tag = 'scoped memory for sglcn_forward.4']
    %13 = vsyncpa [#allocation3], 0
    %s14 = scalar_lea.sflag [#allocation3], 1
    %15 = vsyncpa %s14, 0
    %16 = vsyncpa [#allocation7], 0
    %17 = vsyncpa [#allocation10], 0
    %s18 = scalar_lea.sflag [#allocation10], 1
    %19 = vsyncpa %s18, 0
    %20 = vsyncpa [#allocation5], 0
    %21 = vsyncpa [#allocation4], 0
    %s22 = scalar_lea.sflag [#allocation4], 1
    %23 = vsyncpa %s22, 0
    %24 = vsyncpa [#allocation15], 0
    %s25 = scalar_lea.sflag [#allocation15], 1
    %26 = vsyncpa %s25, 0
    loop: start=0, step=1, limit=4
    $region2: #{sglcn_forward.4} parent=1 // loop_pre_header
      _
    $region3: #{sglcn_forward.4} parent=1 // loop_header
      %s28 = sphi 0, %s32
      %p29 = scmp.ge.s32.totalorder %s28, 4
      %s38 = sphi 0, %s40
      %s41 = sphi 0, %s38
      %s42 = sphi 0, %s41
      %s58 = sphi 0, %s42
      %s62 = sphi 0, %s62
      %s64 = sphi 0, %s62
      %s65 = sphi 0, %s64
      %s79 = sphi 0, %s65
      %s83 = sphi 0, %s83
      %s85 = sphi 0, %s83
      %s86 = sphi 0, %s85
      %s100 = sphi 0, %s86
      %s106 = sphi 0, %s108
      %s109 = sphi 0, %s106
      %s110 = sphi 0, %s109
      %s126 = sphi 0, %s110
      %s130 = sphi 0, %s130
      %s132 = sphi 0, %s130
      %s133 = sphi 0, %s132
      %s147 = sphi 0, %s133
      %s151 = sphi 0, %s151
      %s153 = sphi 0, %s151
      %s154 = sphi 0, %s153
      %s168 = sphi 0, %s154
      %s174 = sphi 0, %s176
      %s177 = sphi 0, %s174
      %s178 = sphi 0, %s177
      %s194 = sphi 0, %s178
      %s200 = sphi 0, %s202
      %s203 = sphi 0, %s200
      %s204 = sphi 0, %s203
      %s220 = sphi 0, %s204
    $region4: #{sglcn_forward.4} parent=1 // loop_header_branch
      %31 = sbr.rel (%p29) target = $region8
    $region5: #{sglcn_forward.4} parent=1 // loop_body
      %s33 = ssub.s32 %s28, 1
      %s34 = ssub.s32 %s28, 2
      %s35 = sadd.s32 %s28, 1
      %s36 = ssub.s32 %s28, %s35
      %p37 = scmp.eq.s32.totalorder %s36, 0
      %s39 = sadd.s32 %s38, 1
      %s40 = scalar_select %p37, %s38, %s39
      %p43 = pneg %p37
      %p44 = scmp.eq.s32.totalorder %s28, 1
      %p45 = por %p43, %p44
      %p46 = scmp.ne.s32.totalorder %s38, %s41
      %p47 = scmp.eq.s32.totalorder %s28, 0
      %p48 = por %p46, %p47
      %p49 = scmp.ne.s32.totalorder %s38, %s41
      %p50 = scmp.eq.s32.totalorder %s33, 1
      %p51 = por %p49, %p50
      %p52 = scmp.ne.s32.totalorder %s41, %s42
      %p53 = scmp.eq.s32.totalorder %s33, 0
      %p54 = por %p52, %p53
      %p55 = scmp.ne.s32.totalorder %s41, %s42
      %p56 = scmp.eq.s32.totalorder %s34, 1
      %p57 = por %p55, %p56
      %p59 = scmp.ne.s32.totalorder %s42, %s58
      %p60 = scmp.eq.s32.totalorder %s34, 0
      %p61 = por %p59, %p60
      %s63 = sadd.s32 %s62, 1
      %p66 = scmp.eq.s32.totalorder %s28, 1
      %p67 = scmp.ne.s32.totalorder %s62, %s64
      %p68 = scmp.eq.s32.totalorder %s28, 0
      %p69 = por %p67, %p68
      %p70 = scmp.ne.s32.totalorder %s62, %s64
      %p71 = scmp.eq.s32.totalorder %s33, 1
      %p72 = por %p70, %p71
      %p73 = scmp.ne.s32.totalorder %s64, %s65
      %p74 = scmp.eq.s32.totalorder %s33, 0
      %p75 = por %p73, %p74
      %p76 = scmp.ne.s32.totalorder %s64, %s65
      %p77 = scmp.eq.s32.totalorder %s34, 1
      %p78 = por %p76, %p77
      %p80 = scmp.ne.s32.totalorder %s65, %s79
      %p81 = scmp.eq.s32.totalorder %s34, 0
      %p82 = por %p80, %p81
      %s84 = sadd.s32 %s83, 1
      %p87 = scmp.eq.s32.totalorder %s28, 1
      %p88 = scmp.ne.s32.totalorder %s83, %s85
      %p89 = scmp.eq.s32.totalorder %s28, 0
      %p90 = por %p88, %p89
      %p91 = scmp.ne.s32.totalorder %s83, %s85
      %p92 = scmp.eq.s32.totalorder %s33, 1
      %p93 = por %p91, %p92
      %p94 = scmp.ne.s32.totalorder %s85, %s86
      %p95 = scmp.eq.s32.totalorder %s33, 0
      %p96 = por %p94, %p95
      %p97 = scmp.ne.s32.totalorder %s85, %s86
      %p98 = scmp.eq.s32.totalorder %s34, 1
      %p99 = por %p97, %p98
      %p101 = scmp.ne.s32.totalorder %s86, %s100
      %p102 = scmp.eq.s32.totalorder %s34, 0
      %p103 = por %p101, %p102
      %s104 = ssub.s32 %s28, %s35
      %p105 = scmp.eq.s32.totalorder %s104, 0
      %s107 = sadd.s32 %s106, 1
      %s108 = scalar_select %p105, %s106, %s107
      %p111 = pneg %p105
      %p112 = scmp.eq.s32.totalorder %s28, 1
      %p113 = por %p111, %p112
      %p114 = scmp.ne.s32.totalorder %s106, %s109
      %p115 = scmp.eq.s32.totalorder %s28, 0
      %p116 = por %p114, %p115
      %p117 = scmp.ne.s32.totalorder %s106, %s109
      %p118 = scmp.eq.s32.totalorder %s33, 1
      %p119 = por %p117, %p118
      %p120 = scmp.ne.s32.totalorder %s109, %s110
      %p121 = scmp.eq.s32.totalorder %s33, 0
      %p122 = por %p120, %p121
      %p123 = scmp.ne.s32.totalorder %s109, %s110
      %p124 = scmp.eq.s32.totalorder %s34, 1
      %p125 = por %p123, %p124
      %p127 = scmp.ne.s32.totalorder %s110, %s126
      %p128 = scmp.eq.s32.totalorder %s34, 0
      %p129 = por %p127, %p128
      %s131 = sadd.s32 %s130, 1
      %p134 = scmp.eq.s32.totalorder %s28, 1
      %p135 = scmp.ne.s32.totalorder %s130, %s132
      %p136 = scmp.eq.s32.totalorder %s28, 0
      %p137 = por %p135, %p136
      %p138 = scmp.ne.s32.totalorder %s130, %s132
      %p139 = scmp.eq.s32.totalorder %s33, 1
      %p140 = por %p138, %p139
      %p141 = scmp.ne.s32.totalorder %s132, %s133
      %p142 = scmp.eq.s32.totalorder %s33, 0
      %p143 = por %p141, %p142
      %p144 = scmp.ne.s32.totalorder %s132, %s133
      %p145 = scmp.eq.s32.totalorder %s34, 1
      %p146 = por %p144, %p145
      %p148 = scmp.ne.s32.totalorder %s133, %s147
      %p149 = scmp.eq.s32.totalorder %s34, 0
      %p150 = por %p148, %p149
      %s152 = sadd.s32 %s151, 1
      %p155 = scmp.eq.s32.totalorder %s28, 1
      %p156 = scmp.ne.s32.totalorder %s151, %s153
      %p157 = scmp.eq.s32.totalorder %s28, 0
      %p158 = por %p156, %p157
      %p159 = scmp.ne.s32.totalorder %s151, %s153
      %p160 = scmp.eq.s32.totalorder %s33, 1
      %p161 = por %p159, %p160
      %p162 = scmp.ne.s32.totalorder %s153, %s154
      %p163 = scmp.eq.s32.totalorder %s33, 0
      %p164 = por %p162, %p163
      %p165 = scmp.ne.s32.totalorder %s153, %s154
      %p166 = scmp.eq.s32.totalorder %s34, 1
      %p167 = por %p165, %p166
      %p169 = scmp.ne.s32.totalorder %s154, %s168
      %p170 = scmp.eq.s32.totalorder %s34, 0
      %p171 = por %p169, %p170
      %s172 = ssub.s32 %s28, %s35
      %p173 = scmp.eq.s32.totalorder %s172, 0
      %s175 = sadd.s32 %s174, 1
      %s176 = scalar_select %p173, %s174, %s175
      %p179 = pneg %p173
      %p180 = scmp.eq.s32.totalorder %s28, 1
      %p181 = por %p179, %p180
      %p182 = scmp.ne.s32.totalorder %s174, %s177
      %p183 = scmp.eq.s32.totalorder %s28, 0
      %p184 = por %p182, %p183
      %p185 = scmp.ne.s32.totalorder %s174, %s177
      %p186 = scmp.eq.s32.totalorder %s33, 1
      %p187 = por %p185, %p186
      %p188 = scmp.ne.s32.totalorder %s177, %s178
      %p189 = scmp.eq.s32.totalorder %s33, 0
      %p190 = por %p188, %p189
      %p191 = scmp.ne.s32.totalorder %s177, %s178
      %p192 = scmp.eq.s32.totalorder %s34, 1
      %p193 = por %p191, %p192
      %p195 = scmp.ne.s32.totalorder %s178, %s194
      %p196 = scmp.eq.s32.totalorder %s34, 0
      %p197 = por %p195, %p196
      %s198 = ssub.s32 %s28, %s35
      %p199 = scmp.eq.s32.totalorder %s198, 0
      %s201 = sadd.s32 %s200, 1
      %s202 = scalar_select %p199, %s200, %s201
      %p205 = pneg %p199
      %p206 = scmp.eq.s32.totalorder %s28, 1
      %p207 = por %p205, %p206
      %p208 = scmp.ne.s32.totalorder %s200, %s203
      %p209 = scmp.eq.s32.totalorder %s28, 0
      %p210 = por %p208, %p209
      %p211 = scmp.ne.s32.totalorder %s200, %s203
      %p212 = scmp.eq.s32.totalorder %s33, 1
      %p213 = por %p211, %p212
      %p214 = scmp.ne.s32.totalorder %s203, %s204
      %p215 = scmp.eq.s32.totalorder %s33, 0
      %p216 = por %p214, %p215
      %p217 = scmp.ne.s32.totalorder %s203, %s204
      %p218 = scmp.eq.s32.totalorder %s34, 1
      %p219 = por %p217, %p218
      %p221 = scmp.ne.s32.totalorder %s204, %s220
      %p222 = scmp.eq.s32.totalorder %s34, 0
      %p223 = por %p221, %p222
      %p224 = scmp.le.s32.totalorder 1, %s28
      %p225 = scmp.lt.s32.totalorder %s28, 3
      %p226 = pnand %p224, %p225
      %p227 = pneg %p226
      // Predicated region
      $region9: #{sglcn_forward.4} parent=5 // pred_check
        _
      $region10: #{sglcn_forward.4} parent=5 // pred_check_branch
        %229 = sbr.rel (%p226) target = $region12
      $region11: #{sglcn_forward.4} parent=5 // pred_region
        %s230 = ssub.s32 %s28, 1
        // Predicated region
        $region13: #{sglcn_forward.4} parent=11 // pred_check
          %p231 = pneg %p75
        $region14: #{sglcn_forward.4} parent=11 // pred_check_branch
          %233 = sbr.rel (%p231) target = $region16
        $region15: #{sglcn_forward.4} parent=11 // pred_region
          %s235 = ssub.s32 512, 512
          %236 = vsyncadd [#allocation7], %s235
          %s237 = sshll.u32 [#allocation6], 4
          %s238 = int_to_ptr.vmem [resolvable:$true] %s237
          %243 = dma.hbm_to_vmem [thread:$0]  %s1, 512, %s238, [#allocation7], 256, 256, 16
        $region16: #{sglcn_forward.4} parent=11 // pred_fallthru
          _
        // Predicated region
        $region17: #{sglcn_forward.4} parent=11 // pred_check
          %p244 = pneg %p96
        $region18: #{sglcn_forward.4} parent=11 // pred_check_branch
          %246 = sbr.rel (%p244) target = $region20
        $region19: #{sglcn_forward.4} parent=11 // pred_region
          %s248 = ssub.s32 2048, 2048
          %249 = vsyncadd [#allocation7], %s248
          %s250 = sshll.u32 [#allocation8], 4
          %s251 = int_to_ptr.vmem [resolvable:$true] %s250
          %256 = dma.hbm_to_vmem [thread:$0]  %s2, 2048, %s251, [#allocation7], 64, 64, 4
        $region20: #{sglcn_forward.4} parent=11 // pred_fallthru
          _
        // Predicated region
        $region21: #{sglcn_forward.4} parent=11 // pred_check
          %p257 = pneg %p143
        $region22: #{sglcn_forward.4} parent=11 // pred_check_branch
          %259 = sbr.rel (%p257) target = $region24
        $region23: #{sglcn_forward.4} parent=11 // pred_region
          %s261 = ssub.s32 1024, 1024
          %262 = vsyncadd [#allocation10], %s261
          %s263 = sshll.u32 [#allocation11], 4
          %s264 = int_to_ptr.vmem [resolvable:$true] %s263
          %269 = dma.hbm_to_vmem [thread:$0]  %s4, 1024, %s264, [#allocation10], 64, 64, 4
        $region24: #{sglcn_forward.4} parent=11 // pred_fallthru
          _
        // Predicated region
        $region25: #{sglcn_forward.4} parent=11 // pred_check
          %p270 = pneg %p164
        $region26: #{sglcn_forward.4} parent=11 // pred_check_branch
          %272 = sbr.rel (%p270) target = $region28
        $region27: #{sglcn_forward.4} parent=11 // pred_region
          %s274 = ssub.s32 16, 16
          %275 = vsyncadd [#allocation5], %s274
          %278 = dma.hbm_to_smem %s5, 16, [#allocation12], [#allocation5]
        $region28: #{sglcn_forward.4} parent=11 // pred_fallthru
          _
      $region12: #{sglcn_forward.4} parent=5 // pred_fallthru
        _
      %p279 = scmp.lt.s32.totalorder %s28, 2
      // Predicated region
      $region29: #{sglcn_forward.4} parent=5 // pred_check
        %p280 = pneg %p279
      $region30: #{sglcn_forward.4} parent=5 // pred_check_branch
        %282 = sbr.rel (%p280) target = $region32
      $region31: #{sglcn_forward.4} parent=5 // pred_region
        // Predicated region
        $region33: #{sglcn_forward.4} parent=31 // pred_check
          %p283 = pneg %p48
        $region34: #{sglcn_forward.4} parent=31 // pred_check_branch
          %285 = sbr.rel (%p283) target = $region36
        $region35: #{sglcn_forward.4} parent=31 // pred_region
          %s286 = sand.u32 %s38, 1
          %s287 = scalar_lea.sflag [#allocation3], %s286
          %s288 = sand.u32 %s38, 1
          %s289 = smul.addr %s288, 128
          %s290 = scalar_lea.vmem [#allocation2], %s289
          %s291 = smul.u32 16, %s28
          %s293 = ssub.s32 2048, 2048
          %294 = vsyncadd %s287, %s293
          %s295 = smul.addr %s291, 128
          %s296 = scalar_lea.hbm %s0, %s295
          %s297 = sshll.u32 %s290, 4
          %s298 = int_to_ptr.vmem [resolvable:$true] %s297
          %303 = dma.hbm_to_vmem [thread:$0]  %s296, 2048, %s298, %s287, 128, 128, 8
        $region36: #{sglcn_forward.4} parent=31 // pred_fallthru
          _
        // Predicated region
        $region37: #{sglcn_forward.4} parent=31 // pred_check
          %p304 = pneg %p116
        $region38: #{sglcn_forward.4} parent=31 // pred_check_branch
          %306 = sbr.rel (%p304) target = $region40
        $region39: #{sglcn_forward.4} parent=31 // pred_region
          %s307 = sand.u32 %s28, 1
          %s308 = scalar_lea.sflag [#allocation10], %s307
          %s309 = sand.u32 %s106, 1
          %s310 = smul.addr %s309, 64
          %s311 = scalar_lea.vmem [#allocation9], %s310
          %s312 = smul.u32 4, %s28
          %s314 = ssub.s32 1024, 1024
          %315 = vsyncadd %s308, %s314
          %s316 = smul.addr %s312, 2
          %s317 = smul.addr %s316, 128
          %s318 = scalar_lea.hbm %s3, %s317
          %s319 = sshll.u32 %s311, 4
          %s320 = int_to_ptr.vmem [resolvable:$true] %s319
          %325 = dma.hbm_to_vmem [thread:$0]  %s318, 1024, %s320, %s308, 256, 256, 16
        $region40: #{sglcn_forward.4} parent=31 // pred_fallthru
          _
      $region32: #{sglcn_forward.4} parent=5 // pred_fallthru
        _
      %p326 = scmp.le.s32.totalorder 1, %s28
      %p327 = scmp.lt.s32.totalorder %s28, 3
      %p328 = pnand %p326, %p327
      %p329 = pneg %p328
      // Predicated region
      $region41: #{sglcn_forward.4} parent=5 // pred_check
        _
      $region42: #{sglcn_forward.4} parent=5 // pred_check_branch
        %331 = sbr.rel (%p328) target = $region44
      $region43: #{sglcn_forward.4} parent=5 // pred_region
        %s332 = ssub.s32 %s28, 1
        %s333 = sand.u32 %s41, 1
        %s334 = scalar_lea.sflag [#allocation3], %s333
        %s335 = sand.u32 %s41, 1
        %s336 = smul.addr %s335, 128
        %s337 = scalar_lea.vmem [#allocation2], %s336
        // Predicated region
        $region45: #{sglcn_forward.4} parent=43 // pred_check
          %p338 = pneg %p54
        $region46: #{sglcn_forward.4} parent=43 // pred_check_branch
          %340 = sbr.rel (%p338) target = $region48
        $region47: #{sglcn_forward.4} parent=43 // pred_region
          %341 = dma.done %s334, 2048
        $region48: #{sglcn_forward.4} parent=43 // pred_fallthru
          _
        // Predicated region
        $region49: #{sglcn_forward.4} parent=43 // pred_check
          %p342 = pneg %p75
        $region50: #{sglcn_forward.4} parent=43 // pred_check_branch
          %344 = sbr.rel (%p342) target = $region52
        $region51: #{sglcn_forward.4} parent=43 // pred_region
          %345 = dma.done [#allocation7], 512
        $region52: #{sglcn_forward.4} parent=43 // pred_fallthru
          _
        // Predicated region
        $region53: #{sglcn_forward.4} parent=43 // pred_check
          %p346 = pneg %p96
        $region54: #{sglcn_forward.4} parent=43 // pred_check_branch
          %348 = sbr.rel (%p346) target = $region56
        $region55: #{sglcn_forward.4} parent=43 // pred_region
          %349 = dma.done [#allocation7], 2048
        $region56: #{sglcn_forward.4} parent=43 // pred_fallthru
          _
        %s350 = sand.u32 %s33, 1
        %s351 = scalar_lea.sflag [#allocation10], %s350
        %s352 = sand.u32 %s109, 1
        %s353 = smul.addr %s352, 64
        %s354 = scalar_lea.vmem [#allocation9], %s353
        // Predicated region
        $region57: #{sglcn_forward.4} parent=43 // pred_check
          %p355 = pneg %p122
        $region58: #{sglcn_forward.4} parent=43 // pred_check_branch
          %357 = sbr.rel (%p355) target = $region60
        $region59: #{sglcn_forward.4} parent=43 // pred_region
          %358 = dma.done %s351, 1024
        $region60: #{sglcn_forward.4} parent=43 // pred_fallthru
          _
        // Predicated region
        $region61: #{sglcn_forward.4} parent=43 // pred_check
          %p359 = pneg %p143
        $region62: #{sglcn_forward.4} parent=43 // pred_check_branch
          %361 = sbr.rel (%p359) target = $region64
        $region63: #{sglcn_forward.4} parent=43 // pred_region
          %362 = dma.done [#allocation10], 1024
        $region64: #{sglcn_forward.4} parent=43 // pred_fallthru
          _
        // Predicated region
        $region65: #{sglcn_forward.4} parent=43 // pred_check
          %p363 = pneg %p164
        $region66: #{sglcn_forward.4} parent=43 // pred_check_branch
          %365 = sbr.rel (%p363) target = $region68
        $region67: #{sglcn_forward.4} parent=43 // pred_region
          %366 = dma.done [#allocation5], 16
        $region68: #{sglcn_forward.4} parent=43 // pred_fallthru
          _
        %367 = sfence
        %s368 = sand.u32 %s41, 1
        %s369 = scalar_lea.sflag [#allocation3], %s368
        %s370 = sand.u32 %s41, 1
        %s371 = smul.addr %s370, 128
        %s372 = scalar_lea.vmem [#allocation2], %s371
        %p373 = pneg %p54
        %p374 = pneg %p51
        %p375 = pneg %p75
        %p376 = pneg %p72
        %p377 = pneg %p96
        %p378 = pneg %p93
        %s379 = sand.u32 %s33, 1
        %s380 = scalar_lea.sflag [#allocation10], %s379
        %s381 = sand.u32 %s109, 1
        %s382 = smul.addr %s381, 64
        %s383 = scalar_lea.vmem [#allocation9], %s382
        %p384 = pneg %p122
        %p385 = pneg %p119
        %p386 = pneg %p143
        %p387 = pneg %p140
        %p388 = pneg %p164
        %p389 = pneg %p161
        %p390 = pneg %p190
        %p391 = pneg %p187
        %s392 = sand.u32 %s177, 1
        %s393 = scalar_lea.sflag [#allocation4], %s392
        %s394 = sand.u32 %s177, 1
        %s395 = smul.addr %s394, 128
        %s396 = scalar_lea.vmem [#allocation13], %s395
        %p397 = pneg %p216
        %p398 = pneg %p213
        %s399 = sand.u32 %s203, 1
        %s400 = scalar_lea.sflag [#allocation15], %s399
        %s401 = sand.u32 %s203, 1
        %s402 = smul.addr %s401, 64
        %s403 = scalar_lea.vmem [#allocation14], %s402
        %s404 = smul.u32 16, %s33
        %s405 = smul.u32 4, %s33
        %s406 = smul.u32 16, %s33
        %s407 = smul.u32 16, %s33
        %v411 = vld [vmem:[%s337] sm:$0xff]
        %v412 = vld [vmem:[%s337 + $0x8] sm:$0xff]
        %v413 = vld [vmem:[%s337 + $0x10] sm:$0xff]
        %v414 = vld [vmem:[%s337 + $0x18] sm:$0xff]
        %v415 = vld [vmem:[%s337 + $0x20] sm:$0xff]
        %v416 = vld [vmem:[%s337 + $0x28] sm:$0xff]
        %v417 = vld [vmem:[%s337 + $0x30] sm:$0xff]
        %v418 = vld [vmem:[%s337 + $0x38] sm:$0xff]
        %v419 = vld [vmem:[%s337 + $0x40] sm:$0xff]
        %v420 = vld [vmem:[%s337 + $0x48] sm:$0xff]
        %v421 = vld [vmem:[%s337 + $0x50] sm:$0xff]
        %v422 = vld [vmem:[%s337 + $0x58] sm:$0xff]
        %v423 = vld [vmem:[%s337 + $0x60] sm:$0xff]
        %v424 = vld [vmem:[%s337 + $0x68] sm:$0xff]
        %v425 = vld [vmem:[%s337 + $0x70] sm:$0xff]
        %v426 = vld [vmem:[%s337 + $0x78] sm:$0xff]
        %v427 = vld [vmem:[#allocation6] sm:$0xff]
        %v428 = vld [vmem:[#allocation6 + $0x8] sm:$0xff]
        %v429 = vld [vmem:[#allocation6 + $0x10] sm:$0xff]
        %v430 = vld [vmem:[#allocation6 + $0x18] sm:$0xff]
        %s431 = sld [smem:[#allocation12]]
        %433 = vset.pattern.permute.xlu0 0
        %434 = vperm.xlu0 %433, %v411
        %v435 = vpop.permute.xlu0 %434
        %438 = vset.pattern.permute.xlu0 0
        %439 = vperm.xlu0 %438, %v412
        %v440 = vpop.permute.xlu0 %439
        %443 = vset.pattern.permute.xlu0 0
        %444 = vperm.xlu0 %443, %v413
        %v445 = vpop.permute.xlu0 %444
        %448 = vset.pattern.permute.xlu0 0
        %449 = vperm.xlu0 %448, %v414
        %v450 = vpop.permute.xlu0 %449
        %453 = vset.pattern.permute.xlu0 0
        %454 = vperm.xlu0 %453, %v415
        %v455 = vpop.permute.xlu0 %454
        %458 = vset.pattern.permute.xlu0 0
        %459 = vperm.xlu0 %458, %v416
        %v460 = vpop.permute.xlu0 %459
        %463 = vset.pattern.permute.xlu0 0
        %464 = vperm.xlu0 %463, %v417
        %v465 = vpop.permute.xlu0 %464
        %468 = vset.pattern.permute.xlu0 0
        %469 = vperm.xlu0 %468, %v418
        %v470 = vpop.permute.xlu0 %469
        %473 = vset.pattern.permute.xlu0 0
        %474 = vperm.xlu0 %473, %v419
        %v475 = vpop.permute.xlu0 %474
        %478 = vset.pattern.permute.xlu0 0
        %479 = vperm.xlu0 %478, %v420
        %v480 = vpop.permute.xlu0 %479
        %483 = vset.pattern.permute.xlu0 0
        %484 = vperm.xlu0 %483, %v421
        %v485 = vpop.permute.xlu0 %484
        %488 = vset.pattern.permute.xlu0 0
        %489 = vperm.xlu0 %488, %v422
        %v490 = vpop.permute.xlu0 %489
        %493 = vset.pattern.permute.xlu0 0
        %494 = vperm.xlu0 %493, %v423
        %v495 = vpop.permute.xlu0 %494
        %498 = vset.pattern.permute.xlu0 0
        %499 = vperm.xlu0 %498, %v424
        %v500 = vpop.permute.xlu0 %499
        %503 = vset.pattern.permute.xlu0 0
        %504 = vperm.xlu0 %503, %v425
        %v505 = vpop.permute.xlu0 %504
        %508 = vset.pattern.permute.xlu0 0
        %509 = vperm.xlu0 %508, %v426
        %v510 = vpop.permute.xlu0 %509
        %v512 = vlaneseq
        %v513 = vshrl.u32 %v512, 7
        %v514 = vsub.s32 0, %v513
        %v515 = vrot.slane %v427, %v514
        %v516 = vlaneseq
        %v517 = vshrl.u32 %v516, 7
        %v518 = vsub.s32 0, %v517
        %v519 = vrot.slane %v428, %v518
        %v520 = vsub.f32 %v435, %v515
        %v521 = vsub.f32 %v435, %v519
        %v522 = vsub.f32 %v440, %v515
        %v523 = vsub.f32 %v440, %v519
        %v524 = vsub.f32 %v445, %v515
        %v525 = vsub.f32 %v445, %v519
        %v526 = vsub.f32 %v450, %v515
        %v527 = vsub.f32 %v450, %v519
        %v528 = vsub.f32 %v455, %v515
        %v529 = vsub.f32 %v455, %v519
        %v530 = vsub.f32 %v460, %v515
        %v531 = vsub.f32 %v460, %v519
        %v532 = vsub.f32 %v465, %v515
        %v533 = vsub.f32 %v465, %v519
        %v534 = vsub.f32 %v470, %v515
        %v535 = vsub.f32 %v470, %v519
        %v536 = vsub.f32 %v475, %v515
        %v537 = vsub.f32 %v475, %v519
        %v538 = vsub.f32 %v480, %v515
        %v539 = vsub.f32 %v480, %v519
        %v540 = vsub.f32 %v485, %v515
        %v541 = vsub.f32 %v485, %v519
        %v542 = vsub.f32 %v490, %v515
        %v543 = vsub.f32 %v490, %v519
        %v544 = vsub.f32 %v495, %v515
        %v545 = vsub.f32 %v495, %v519
        %v546 = vsub.f32 %v500, %v515
        %v547 = vsub.f32 %v500, %v519
        %v548 = vsub.f32 %v505, %v515
        %v549 = vsub.f32 %v505, %v519
        %v550 = vsub.f32 %v510, %v515
        %v551 = vsub.f32 %v510, %v519
        %v552 = vand.u32 2147483647, %v520
        %v553 = vand.u32 2147483647, %v521
        %v554 = vand.u32 2147483647, %v522
        %v555 = vand.u32 2147483647, %v523
        %v556 = vand.u32 2147483647, %v524
        %v557 = vand.u32 2147483647, %v525
        %v558 = vand.u32 2147483647, %v526
        %v559 = vand.u32 2147483647, %v527
        %v560 = vand.u32 2147483647, %v528
        %v561 = vand.u32 2147483647, %v529
        %v562 = vand.u32 2147483647, %v530
        %v563 = vand.u32 2147483647, %v531
        %v564 = vand.u32 2147483647, %v532
        %v565 = vand.u32 2147483647, %v533
        %v566 = vand.u32 2147483647, %v534
        %v567 = vand.u32 2147483647, %v535
        %v568 = vand.u32 2147483647, %v536
        %v569 = vand.u32 2147483647, %v537
        %v570 = vand.u32 2147483647, %v538
        %v571 = vand.u32 2147483647, %v539
        %v572 = vand.u32 2147483647, %v540
        %v573 = vand.u32 2147483647, %v541
        %v574 = vand.u32 2147483647, %v542
        %v575 = vand.u32 2147483647, %v543
        %v576 = vand.u32 2147483647, %v544
        %v577 = vand.u32 2147483647, %v545
        %v578 = vand.u32 2147483647, %v546
        %v579 = vand.u32 2147483647, %v547
        %v580 = vand.u32 2147483647, %v548
        %v581 = vand.u32 2147483647, %v549
        %v582 = vand.u32 2147483647, %v550
        %v583 = vand.u32 2147483647, %v551
        %v584 = vstv %s431
        %v585 = vmul.f32 %v584, %v552
        %v586 = vmul.f32 %v584, %v553
        %v587 = vmul.f32 %v584, %v554
        %v588 = vmul.f32 %v584, %v555
        %v589 = vmul.f32 %v584, %v556
        %v590 = vmul.f32 %v584, %v557
        %v591 = vmul.f32 %v584, %v558
        %v592 = vmul.f32 %v584, %v559
        %v593 = vmul.f32 %v584, %v560
        %v594 = vmul.f32 %v584, %v561
        %v595 = vmul.f32 %v584, %v562
        %v596 = vmul.f32 %v584, %v563
        %v597 = vmul.f32 %v584, %v564
        %v598 = vmul.f32 %v584, %v565
        %v599 = vmul.f32 %v584, %v566
        %v600 = vmul.f32 %v584, %v567
        %v601 = vmul.f32 %v584, %v568
        %v602 = vmul.f32 %v584, %v569
        %v603 = vmul.f32 %v584, %v570
        %v604 = vmul.f32 %v584, %v571
        %v605 = vmul.f32 %v584, %v572
        %v606 = vmul.f32 %v584, %v573
        %v607 = vmul.f32 %v584, %v574
        %v608 = vmul.f32 %v584, %v575
        %v609 = vmul.f32 %v584, %v576
        %v610 = vmul.f32 %v584, %v577
        %v611 = vmul.f32 %v584, %v578
        %v612 = vmul.f32 %v584, %v579
        %v613 = vmul.f32 %v584, %v580
        %v614 = vmul.f32 %v584, %v581
        %v615 = vmul.f32 %v584, %v582
        %v616 = vmul.f32 %v584, %v583
        %v617 = vadd.f32 %v585, 0.0
        %v618 = vadd.f32 %v586, 0.0
        %v619 = vadd.f32 %v587, 0.0
        %v620 = vadd.f32 %v588, 0.0
        %v621 = vadd.f32 %v589, 0.0
        %v622 = vadd.f32 %v590, 0.0
        %v623 = vadd.f32 %v591, 0.0
        %v624 = vadd.f32 %v592, 0.0
        %v625 = vadd.f32 %v593, 0.0
        %v626 = vadd.f32 %v594, 0.0
        %v627 = vadd.f32 %v595, 0.0
        %v628 = vadd.f32 %v596, 0.0
        %v629 = vadd.f32 %v597, 0.0
        %v630 = vadd.f32 %v598, 0.0
        %v631 = vadd.f32 %v599, 0.0
        %v632 = vadd.f32 %v600, 0.0
        %v633 = vadd.f32 %v601, 0.0
        %v634 = vadd.f32 %v602, 0.0
        %v635 = vadd.f32 %v603, 0.0
        %v636 = vadd.f32 %v604, 0.0
        %v637 = vadd.f32 %v605, 0.0
        %v638 = vadd.f32 %v606, 0.0
        %v639 = vadd.f32 %v607, 0.0
        %v640 = vadd.f32 %v608, 0.0
        %v641 = vadd.f32 %v609, 0.0
        %v642 = vadd.f32 %v610, 0.0
        %v643 = vadd.f32 %v611, 0.0
        %v644 = vadd.f32 %v612, 0.0
        %v645 = vadd.f32 %v613, 0.0
        %v646 = vadd.f32 %v614, 0.0
        %v647 = vadd.f32 %v615, 0.0
        %v648 = vadd.f32 %v616, 0.0
        %s649 = sld [smem:[#allocation12 + $0x1]]
        %650 = vset.pattern.permute.xlu0 1
        %651 = vperm.xlu0 %650, %v411
        %v652 = vpop.permute.xlu0 %651
        %654 = vset.pattern.permute.xlu0 1
        %655 = vperm.xlu0 %654, %v412
        %v656 = vpop.permute.xlu0 %655
        %658 = vset.pattern.permute.xlu0 1
        %659 = vperm.xlu0 %658, %v413
        %v660 = vpop.permute.xlu0 %659
        %662 = vset.pattern.permute.xlu0 1
        %663 = vperm.xlu0 %662, %v414
        %v664 = vpop.permute.xlu0 %663
        %666 = vset.pattern.permute.xlu0 1
        %667 = vperm.xlu0 %666, %v415
        %v668 = vpop.permute.xlu0 %667
        %670 = vset.pattern.permute.xlu0 1
        %671 = vperm.xlu0 %670, %v416
        %v672 = vpop.permute.xlu0 %671
        %674 = vset.pattern.permute.xlu0 1
        %675 = vperm.xlu0 %674, %v417
        %v676 = vpop.permute.xlu0 %675
        %678 = vset.pattern.permute.xlu0 1
        %679 = vperm.xlu0 %678, %v418
        %v680 = vpop.permute.xlu0 %679
        %682 = vset.pattern.permute.xlu0 1
        %683 = vperm.xlu0 %682, %v419
        %v684 = vpop.permute.xlu0 %683
        %686 = vset.pattern.permute.xlu0 1
        %687 = vperm.xlu0 %686, %v420
        %v688 = vpop.permute.xlu0 %687
        %690 = vset.pattern.permute.xlu0 1
        %691 = vperm.xlu0 %690, %v421
        %v692 = vpop.permute.xlu0 %691
        %694 = vset.pattern.permute.xlu0 1
        %695 = vperm.xlu0 %694, %v422
        %v696 = vpop.permute.xlu0 %695
        %698 = vset.pattern.permute.xlu0 1
        %699 = vperm.xlu0 %698, %v423
        %v700 = vpop.permute.xlu0 %699
        %702 = vset.pattern.permute.xlu0 1
        %703 = vperm.xlu0 %702, %v424
        %v704 = vpop.permute.xlu0 %703
        %706 = vset.pattern.permute.xlu0 1
        %707 = vperm.xlu0 %706, %v425
        %v708 = vpop.permute.xlu0 %707
        %710 = vset.pattern.permute.xlu0 1
        %711 = vperm.xlu0 %710, %v426
        %v712 = vpop.permute.xlu0 %711
        %v714 = vlaneseq
        %v715 = vshrl.u32 %v714, 7
        %v716 = vsub.s32 1, %v715
        %v717 = vrot.slane %v427, %v716
        %v718 = vlaneseq
        %v719 = vshrl.u32 %v718, 7
        %v720 = vsub.s32 1, %v719
        %v721 = vrot.slane %v428, %v720
        %v722 = vsub.f32 %v652, %v717
        %v723 = vsub.f32 %v652, %v721
        %v724 = vsub.f32 %v656, %v717
        %v725 = vsub.f32 %v656, %v721
        %v726 = vsub.f32 %v660, %v717
        %v727 = vsub.f32 %v660, %v721
        %v728 = vsub.f32 %v664, %v717
        %v729 = vsub.f32 %v664, %v721
        %v730 = vsub.f32 %v668, %v717
        %v731 = vsub.f32 %v668, %v721
        %v732 = vsub.f32 %v672, %v717
        %v733 = vsub.f32 %v672, %v721
        %v734 = vsub.f32 %v676, %v717
        %v735 = vsub.f32 %v676, %v721
        %v736 = vsub.f32 %v680, %v717
        %v737 = vsub.f32 %v680, %v721
        %v738 = vsub.f32 %v684, %v717
        %v739 = vsub.f32 %v684, %v721
        %v740 = vsub.f32 %v688, %v717
        %v741 = vsub.f32 %v688, %v721
        %v742 = vsub.f32 %v692, %v717
        %v743 = vsub.f32 %v692, %v721
        %v744 = vsub.f32 %v696, %v717
        %v745 = vsub.f32 %v696, %v721
        %v746 = vsub.f32 %v700, %v717
        %v747 = vsub.f32 %v700, %v721
        %v748 = vsub.f32 %v704, %v717
        %v749 = vsub.f32 %v704, %v721
        %v750 = vsub.f32 %v708, %v717
        %v751 = vsub.f32 %v708, %v721
        %v752 = vsub.f32 %v712, %v717
        %v753 = vsub.f32 %v712, %v721
        %v754 = vand.u32 2147483647, %v722
        %v755 = vand.u32 2147483647, %v723
        %v756 = vand.u32 2147483647, %v724
        %v757 = vand.u32 2147483647, %v725
        %v758 = vand.u32 2147483647, %v726
        %v759 = vand.u32 2147483647, %v727
        %v760 = vand.u32 2147483647, %v728
        %v761 = vand.u32 2147483647, %v729
        %v762 = vand.u32 2147483647, %v730
        %v763 = vand.u32 2147483647, %v731
        %v764 = vand.u32 2147483647, %v732
        %v765 = vand.u32 2147483647, %v733
        %v766 = vand.u32 2147483647, %v734
        %v767 = vand.u32 2147483647, %v735
        %v768 = vand.u32 2147483647, %v736
        %v769 = vand.u32 2147483647, %v737
        %v770 = vand.u32 2147483647, %v738
        %v771 = vand.u32 2147483647, %v739
        %v772 = vand.u32 2147483647, %v740
        %v773 = vand.u32 2147483647, %v741
        %v774 = vand.u32 2147483647, %v742
        %v775 = vand.u32 2147483647, %v743
        %v776 = vand.u32 2147483647, %v744
        %v777 = vand.u32 2147483647, %v745
        %v778 = vand.u32 2147483647, %v746
        %v779 = vand.u32 2147483647, %v747
        %v780 = vand.u32 2147483647, %v748
        %v781 = vand.u32 2147483647, %v749
        %v782 = vand.u32 2147483647, %v750
        %v783 = vand.u32 2147483647, %v751
        %v784 = vand.u32 2147483647, %v752
        %v785 = vand.u32 2147483647, %v753
        %v786 = vstv %s649
        %v787 = vmul.f32 %v786, %v754
        %v788 = vmul.f32 %v786, %v755
        %v789 = vmul.f32 %v786, %v756
        %v790 = vmul.f32 %v786, %v757
        %v791 = vmul.f32 %v786, %v758
        %v792 = vmul.f32 %v786, %v759
        %v793 = vmul.f32 %v786, %v760
        %v794 = vmul.f32 %v786, %v761
        %v795 = vmul.f32 %v786, %v762
        %v796 = vmul.f32 %v786, %v763
        %v797 = vmul.f32 %v786, %v764
        %v798 = vmul.f32 %v786, %v765
        %v799 = vmul.f32 %v786, %v766
        %v800 = vmul.f32 %v786, %v767
        %v801 = vmul.f32 %v786, %v768
        %v802 = vmul.f32 %v786, %v769
        %v803 = vmul.f32 %v786, %v770
        %v804 = vmul.f32 %v786, %v771
        %v805 = vmul.f32 %v786, %v772
        %v806 = vmul.f32 %v786, %v773
        %v807 = vmul.f32 %v786, %v774
        %v808 = vmul.f32 %v786, %v775
        %v809 = vmul.f32 %v786, %v776
        %v810 = vmul.f32 %v786, %v777
        %v811 = vmul.f32 %v786, %v778
        %v812 = vmul.f32 %v786, %v779
        %v813 = vmul.f32 %v786, %v780
        %v814 = vmul.f32 %v786, %v781
        %v815 = vmul.f32 %v786, %v782
        %v816 = vmul.f32 %v786, %v783
        %v817 = vmul.f32 %v786, %v784
        %v818 = vmul.f32 %v786, %v785
        %v819 = vadd.f32 %v617, %v787
        %v820 = vadd.f32 %v618, %v788
        %v821 = vadd.f32 %v619, %v789
        %v822 = vadd.f32 %v620, %v790
        %v823 = vadd.f32 %v621, %v791
        %v824 = vadd.f32 %v622, %v792
        %v825 = vadd.f32 %v623, %v793
        %v826 = vadd.f32 %v624, %v794
        %v827 = vadd.f32 %v625, %v795
        %v828 = vadd.f32 %v626, %v796
        %v829 = vadd.f32 %v627, %v797
        %v830 = vadd.f32 %v628, %v798
        %v831 = vadd.f32 %v629, %v799
        %v832 = vadd.f32 %v630, %v800
        %v833 = vadd.f32 %v631, %v801
        %v834 = vadd.f32 %v632, %v802
        %v835 = vadd.f32 %v633, %v803
        %v836 = vadd.f32 %v634, %v804
        %v837 = vadd.f32 %v635, %v805
        %v838 = vadd.f32 %v636, %v806
        %v839 = vadd.f32 %v637, %v807
        %v840 = vadd.f32 %v638, %v808
        %v841 = vadd.f32 %v639, %v809
        %v842 = vadd.f32 %v640, %v810
        %v843 = vadd.f32 %v641, %v811
        %v844 = vadd.f32 %v642, %v812
        %v845 = vadd.f32 %v643, %v813
        %v846 = vadd.f32 %v644, %v814
        %v847 = vadd.f32 %v645, %v815
        %v848 = vadd.f32 %v646, %v816
        %v849 = vadd.f32 %v647, %v817
        %v850 = vadd.f32 %v648, %v818
        %s851 = sld [smem:[#allocation12 + $0x2]]
        %852 = vset.pattern.permute.xlu0 2
        %853 = vperm.xlu0 %852, %v411
        %v854 = vpop.permute.xlu0 %853
        %856 = vset.pattern.permute.xlu0 2
        %857 = vperm.xlu0 %856, %v412
        %v858 = vpop.permute.xlu0 %857
        %860 = vset.pattern.permute.xlu0 2
        %861 = vperm.xlu0 %860, %v413
        %v862 = vpop.permute.xlu0 %861
        %864 = vset.pattern.permute.xlu0 2
        %865 = vperm.xlu0 %864, %v414
        %v866 = vpop.permute.xlu0 %865
        %868 = vset.pattern.permute.xlu0 2
        %869 = vperm.xlu0 %868, %v415
        %v870 = vpop.permute.xlu0 %869
        %872 = vset.pattern.permute.xlu0 2
        %873 = vperm.xlu0 %872, %v416
        %v874 = vpop.permute.xlu0 %873
        %876 = vset.pattern.permute.xlu0 2
        %877 = vperm.xlu0 %876, %v417
        %v878 = vpop.permute.xlu0 %877
        %880 = vset.pattern.permute.xlu0 2
        %881 = vperm.xlu0 %880, %v418
        %v882 = vpop.permute.xlu0 %881
        %884 = vset.pattern.permute.xlu0 2
        %885 = vperm.xlu0 %884, %v419
        %v886 = vpop.permute.xlu0 %885
        %888 = vset.pattern.permute.xlu0 2
        %889 = vperm.xlu0 %888, %v420
        %v890 = vpop.permute.xlu0 %889
        %892 = vset.pattern.permute.xlu0 2
        %893 = vperm.xlu0 %892, %v421
        %v894 = vpop.permute.xlu0 %893
        %896 = vset.pattern.permute.xlu0 2
        %897 = vperm.xlu0 %896, %v422
        %v898 = vpop.permute.xlu0 %897
        %900 = vset.pattern.permute.xlu0 2
        %901 = vperm.xlu0 %900, %v423
        %v902 = vpop.permute.xlu0 %901
        %904 = vset.pattern.permute.xlu0 2
        %905 = vperm.xlu0 %904, %v424
        %v906 = vpop.permute.xlu0 %905
        %908 = vset.pattern.permute.xlu0 2
        %909 = vperm.xlu0 %908, %v425
        %v910 = vpop.permute.xlu0 %909
        %912 = vset.pattern.permute.xlu0 2
        %913 = vperm.xlu0 %912, %v426
        %v914 = vpop.permute.xlu0 %913
        %v916 = vlaneseq
        %v917 = vshrl.u32 %v916, 7
        %v918 = vsub.s32 2, %v917
        %v919 = vrot.slane %v427, %v918
        %v920 = vlaneseq
        %v921 = vshrl.u32 %v920, 7
        %v922 = vsub.s32 2, %v921
        %v923 = vrot.slane %v428, %v922
        %v924 = vsub.f32 %v854, %v919
        %v925 = vsub.f32 %v854, %v923
        %v926 = vsub.f32 %v858, %v919
        %v927 = vsub.f32 %v858, %v923
        %v928 = vsub.f32 %v862, %v919
        %v929 = vsub.f32 %v862, %v923
        %v930 = vsub.f32 %v866, %v919
        %v931 = vsub.f32 %v866, %v923
        %v932 = vsub.f32 %v870, %v919
        %v933 = vsub.f32 %v870, %v923
        %v934 = vsub.f32 %v874, %v919
        %v935 = vsub.f32 %v874, %v923
        %v936 = vsub.f32 %v878, %v919
        %v937 = vsub.f32 %v878, %v923
        %v938 = vsub.f32 %v882, %v919
        %v939 = vsub.f32 %v882, %v923
        %v940 = vsub.f32 %v886, %v919
        %v941 = vsub.f32 %v886, %v923
        %v942 = vsub.f32 %v890, %v919
        %v943 = vsub.f32 %v890, %v923
        %v944 = vsub.f32 %v894, %v919
        %v945 = vsub.f32 %v894, %v923
        %v946 = vsub.f32 %v898, %v919
        %v947 = vsub.f32 %v898, %v923
        %v948 = vsub.f32 %v902, %v919
        %v949 = vsub.f32 %v902, %v923
        %v950 = vsub.f32 %v906, %v919
        %v951 = vsub.f32 %v906, %v923
        %v952 = vsub.f32 %v910, %v919
        %v953 = vsub.f32 %v910, %v923
        %v954 = vsub.f32 %v914, %v919
        %v955 = vsub.f32 %v914, %v923
        %v956 = vand.u32 2147483647, %v924
        %v957 = vand.u32 2147483647, %v925
        %v958 = vand.u32 2147483647, %v926
        %v959 = vand.u32 2147483647, %v927
        %v960 = vand.u32 2147483647, %v928
        %v961 = vand.u32 2147483647, %v929
        %v962 = vand.u32 2147483647, %v930
        %v963 = vand.u32 2147483647, %v931
        %v964 = vand.u32 2147483647, %v932
        %v965 = vand.u32 2147483647, %v933
        %v966 = vand.u32 2147483647, %v934
        %v967 = vand.u32 2147483647, %v935
        %v968 = vand.u32 2147483647, %v936
        %v969 = vand.u32 2147483647, %v937
        %v970 = vand.u32 2147483647, %v938
        %v971 = vand.u32 2147483647, %v939
        %v972 = vand.u32 2147483647, %v940
        %v973 = vand.u32 2147483647, %v941
        %v974 = vand.u32 2147483647, %v942
        %v975 = vand.u32 2147483647, %v943
        %v976 = vand.u32 2147483647, %v944
        %v977 = vand.u32 2147483647, %v945
        %v978 = vand.u32 2147483647, %v946
        %v979 = vand.u32 2147483647, %v947
        %v980 = vand.u32 2147483647, %v948
        %v981 = vand.u32 2147483647, %v949
        %v982 = vand.u32 2147483647, %v950
        %v983 = vand.u32 2147483647, %v951
        %v984 = vand.u32 2147483647, %v952
        %v985 = vand.u32 2147483647, %v953
        %v986 = vand.u32 2147483647, %v954
        %v987 = vand.u32 2147483647, %v955
        %v988 = vstv %s851
        %v989 = vmul.f32 %v988, %v956
        %v990 = vmul.f32 %v988, %v957
        %v991 = vmul.f32 %v988, %v958
        %v992 = vmul.f32 %v988, %v959
        %v993 = vmul.f32 %v988, %v960
        %v994 = vmul.f32 %v988, %v961
        %v995 = vmul.f32 %v988, %v962
        %v996 = vmul.f32 %v988, %v963
        %v997 = vmul.f32 %v988, %v964
        %v998 = vmul.f32 %v988, %v965
        %v999 = vmul.f32 %v988, %v966
        %v1000 = vmul.f32 %v988, %v967
        %v1001 = vmul.f32 %v988, %v968
        %v1002 = vmul.f32 %v988, %v969
        %v1003 = vmul.f32 %v988, %v970
        %v1004 = vmul.f32 %v988, %v971
        %v1005 = vmul.f32 %v988, %v972
        %v1006 = vmul.f32 %v988, %v973
        %v1007 = vmul.f32 %v988, %v974
        %v1008 = vmul.f32 %v988, %v975
        %v1009 = vmul.f32 %v988, %v976
        %v1010 = vmul.f32 %v988, %v977
        %v1011 = vmul.f32 %v988, %v978
        %v1012 = vmul.f32 %v988, %v979
        %v1013 = vmul.f32 %v988, %v980
        %v1014 = vmul.f32 %v988, %v981
        %v1015 = vmul.f32 %v988, %v982
        %v1016 = vmul.f32 %v988, %v983
        %v1017 = vmul.f32 %v988, %v984
        %v1018 = vmul.f32 %v988, %v985
        %v1019 = vmul.f32 %v988, %v986
        %v1020 = vmul.f32 %v988, %v987
        %v1021 = vadd.f32 %v819, %v989
        %v1022 = vadd.f32 %v820, %v990
        %v1023 = vadd.f32 %v821, %v991
        %v1024 = vadd.f32 %v822, %v992
        %v1025 = vadd.f32 %v823, %v993
        %v1026 = vadd.f32 %v824, %v994
        %v1027 = vadd.f32 %v825, %v995
        %v1028 = vadd.f32 %v826, %v996
        %v1029 = vadd.f32 %v827, %v997
        %v1030 = vadd.f32 %v828, %v998
        %v1031 = vadd.f32 %v829, %v999
        %v1032 = vadd.f32 %v830, %v1000
        %v1033 = vadd.f32 %v831, %v1001
        %v1034 = vadd.f32 %v832, %v1002
        %v1035 = vadd.f32 %v833, %v1003
        %v1036 = vadd.f32 %v834, %v1004
        %v1037 = vadd.f32 %v835, %v1005
        %v1038 = vadd.f32 %v836, %v1006
        %v1039 = vadd.f32 %v837, %v1007
        %v1040 = vadd.f32 %v838, %v1008
        %v1041 = vadd.f32 %v839, %v1009
        %v1042 = vadd.f32 %v840, %v1010
        %v1043 = vadd.f32 %v841, %v1011
        %v1044 = vadd.f32 %v842, %v1012
        %v1045 = vadd.f32 %v843, %v1013
        %v1046 = vadd.f32 %v844, %v1014
        %v1047 = vadd.f32 %v845, %v1015
        %v1048 = vadd.f32 %v846, %v1016
        %v1049 = vadd.f32 %v847, %v1017
        %v1050 = vadd.f32 %v848, %v1018
        %v1051 = vadd.f32 %v849, %v1019
        %v1052 = vadd.f32 %v850, %v1020
        %s1053 = sld [smem:[#allocation12 + $0x3]]
        %1054 = vset.pattern.permute.xlu0 3
        %1055 = vperm.xlu0 %1054, %v411
        %v1056 = vpop.permute.xlu0 %1055
        %1058 = vset.pattern.permute.xlu0 3
        %1059 = vperm.xlu0 %1058, %v412
        %v1060 = vpop.permute.xlu0 %1059
        %1062 = vset.pattern.permute.xlu0 3
        %1063 = vperm.xlu0 %1062, %v413
        %v1064 = vpop.permute.xlu0 %1063
        %1066 = vset.pattern.permute.xlu0 3
        %1067 = vperm.xlu0 %1066, %v414
        %v1068 = vpop.permute.xlu0 %1067
        %1070 = vset.pattern.permute.xlu0 3
        %1071 = vperm.xlu0 %1070, %v415
        %v1072 = vpop.permute.xlu0 %1071
        %1074 = vset.pattern.permute.xlu0 3
        %1075 = vperm.xlu0 %1074, %v416
        %v1076 = vpop.permute.xlu0 %1075
        %1078 = vset.pattern.permute.xlu0 3
        %1079 = vperm.xlu0 %1078, %v417
        %v1080 = vpop.permute.xlu0 %1079
        %1082 = vset.pattern.permute.xlu0 3
        %1083 = vperm.xlu0 %1082, %v418
        %v1084 = vpop.permute.xlu0 %1083
        %1086 = vset.pattern.permute.xlu0 3
        %1087 = vperm.xlu0 %1086, %v419
        %v1088 = vpop.permute.xlu0 %1087
        %1090 = vset.pattern.permute.xlu0 3
        %1091 = vperm.xlu0 %1090, %v420
        %v1092 = vpop.permute.xlu0 %1091
        %1094 = vset.pattern.permute.xlu0 3
        %1095 = vperm.xlu0 %1094, %v421
        %v1096 = vpop.permute.xlu0 %1095
        %1098 = vset.pattern.permute.xlu0 3
        %1099 = vperm.xlu0 %1098, %v422
        %v1100 = vpop.permute.xlu0 %1099
        %1102 = vset.pattern.permute.xlu0 3
        %1103 = vperm.xlu0 %1102, %v423
        %v1104 = vpop.permute.xlu0 %1103
        %1106 = vset.pattern.permute.xlu0 3
        %1107 = vperm.xlu0 %1106, %v424
        %v1108 = vpop.permute.xlu0 %1107
        %1110 = vset.pattern.permute.xlu0 3
        %1111 = vperm.xlu0 %1110, %v425
        %v1112 = vpop.permute.xlu0 %1111
        %1114 = vset.pattern.permute.xlu0 3
        %1115 = vperm.xlu0 %1114, %v426
        %v1116 = vpop.permute.xlu0 %1115
        %v1118 = vlaneseq
        %v1119 = vshrl.u32 %v1118, 7
        %v1120 = vsub.s32 3, %v1119
        %v1121 = vrot.slane %v427, %v1120
        %v1122 = vlaneseq
        %v1123 = vshrl.u32 %v1122, 7
        %v1124 = vsub.s32 3, %v1123
        %v1125 = vrot.slane %v428, %v1124
        %v1126 = vsub.f32 %v1056, %v1121
        %v1127 = vsub.f32 %v1056, %v1125
        %v1128 = vsub.f32 %v1060, %v1121
        %v1129 = vsub.f32 %v1060, %v1125
        %v1130 = vsub.f32 %v1064, %v1121
        %v1131 = vsub.f32 %v1064, %v1125
        %v1132 = vsub.f32 %v1068, %v1121
        %v1133 = vsub.f32 %v1068, %v1125
        %v1134 = vsub.f32 %v1072, %v1121
        %v1135 = vsub.f32 %v1072, %v1125
        %v1136 = vsub.f32 %v1076, %v1121
        %v1137 = vsub.f32 %v1076, %v1125
        %v1138 = vsub.f32 %v1080, %v1121
        %v1139 = vsub.f32 %v1080, %v1125
        %v1140 = vsub.f32 %v1084, %v1121
        %v1141 = vsub.f32 %v1084, %v1125
        %v1142 = vsub.f32 %v1088, %v1121
        %v1143 = vsub.f32 %v1088, %v1125
        %v1144 = vsub.f32 %v1092, %v1121
        %v1145 = vsub.f32 %v1092, %v1125
        %v1146 = vsub.f32 %v1096, %v1121
        %v1147 = vsub.f32 %v1096, %v1125
        %v1148 = vsub.f32 %v1100, %v1121
        %v1149 = vsub.f32 %v1100, %v1125
        %v1150 = vsub.f32 %v1104, %v1121
        %v1151 = vsub.f32 %v1104, %v1125
        %v1152 = vsub.f32 %v1108, %v1121
        %v1153 = vsub.f32 %v1108, %v1125
        %v1154 = vsub.f32 %v1112, %v1121
        %v1155 = vsub.f32 %v1112, %v1125
        %v1156 = vsub.f32 %v1116, %v1121
        %v1157 = vsub.f32 %v1116, %v1125
        %v1158 = vand.u32 2147483647, %v1126
        %v1159 = vand.u32 2147483647, %v1127
        %v1160 = vand.u32 2147483647, %v1128
        %v1161 = vand.u32 2147483647, %v1129
        %v1162 = vand.u32 2147483647, %v1130
        %v1163 = vand.u32 2147483647, %v1131
        %v1164 = vand.u32 2147483647, %v1132
        %v1165 = vand.u32 2147483647, %v1133
        %v1166 = vand.u32 2147483647, %v1134
        %v1167 = vand.u32 2147483647, %v1135
        %v1168 = vand.u32 2147483647, %v1136
        %v1169 = vand.u32 2147483647, %v1137
        %v1170 = vand.u32 2147483647, %v1138
        %v1171 = vand.u32 2147483647, %v1139
        %v1172 = vand.u32 2147483647, %v1140
        %v1173 = vand.u32 2147483647, %v1141
        %v1174 = vand.u32 2147483647, %v1142
        %v1175 = vand.u32 2147483647, %v1143
        %v1176 = vand.u32 2147483647, %v1144
        %v1177 = vand.u32 2147483647, %v1145
        %v1178 = vand.u32 2147483647, %v1146
        %v1179 = vand.u32 2147483647, %v1147
        %v1180 = vand.u32 2147483647, %v1148
        %v1181 = vand.u32 2147483647, %v1149
        %v1182 = vand.u32 2147483647, %v1150
        %v1183 = vand.u32 2147483647, %v1151
        %v1184 = vand.u32 2147483647, %v1152
        %v1185 = vand.u32 2147483647, %v1153
        %v1186 = vand.u32 2147483647, %v1154
        %v1187 = vand.u32 2147483647, %v1155
        %v1188 = vand.u32 2147483647, %v1156
        %v1189 = vand.u32 2147483647, %v1157
        %v1190 = vstv %s1053
        %v1191 = vmul.f32 %v1190, %v1158
        %v1192 = vmul.f32 %v1190, %v1159
        %v1193 = vmul.f32 %v1190, %v1160
        %v1194 = vmul.f32 %v1190, %v1161
        %v1195 = vmul.f32 %v1190, %v1162
        %v1196 = vmul.f32 %v1190, %v1163
        %v1197 = vmul.f32 %v1190, %v1164
        %v1198 = vmul.f32 %v1190, %v1165
        %v1199 = vmul.f32 %v1190, %v1166
        %v1200 = vmul.f32 %v1190, %v1167
        %v1201 = vmul.f32 %v1190, %v1168
        %v1202 = vmul.f32 %v1190, %v1169
        %v1203 = vmul.f32 %v1190, %v1170
        %v1204 = vmul.f32 %v1190, %v1171
        %v1205 = vmul.f32 %v1190, %v1172
        %v1206 = vmul.f32 %v1190, %v1173
        %v1207 = vmul.f32 %v1190, %v1174
        %v1208 = vmul.f32 %v1190, %v1175
        %v1209 = vmul.f32 %v1190, %v1176
        %v1210 = vmul.f32 %v1190, %v1177
        %v1211 = vmul.f32 %v1190, %v1178
        %v1212 = vmul.f32 %v1190, %v1179
        %v1213 = vmul.f32 %v1190, %v1180
        %v1214 = vmul.f32 %v1190, %v1181
        %v1215 = vmul.f32 %v1190, %v1182
        %v1216 = vmul.f32 %v1190, %v1183
        %v1217 = vmul.f32 %v1190, %v1184
        %v1218 = vmul.f32 %v1190, %v1185
        %v1219 = vmul.f32 %v1190, %v1186
        %v1220 = vmul.f32 %v1190, %v1187
        %v1221 = vmul.f32 %v1190, %v1188
        %v1222 = vmul.f32 %v1190, %v1189
        %v1223 = vadd.f32 %v1021, %v1191
        %v1224 = vadd.f32 %v1022, %v1192
        %v1225 = vadd.f32 %v1023, %v1193
        %v1226 = vadd.f32 %v1024, %v1194
        %v1227 = vadd.f32 %v1025, %v1195
        %v1228 = vadd.f32 %v1026, %v1196
        %v1229 = vadd.f32 %v1027, %v1197
        %v1230 = vadd.f32 %v1028, %v1198
        %v1231 = vadd.f32 %v1029, %v1199
        %v1232 = vadd.f32 %v1030, %v1200
        %v1233 = vadd.f32 %v1031, %v1201
        %v1234 = vadd.f32 %v1032, %v1202
        %v1235 = vadd.f32 %v1033, %v1203
        %v1236 = vadd.f32 %v1034, %v1204
        %v1237 = vadd.f32 %v1035, %v1205
        %v1238 = vadd.f32 %v1036, %v1206
        %v1239 = vadd.f32 %v1037, %v1207
        %v1240 = vadd.f32 %v1038, %v1208
        %v1241 = vadd.f32 %v1039, %v1209
        %v1242 = vadd.f32 %v1040, %v1210
        %v1243 = vadd.f32 %v1041, %v1211
        %v1244 = vadd.f32 %v1042, %v1212
        %v1245 = vadd.f32 %v1043, %v1213
        %v1246 = vadd.f32 %v1044, %v1214
        %v1247 = vadd.f32 %v1045, %v1215
        %v1248 = vadd.f32 %v1046, %v1216
        %v1249 = vadd.f32 %v1047, %v1217
        %v1250 = vadd.f32 %v1048, %v1218
        %v1251 = vadd.f32 %v1049, %v1219
        %v1252 = vadd.f32 %v1050, %v1220
        %v1253 = vadd.f32 %v1051, %v1221
        %v1254 = vadd.f32 %v1052, %v1222
        %s1255 = sld [smem:[#allocation12 + $0x4]]
        %1256 = vset.pattern.permute.xlu0 4
        %1257 = vperm.xlu0 %1256, %v411
        %v1258 = vpop.permute.xlu0 %1257
        %1260 = vset.pattern.permute.xlu0 4
        %1261 = vperm.xlu0 %1260, %v412
        %v1262 = vpop.permute.xlu0 %1261
        %1264 = vset.pattern.permute.xlu0 4
        %1265 = vperm.xlu0 %1264, %v413
        %v1266 = vpop.permute.xlu0 %1265
        %1268 = vset.pattern.permute.xlu0 4
        %1269 = vperm.xlu0 %1268, %v414
        %v1270 = vpop.permute.xlu0 %1269
        %1272 = vset.pattern.permute.xlu0 4
        %1273 = vperm.xlu0 %1272, %v415
        %v1274 = vpop.permute.xlu0 %1273
        %1276 = vset.pattern.permute.xlu0 4
        %1277 = vperm.xlu0 %1276, %v416
        %v1278 = vpop.permute.xlu0 %1277
        %1280 = vset.pattern.permute.xlu0 4
        %1281 = vperm.xlu0 %1280, %v417
        %v1282 = vpop.permute.xlu0 %1281
        %1284 = vset.pattern.permute.xlu0 4
        %1285 = vperm.xlu0 %1284, %v418
        %v1286 = vpop.permute.xlu0 %1285
        %1288 = vset.pattern.permute.xlu0 4
        %1289 = vperm.xlu0 %1288, %v419
        %v1290 = vpop.permute.xlu0 %1289
        %1292 = vset.pattern.permute.xlu0 4
        %1293 = vperm.xlu0 %1292, %v420
        %v1294 = vpop.permute.xlu0 %1293
        %1296 = vset.pattern.permute.xlu0 4
        %1297 = vperm.xlu0 %1296, %v421
        %v1298 = vpop.permute.xlu0 %1297
        %1300 = vset.pattern.permute.xlu0 4
        %1301 = vperm.xlu0 %1300, %v422
        %v1302 = vpop.permute.xlu0 %1301
        %1304 = vset.pattern.permute.xlu0 4
        %1305 = vperm.xlu0 %1304, %v423
        %v1306 = vpop.permute.xlu0 %1305
        %1308 = vset.pattern.permute.xlu0 4
        %1309 = vperm.xlu0 %1308, %v424
        %v1310 = vpop.permute.xlu0 %1309
        %1312 = vset.pattern.permute.xlu0 4
        %1313 = vperm.xlu0 %1312, %v425
        %v1314 = vpop.permute.xlu0 %1313
        %1316 = vset.pattern.permute.xlu0 4
        %1317 = vperm.xlu0 %1316, %v426
        %v1318 = vpop.permute.xlu0 %1317
        %v1320 = vlaneseq
        %v1321 = vshrl.u32 %v1320, 7
        %v1322 = vsub.s32 4, %v1321
        %v1323 = vrot.slane %v427, %v1322
        %v1324 = vlaneseq
        %v1325 = vshrl.u32 %v1324, 7
        %v1326 = vsub.s32 4, %v1325
        %v1327 = vrot.slane %v428, %v1326
        %v1328 = vsub.f32 %v1258, %v1323
        %v1329 = vsub.f32 %v1258, %v1327
        %v1330 = vsub.f32 %v1262, %v1323
        %v1331 = vsub.f32 %v1262, %v1327
        %v1332 = vsub.f32 %v1266, %v1323
        %v1333 = vsub.f32 %v1266, %v1327
        %v1334 = vsub.f32 %v1270, %v1323
        %v1335 = vsub.f32 %v1270, %v1327
        %v1336 = vsub.f32 %v1274, %v1323
        %v1337 = vsub.f32 %v1274, %v1327
        %v1338 = vsub.f32 %v1278, %v1323
        %v1339 = vsub.f32 %v1278, %v1327
        %v1340 = vsub.f32 %v1282, %v1323
        %v1341 = vsub.f32 %v1282, %v1327
        %v1342 = vsub.f32 %v1286, %v1323
        %v1343 = vsub.f32 %v1286, %v1327
        %v1344 = vsub.f32 %v1290, %v1323
        %v1345 = vsub.f32 %v1290, %v1327
        %v1346 = vsub.f32 %v1294, %v1323
        %v1347 = vsub.f32 %v1294, %v1327
        %v1348 = vsub.f32 %v1298, %v1323
        %v1349 = vsub.f32 %v1298, %v1327
        %v1350 = vsub.f32 %v1302, %v1323
        %v1351 = vsub.f32 %v1302, %v1327
        %v1352 = vsub.f32 %v1306, %v1323
        %v1353 = vsub.f32 %v1306, %v1327
        %v1354 = vsub.f32 %v1310, %v1323
        %v1355 = vsub.f32 %v1310, %v1327
        %v1356 = vsub.f32 %v1314, %v1323
        %v1357 = vsub.f32 %v1314, %v1327
        %v1358 = vsub.f32 %v1318, %v1323
        %v1359 = vsub.f32 %v1318, %v1327
        %v1360 = vand.u32 2147483647, %v1328
        %v1361 = vand.u32 2147483647, %v1329
        %v1362 = vand.u32 2147483647, %v1330
        %v1363 = vand.u32 2147483647, %v1331
        %v1364 = vand.u32 2147483647, %v1332
        %v1365 = vand.u32 2147483647, %v1333
        %v1366 = vand.u32 2147483647, %v1334
        %v1367 = vand.u32 2147483647, %v1335
        %v1368 = vand.u32 2147483647, %v1336
        %v1369 = vand.u32 2147483647, %v1337
        %v1370 = vand.u32 2147483647, %v1338
        %v1371 = vand.u32 2147483647, %v1339
        %v1372 = vand.u32 2147483647, %v1340
        %v1373 = vand.u32 2147483647, %v1341
        %v1374 = vand.u32 2147483647, %v1342
        %v1375 = vand.u32 2147483647, %v1343
        %v1376 = vand.u32 2147483647, %v1344
        %v1377 = vand.u32 2147483647, %v1345
        %v1378 = vand.u32 2147483647, %v1346
        %v1379 = vand.u32 2147483647, %v1347
        %v1380 = vand.u32 2147483647, %v1348
        %v1381 = vand.u32 2147483647, %v1349
        %v1382 = vand.u32 2147483647, %v1350
        %v1383 = vand.u32 2147483647, %v1351
        %v1384 = vand.u32 2147483647, %v1352
        %v1385 = vand.u32 2147483647, %v1353
        %v1386 = vand.u32 2147483647, %v1354
        %v1387 = vand.u32 2147483647, %v1355
        %v1388 = vand.u32 2147483647, %v1356
        %v1389 = vand.u32 2147483647, %v1357
        %v1390 = vand.u32 2147483647, %v1358
        %v1391 = vand.u32 2147483647, %v1359
        %v1392 = vstv %s1255
        %v1393 = vmul.f32 %v1392, %v1360
        %v1394 = vmul.f32 %v1392, %v1361
        %v1395 = vmul.f32 %v1392, %v1362
        %v1396 = vmul.f32 %v1392, %v1363
        %v1397 = vmul.f32 %v1392, %v1364
        %v1398 = vmul.f32 %v1392, %v1365
        %v1399 = vmul.f32 %v1392, %v1366
        %v1400 = vmul.f32 %v1392, %v1367
        %v1401 = vmul.f32 %v1392, %v1368
        %v1402 = vmul.f32 %v1392, %v1369
        %v1403 = vmul.f32 %v1392, %v1370
        %v1404 = vmul.f32 %v1392, %v1371
        %v1405 = vmul.f32 %v1392, %v1372
        %v1406 = vmul.f32 %v1392, %v1373
        %v1407 = vmul.f32 %v1392, %v1374
        %v1408 = vmul.f32 %v1392, %v1375
        %v1409 = vmul.f32 %v1392, %v1376
        %v1410 = vmul.f32 %v1392, %v1377
        %v1411 = vmul.f32 %v1392, %v1378
        %v1412 = vmul.f32 %v1392, %v1379
        %v1413 = vmul.f32 %v1392, %v1380
        %v1414 = vmul.f32 %v1392, %v1381
        %v1415 = vmul.f32 %v1392, %v1382
        %v1416 = vmul.f32 %v1392, %v1383
        %v1417 = vmul.f32 %v1392, %v1384
        %v1418 = vmul.f32 %v1392, %v1385
        %v1419 = vmul.f32 %v1392, %v1386
        %v1420 = vmul.f32 %v1392, %v1387
        %v1421 = vmul.f32 %v1392, %v1388
        %v1422 = vmul.f32 %v1392, %v1389
        %v1423 = vmul.f32 %v1392, %v1390
        %v1424 = vmul.f32 %v1392, %v1391
        %v1425 = vadd.f32 %v1223, %v1393
        %v1426 = vadd.f32 %v1224, %v1394
        %v1427 = vadd.f32 %v1225, %v1395
        %v1428 = vadd.f32 %v1226, %v1396
        %v1429 = vadd.f32 %v1227, %v1397
        %v1430 = vadd.f32 %v1228, %v1398
        %v1431 = vadd.f32 %v1229, %v1399
        %v1432 = vadd.f32 %v1230, %v1400
        %v1433 = vadd.f32 %v1231, %v1401
        %v1434 = vadd.f32 %v1232, %v1402
        %v1435 = vadd.f32 %v1233, %v1403
        %v1436 = vadd.f32 %v1234, %v1404
        %v1437 = vadd.f32 %v1235, %v1405
        %v1438 = vadd.f32 %v1236, %v1406
        %v1439 = vadd.f32 %v1237, %v1407
        %v1440 = vadd.f32 %v1238, %v1408
        %v1441 = vadd.f32 %v1239, %v1409
        %v1442 = vadd.f32 %v1240, %v1410
        %v1443 = vadd.f32 %v1241, %v1411
        %v1444 = vadd.f32 %v1242, %v1412
        %v1445 = vadd.f32 %v1243, %v1413
        %v1446 = vadd.f32 %v1244, %v1414
        %v1447 = vadd.f32 %v1245, %v1415
        %v1448 = vadd.f32 %v1246, %v1416
        %v1449 = vadd.f32 %v1247, %v1417
        %v1450 = vadd.f32 %v1248, %v1418
        %v1451 = vadd.f32 %v1249, %v1419
        %v1452 = vadd.f32 %v1250, %v1420
        %v1453 = vadd.f32 %v1251, %v1421
        %v1454 = vadd.f32 %v1252, %v1422
        %v1455 = vadd.f32 %v1253, %v1423
        %v1456 = vadd.f32 %v1254, %v1424
        %s1457 = sld [smem:[#allocation12 + $0x5]]
        %1458 = vset.pattern.permute.xlu0 5
        %1459 = vperm.xlu0 %1458, %v411
        %v1460 = vpop.permute.xlu0 %1459
        %1462 = vset.pattern.permute.xlu0 5
        %1463 = vperm.xlu0 %1462, %v412
        %v1464 = vpop.permute.xlu0 %1463
        %1466 = vset.pattern.permute.xlu0 5
        %1467 = vperm.xlu0 %1466, %v413
        %v1468 = vpop.permute.xlu0 %1467
        %1470 = vset.pattern.permute.xlu0 5
        %1471 = vperm.xlu0 %1470, %v414
        %v1472 = vpop.permute.xlu0 %1471
        %1474 = vset.pattern.permute.xlu0 5
        %1475 = vperm.xlu0 %1474, %v415
        %v1476 = vpop.permute.xlu0 %1475
        %1478 = vset.pattern.permute.xlu0 5
        %1479 = vperm.xlu0 %1478, %v416
        %v1480 = vpop.permute.xlu0 %1479
        %1482 = vset.pattern.permute.xlu0 5
        %1483 = vperm.xlu0 %1482, %v417
        %v1484 = vpop.permute.xlu0 %1483
        %1486 = vset.pattern.permute.xlu0 5
        %1487 = vperm.xlu0 %1486, %v418
        %v1488 = vpop.permute.xlu0 %1487
        %1490 = vset.pattern.permute.xlu0 5
        %1491 = vperm.xlu0 %1490, %v419
        %v1492 = vpop.permute.xlu0 %1491
        %1494 = vset.pattern.permute.xlu0 5
        %1495 = vperm.xlu0 %1494, %v420
        %v1496 = vpop.permute.xlu0 %1495
        %1498 = vset.pattern.permute.xlu0 5
        %1499 = vperm.xlu0 %1498, %v421
        %v1500 = vpop.permute.xlu0 %1499
        %1502 = vset.pattern.permute.xlu0 5
        %1503 = vperm.xlu0 %1502, %v422
        %v1504 = vpop.permute.xlu0 %1503
        %1506 = vset.pattern.permute.xlu0 5
        %1507 = vperm.xlu0 %1506, %v423
        %v1508 = vpop.permute.xlu0 %1507
        %1510 = vset.pattern.permute.xlu0 5
        %1511 = vperm.xlu0 %1510, %v424
        %v1512 = vpop.permute.xlu0 %1511
        %1514 = vset.pattern.permute.xlu0 5
        %1515 = vperm.xlu0 %1514, %v425
        %v1516 = vpop.permute.xlu0 %1515
        %1518 = vset.pattern.permute.xlu0 5
        %1519 = vperm.xlu0 %1518, %v426
        %v1520 = vpop.permute.xlu0 %1519
        %v1522 = vlaneseq
        %v1523 = vshrl.u32 %v1522, 7
        %v1524 = vsub.s32 5, %v1523
        %v1525 = vrot.slane %v427, %v1524
        %v1526 = vlaneseq
        %v1527 = vshrl.u32 %v1526, 7
        %v1528 = vsub.s32 5, %v1527
        %v1529 = vrot.slane %v428, %v1528
        %v1530 = vsub.f32 %v1460, %v1525
        %v1531 = vsub.f32 %v1460, %v1529
        %v1532 = vsub.f32 %v1464, %v1525
        %v1533 = vsub.f32 %v1464, %v1529
        %v1534 = vsub.f32 %v1468, %v1525
        %v1535 = vsub.f32 %v1468, %v1529
        %v1536 = vsub.f32 %v1472, %v1525
        %v1537 = vsub.f32 %v1472, %v1529
        %v1538 = vsub.f32 %v1476, %v1525
        %v1539 = vsub.f32 %v1476, %v1529
        %v1540 = vsub.f32 %v1480, %v1525
        %v1541 = vsub.f32 %v1480, %v1529
        %v1542 = vsub.f32 %v1484, %v1525
        %v1543 = vsub.f32 %v1484, %v1529
        %v1544 = vsub.f32 %v1488, %v1525
        %v1545 = vsub.f32 %v1488, %v1529
        %v1546 = vsub.f32 %v1492, %v1525
        %v1547 = vsub.f32 %v1492, %v1529
        %v1548 = vsub.f32 %v1496, %v1525
        %v1549 = vsub.f32 %v1496, %v1529
        %v1550 = vsub.f32 %v1500, %v1525
        %v1551 = vsub.f32 %v1500, %v1529
        %v1552 = vsub.f32 %v1504, %v1525
        %v1553 = vsub.f32 %v1504, %v1529
        %v1554 = vsub.f32 %v1508, %v1525
        %v1555 = vsub.f32 %v1508, %v1529
        %v1556 = vsub.f32 %v1512, %v1525
        %v1557 = vsub.f32 %v1512, %v1529
        %v1558 = vsub.f32 %v1516, %v1525
        %v1559 = vsub.f32 %v1516, %v1529
        %v1560 = vsub.f32 %v1520, %v1525
        %v1561 = vsub.f32 %v1520, %v1529
        %v1562 = vand.u32 2147483647, %v1530
        %v1563 = vand.u32 2147483647, %v1531
        %v1564 = vand.u32 2147483647, %v1532
        %v1565 = vand.u32 2147483647, %v1533
        %v1566 = vand.u32 2147483647, %v1534
        %v1567 = vand.u32 2147483647, %v1535
        %v1568 = vand.u32 2147483647, %v1536
        %v1569 = vand.u32 2147483647, %v1537
        %v1570 = vand.u32 2147483647, %v1538
        %v1571 = vand.u32 2147483647, %v1539
        %v1572 = vand.u32 2147483647, %v1540
        %v1573 = vand.u32 2147483647, %v1541
        %v1574 = vand.u32 2147483647, %v1542
        %v1575 = vand.u32 2147483647, %v1543
        %v1576 = vand.u32 2147483647, %v1544
        %v1577 = vand.u32 2147483647, %v1545
        %v1578 = vand.u32 2147483647, %v1546
        %v1579 = vand.u32 2147483647, %v1547
        %v1580 = vand.u32 2147483647, %v1548
        %v1581 = vand.u32 2147483647, %v1549
        %v1582 = vand.u32 2147483647, %v1550
        %v1583 = vand.u32 2147483647, %v1551
        %v1584 = vand.u32 2147483647, %v1552
        %v1585 = vand.u32 2147483647, %v1553
        %v1586 = vand.u32 2147483647, %v1554
        %v1587 = vand.u32 2147483647, %v1555
        %v1588 = vand.u32 2147483647, %v1556
        %v1589 = vand.u32 2147483647, %v1557
        %v1590 = vand.u32 2147483647, %v1558
        %v1591 = vand.u32 2147483647, %v1559
        %v1592 = vand.u32 2147483647, %v1560
        %v1593 = vand.u32 2147483647, %v1561
        %v1594 = vstv %s1457
        %v1595 = vmul.f32 %v1594, %v1562
        %v1596 = vmul.f32 %v1594, %v1563
        %v1597 = vmul.f32 %v1594, %v1564
        %v1598 = vmul.f32 %v1594, %v1565
        %v1599 = vmul.f32 %v1594, %v1566
        %v1600 = vmul.f32 %v1594, %v1567
        %v1601 = vmul.f32 %v1594, %v1568
        %v1602 = vmul.f32 %v1594, %v1569
        %v1603 = vmul.f32 %v1594, %v1570
        %v1604 = vmul.f32 %v1594, %v1571
        %v1605 = vmul.f32 %v1594, %v1572
        %v1606 = vmul.f32 %v1594, %v1573
        %v1607 = vmul.f32 %v1594, %v1574
        %v1608 = vmul.f32 %v1594, %v1575
        %v1609 = vmul.f32 %v1594, %v1576
        %v1610 = vmul.f32 %v1594, %v1577
        %v1611 = vmul.f32 %v1594, %v1578
        %v1612 = vmul.f32 %v1594, %v1579
        %v1613 = vmul.f32 %v1594, %v1580
        %v1614 = vmul.f32 %v1594, %v1581
        %v1615 = vmul.f32 %v1594, %v1582
        %v1616 = vmul.f32 %v1594, %v1583
        %v1617 = vmul.f32 %v1594, %v1584
        %v1618 = vmul.f32 %v1594, %v1585
        %v1619 = vmul.f32 %v1594, %v1586
        %v1620 = vmul.f32 %v1594, %v1587
        %v1621 = vmul.f32 %v1594, %v1588
        %v1622 = vmul.f32 %v1594, %v1589
        %v1623 = vmul.f32 %v1594, %v1590
        %v1624 = vmul.f32 %v1594, %v1591
        %v1625 = vmul.f32 %v1594, %v1592
        %v1626 = vmul.f32 %v1594, %v1593
        %v1627 = vadd.f32 %v1425, %v1595
        %v1628 = vadd.f32 %v1426, %v1596
        %v1629 = vadd.f32 %v1427, %v1597
        %v1630 = vadd.f32 %v1428, %v1598
        %v1631 = vadd.f32 %v1429, %v1599
        %v1632 = vadd.f32 %v1430, %v1600
        %v1633 = vadd.f32 %v1431, %v1601
        %v1634 = vadd.f32 %v1432, %v1602
        %v1635 = vadd.f32 %v1433, %v1603
        %v1636 = vadd.f32 %v1434, %v1604
        %v1637 = vadd.f32 %v1435, %v1605
        %v1638 = vadd.f32 %v1436, %v1606
        %v1639 = vadd.f32 %v1437, %v1607
        %v1640 = vadd.f32 %v1438, %v1608
        %v1641 = vadd.f32 %v1439, %v1609
        %v1642 = vadd.f32 %v1440, %v1610
        %v1643 = vadd.f32 %v1441, %v1611
        %v1644 = vadd.f32 %v1442, %v1612
        %v1645 = vadd.f32 %v1443, %v1613
        %v1646 = vadd.f32 %v1444, %v1614
        %v1647 = vadd.f32 %v1445, %v1615
        %v1648 = vadd.f32 %v1446, %v1616
        %v1649 = vadd.f32 %v1447, %v1617
        %v1650 = vadd.f32 %v1448, %v1618
        %v1651 = vadd.f32 %v1449, %v1619
        %v1652 = vadd.f32 %v1450, %v1620
        %v1653 = vadd.f32 %v1451, %v1621
        %v1654 = vadd.f32 %v1452, %v1622
        %v1655 = vadd.f32 %v1453, %v1623
        %v1656 = vadd.f32 %v1454, %v1624
        %v1657 = vadd.f32 %v1455, %v1625
        %v1658 = vadd.f32 %v1456, %v1626
        %s1659 = sld [smem:[#allocation12 + $0x6]]
        %1660 = vset.pattern.permute.xlu0 6
        %1661 = vperm.xlu0 %1660, %v411
        %v1662 = vpop.permute.xlu0 %1661
        %1664 = vset.pattern.permute.xlu0 6
        %1665 = vperm.xlu0 %1664, %v412
        %v1666 = vpop.permute.xlu0 %1665
        %1668 = vset.pattern.permute.xlu0 6
        %1669 = vperm.xlu0 %1668, %v413
        %v1670 = vpop.permute.xlu0 %1669
        %1672 = vset.pattern.permute.xlu0 6
        %1673 = vperm.xlu0 %1672, %v414
        %v1674 = vpop.permute.xlu0 %1673
        %1676 = vset.pattern.permute.xlu0 6
        %1677 = vperm.xlu0 %1676, %v415
        %v1678 = vpop.permute.xlu0 %1677
        %1680 = vset.pattern.permute.xlu0 6
        %1681 = vperm.xlu0 %1680, %v416
        %v1682 = vpop.permute.xlu0 %1681
        %1684 = vset.pattern.permute.xlu0 6
        %1685 = vperm.xlu0 %1684, %v417
        %v1686 = vpop.permute.xlu0 %1685
        %1688 = vset.pattern.permute.xlu0 6
        %1689 = vperm.xlu0 %1688, %v418
        %v1690 = vpop.permute.xlu0 %1689
        %1692 = vset.pattern.permute.xlu0 6
        %1693 = vperm.xlu0 %1692, %v419
        %v1694 = vpop.permute.xlu0 %1693
        %1696 = vset.pattern.permute.xlu0 6
        %1697 = vperm.xlu0 %1696, %v420
        %v1698 = vpop.permute.xlu0 %1697
        %1700 = vset.pattern.permute.xlu0 6
        %1701 = vperm.xlu0 %1700, %v421
        %v1702 = vpop.permute.xlu0 %1701
        %1704 = vset.pattern.permute.xlu0 6
        %1705 = vperm.xlu0 %1704, %v422
        %v1706 = vpop.permute.xlu0 %1705
        %1708 = vset.pattern.permute.xlu0 6
        %1709 = vperm.xlu0 %1708, %v423
        %v1710 = vpop.permute.xlu0 %1709
        %1712 = vset.pattern.permute.xlu0 6
        %1713 = vperm.xlu0 %1712, %v424
        %v1714 = vpop.permute.xlu0 %1713
        %1716 = vset.pattern.permute.xlu0 6
        %1717 = vperm.xlu0 %1716, %v425
        %v1718 = vpop.permute.xlu0 %1717
        %1720 = vset.pattern.permute.xlu0 6
        %1721 = vperm.xlu0 %1720, %v426
        %v1722 = vpop.permute.xlu0 %1721
        %v1724 = vlaneseq
        %v1725 = vshrl.u32 %v1724, 7
        %v1726 = vsub.s32 6, %v1725
        %v1727 = vrot.slane %v427, %v1726
        %v1728 = vlaneseq
        %v1729 = vshrl.u32 %v1728, 7
        %v1730 = vsub.s32 6, %v1729
        %v1731 = vrot.slane %v428, %v1730
        %v1732 = vsub.f32 %v1662, %v1727
        %v1733 = vsub.f32 %v1662, %v1731
        %v1734 = vsub.f32 %v1666, %v1727
        %v1735 = vsub.f32 %v1666, %v1731
        %v1736 = vsub.f32 %v1670, %v1727
        %v1737 = vsub.f32 %v1670, %v1731
        %v1738 = vsub.f32 %v1674, %v1727
        %v1739 = vsub.f32 %v1674, %v1731
        %v1740 = vsub.f32 %v1678, %v1727
        %v1741 = vsub.f32 %v1678, %v1731
        %v1742 = vsub.f32 %v1682, %v1727
        %v1743 = vsub.f32 %v1682, %v1731
        %v1744 = vsub.f32 %v1686, %v1727
        %v1745 = vsub.f32 %v1686, %v1731
        %v1746 = vsub.f32 %v1690, %v1727
        %v1747 = vsub.f32 %v1690, %v1731
        %v1748 = vsub.f32 %v1694, %v1727
        %v1749 = vsub.f32 %v1694, %v1731
        %v1750 = vsub.f32 %v1698, %v1727
        %v1751 = vsub.f32 %v1698, %v1731
        %v1752 = vsub.f32 %v1702, %v1727
        %v1753 = vsub.f32 %v1702, %v1731
        %v1754 = vsub.f32 %v1706, %v1727
        %v1755 = vsub.f32 %v1706, %v1731
        %v1756 = vsub.f32 %v1710, %v1727
        %v1757 = vsub.f32 %v1710, %v1731
        %v1758 = vsub.f32 %v1714, %v1727
        %v1759 = vsub.f32 %v1714, %v1731
        %v1760 = vsub.f32 %v1718, %v1727
        %v1761 = vsub.f32 %v1718, %v1731
        %v1762 = vsub.f32 %v1722, %v1727
        %v1763 = vsub.f32 %v1722, %v1731
        %v1764 = vand.u32 2147483647, %v1732
        %v1765 = vand.u32 2147483647, %v1733
        %v1766 = vand.u32 2147483647, %v1734
        %v1767 = vand.u32 2147483647, %v1735
        %v1768 = vand.u32 2147483647, %v1736
        %v1769 = vand.u32 2147483647, %v1737
        %v1770 = vand.u32 2147483647, %v1738
        %v1771 = vand.u32 2147483647, %v1739
        %v1772 = vand.u32 2147483647, %v1740
        %v1773 = vand.u32 2147483647, %v1741
        %v1774 = vand.u32 2147483647, %v1742
        %v1775 = vand.u32 2147483647, %v1743
        %v1776 = vand.u32 2147483647, %v1744
        %v1777 = vand.u32 2147483647, %v1745
        %v1778 = vand.u32 2147483647, %v1746
        %v1779 = vand.u32 2147483647, %v1747
        %v1780 = vand.u32 2147483647, %v1748
        %v1781 = vand.u32 2147483647, %v1749
        %v1782 = vand.u32 2147483647, %v1750
        %v1783 = vand.u32 2147483647, %v1751
        %v1784 = vand.u32 2147483647, %v1752
        %v1785 = vand.u32 2147483647, %v1753
        %v1786 = vand.u32 2147483647, %v1754
        %v1787 = vand.u32 2147483647, %v1755
        %v1788 = vand.u32 2147483647, %v1756
        %v1789 = vand.u32 2147483647, %v1757
        %v1790 = vand.u32 2147483647, %v1758
        %v1791 = vand.u32 2147483647, %v1759
        %v1792 = vand.u32 2147483647, %v1760
        %v1793 = vand.u32 2147483647, %v1761
        %v1794 = vand.u32 2147483647, %v1762
        %v1795 = vand.u32 2147483647, %v1763
        %v1796 = vstv %s1659
        %v1797 = vmul.f32 %v1796, %v1764
        %v1798 = vmul.f32 %v1796, %v1765
        %v1799 = vmul.f32 %v1796, %v1766
        %v1800 = vmul.f32 %v1796, %v1767
        %v1801 = vmul.f32 %v1796, %v1768
        %v1802 = vmul.f32 %v1796, %v1769
        %v1803 = vmul.f32 %v1796, %v1770
        %v1804 = vmul.f32 %v1796, %v1771
        %v1805 = vmul.f32 %v1796, %v1772
        %v1806 = vmul.f32 %v1796, %v1773
        %v1807 = vmul.f32 %v1796, %v1774
        %v1808 = vmul.f32 %v1796, %v1775
        %v1809 = vmul.f32 %v1796, %v1776
        %v1810 = vmul.f32 %v1796, %v1777
        %v1811 = vmul.f32 %v1796, %v1778
        %v1812 = vmul.f32 %v1796, %v1779
        %v1813 = vmul.f32 %v1796, %v1780
        %v1814 = vmul.f32 %v1796, %v1781
        %v1815 = vmul.f32 %v1796, %v1782
        %v1816 = vmul.f32 %v1796, %v1783
        %v1817 = vmul.f32 %v1796, %v1784
        %v1818 = vmul.f32 %v1796, %v1785
        %v1819 = vmul.f32 %v1796, %v1786
        %v1820 = vmul.f32 %v1796, %v1787
        %v1821 = vmul.f32 %v1796, %v1788
        %v1822 = vmul.f32 %v1796, %v1789
        %v1823 = vmul.f32 %v1796, %v1790
        %v1824 = vmul.f32 %v1796, %v1791
        %v1825 = vmul.f32 %v1796, %v1792
        %v1826 = vmul.f32 %v1796, %v1793
        %v1827 = vmul.f32 %v1796, %v1794
        %v1828 = vmul.f32 %v1796, %v1795
        %v1829 = vadd.f32 %v1627, %v1797
        %v1830 = vadd.f32 %v1628, %v1798
        %v1831 = vadd.f32 %v1629, %v1799
        %v1832 = vadd.f32 %v1630, %v1800
        %v1833 = vadd.f32 %v1631, %v1801
        %v1834 = vadd.f32 %v1632, %v1802
        %v1835 = vadd.f32 %v1633, %v1803
        %v1836 = vadd.f32 %v1634, %v1804
        %v1837 = vadd.f32 %v1635, %v1805
        %v1838 = vadd.f32 %v1636, %v1806
        %v1839 = vadd.f32 %v1637, %v1807
        %v1840 = vadd.f32 %v1638, %v1808
        %v1841 = vadd.f32 %v1639, %v1809
        %v1842 = vadd.f32 %v1640, %v1810
        %v1843 = vadd.f32 %v1641, %v1811
        %v1844 = vadd.f32 %v1642, %v1812
        %v1845 = vadd.f32 %v1643, %v1813
        %v1846 = vadd.f32 %v1644, %v1814
        %v1847 = vadd.f32 %v1645, %v1815
        %v1848 = vadd.f32 %v1646, %v1816
        %v1849 = vadd.f32 %v1647, %v1817
        %v1850 = vadd.f32 %v1648, %v1818
        %v1851 = vadd.f32 %v1649, %v1819
        %v1852 = vadd.f32 %v1650, %v1820
        %v1853 = vadd.f32 %v1651, %v1821
        %v1854 = vadd.f32 %v1652, %v1822
        %v1855 = vadd.f32 %v1653, %v1823
        %v1856 = vadd.f32 %v1654, %v1824
        %v1857 = vadd.f32 %v1655, %v1825
        %v1858 = vadd.f32 %v1656, %v1826
        %v1859 = vadd.f32 %v1657, %v1827
        %v1860 = vadd.f32 %v1658, %v1828
        %s1861 = sld [smem:[#allocation12 + $0x7]]
        %1862 = vset.pattern.permute.xlu0 7
        %1863 = vperm.xlu0 %1862, %v411
        %v1864 = vpop.permute.xlu0 %1863
        %1866 = vset.pattern.permute.xlu0 7
        %1867 = vperm.xlu0 %1866, %v412
        %v1868 = vpop.permute.xlu0 %1867
        %1870 = vset.pattern.permute.xlu0 7
        %1871 = vperm.xlu0 %1870, %v413
        %v1872 = vpop.permute.xlu0 %1871
        %1874 = vset.pattern.permute.xlu0 7
        %1875 = vperm.xlu0 %1874, %v414
        %v1876 = vpop.permute.xlu0 %1875
        %1878 = vset.pattern.permute.xlu0 7
        %1879 = vperm.xlu0 %1878, %v415
        %v1880 = vpop.permute.xlu0 %1879
        %1882 = vset.pattern.permute.xlu0 7
        %1883 = vperm.xlu0 %1882, %v416
        %v1884 = vpop.permute.xlu0 %1883
        %1886 = vset.pattern.permute.xlu0 7
        %1887 = vperm.xlu0 %1886, %v417
        %v1888 = vpop.permute.xlu0 %1887
        %1890 = vset.pattern.permute.xlu0 7
        %1891 = vperm.xlu0 %1890, %v418
        %v1892 = vpop.permute.xlu0 %1891
        %1894 = vset.pattern.permute.xlu0 7
        %1895 = vperm.xlu0 %1894, %v419
        %v1896 = vpop.permute.xlu0 %1895
        %1898 = vset.pattern.permute.xlu0 7
        %1899 = vperm.xlu0 %1898, %v420
        %v1900 = vpop.permute.xlu0 %1899
        %1902 = vset.pattern.permute.xlu0 7
        %1903 = vperm.xlu0 %1902, %v421
        %v1904 = vpop.permute.xlu0 %1903
        %1906 = vset.pattern.permute.xlu0 7
        %1907 = vperm.xlu0 %1906, %v422
        %v1908 = vpop.permute.xlu0 %1907
        %1910 = vset.pattern.permute.xlu0 7
        %1911 = vperm.xlu0 %1910, %v423
        %v1912 = vpop.permute.xlu0 %1911
        %1914 = vset.pattern.permute.xlu0 7
        %1915 = vperm.xlu0 %1914, %v424
        %v1916 = vpop.permute.xlu0 %1915
        %1918 = vset.pattern.permute.xlu0 7
        %1919 = vperm.xlu0 %1918, %v425
        %v1920 = vpop.permute.xlu0 %1919
        %1922 = vset.pattern.permute.xlu0 7
        %1923 = vperm.xlu0 %1922, %v426
        %v1924 = vpop.permute.xlu0 %1923
        %v1926 = vlaneseq
        %v1927 = vshrl.u32 %v1926, 7
        %v1928 = vsub.s32 7, %v1927
        %v1929 = vrot.slane %v427, %v1928
        %v1930 = vlaneseq
        %v1931 = vshrl.u32 %v1930, 7
        %v1932 = vsub.s32 7, %v1931
        %v1933 = vrot.slane %v428, %v1932
        %v1934 = vsub.f32 %v1864, %v1929
        %v1935 = vsub.f32 %v1864, %v1933
        %v1936 = vsub.f32 %v1868, %v1929
        %v1937 = vsub.f32 %v1868, %v1933
        %v1938 = vsub.f32 %v1872, %v1929
        %v1939 = vsub.f32 %v1872, %v1933
        %v1940 = vsub.f32 %v1876, %v1929
        %v1941 = vsub.f32 %v1876, %v1933
        %v1942 = vsub.f32 %v1880, %v1929
        %v1943 = vsub.f32 %v1880, %v1933
        %v1944 = vsub.f32 %v1884, %v1929
        %v1945 = vsub.f32 %v1884, %v1933
        %v1946 = vsub.f32 %v1888, %v1929
        %v1947 = vsub.f32 %v1888, %v1933
        %v1948 = vsub.f32 %v1892, %v1929
        %v1949 = vsub.f32 %v1892, %v1933
        %v1950 = vsub.f32 %v1896, %v1929
        %v1951 = vsub.f32 %v1896, %v1933
        %v1952 = vsub.f32 %v1900, %v1929
        %v1953 = vsub.f32 %v1900, %v1933
        %v1954 = vsub.f32 %v1904, %v1929
        %v1955 = vsub.f32 %v1904, %v1933
        %v1956 = vsub.f32 %v1908, %v1929
        %v1957 = vsub.f32 %v1908, %v1933
        %v1958 = vsub.f32 %v1912, %v1929
        %v1959 = vsub.f32 %v1912, %v1933
        %v1960 = vsub.f32 %v1916, %v1929
        %v1961 = vsub.f32 %v1916, %v1933
        %v1962 = vsub.f32 %v1920, %v1929
        %v1963 = vsub.f32 %v1920, %v1933
        %v1964 = vsub.f32 %v1924, %v1929
        %v1965 = vsub.f32 %v1924, %v1933
        %v1966 = vand.u32 2147483647, %v1934
        %v1967 = vand.u32 2147483647, %v1935
        %v1968 = vand.u32 2147483647, %v1936
        %v1969 = vand.u32 2147483647, %v1937
        %v1970 = vand.u32 2147483647, %v1938
        %v1971 = vand.u32 2147483647, %v1939
        %v1972 = vand.u32 2147483647, %v1940
        %v1973 = vand.u32 2147483647, %v1941
        %v1974 = vand.u32 2147483647, %v1942
        %v1975 = vand.u32 2147483647, %v1943
        %v1976 = vand.u32 2147483647, %v1944
        %v1977 = vand.u32 2147483647, %v1945
        %v1978 = vand.u32 2147483647, %v1946
        %v1979 = vand.u32 2147483647, %v1947
        %v1980 = vand.u32 2147483647, %v1948
        %v1981 = vand.u32 2147483647, %v1949
        %v1982 = vand.u32 2147483647, %v1950
        %v1983 = vand.u32 2147483647, %v1951
        %v1984 = vand.u32 2147483647, %v1952
        %v1985 = vand.u32 2147483647, %v1953
        %v1986 = vand.u32 2147483647, %v1954
        %v1987 = vand.u32 2147483647, %v1955
        %v1988 = vand.u32 2147483647, %v1956
        %v1989 = vand.u32 2147483647, %v1957
        %v1990 = vand.u32 2147483647, %v1958
        %v1991 = vand.u32 2147483647, %v1959
        %v1992 = vand.u32 2147483647, %v1960
        %v1993 = vand.u32 2147483647, %v1961
        %v1994 = vand.u32 2147483647, %v1962
        %v1995 = vand.u32 2147483647, %v1963
        %v1996 = vand.u32 2147483647, %v1964
        %v1997 = vand.u32 2147483647, %v1965
        %v1998 = vstv %s1861
        %v1999 = vmul.f32 %v1998, %v1966
        %v2000 = vmul.f32 %v1998, %v1967
        %v2001 = vmul.f32 %v1998, %v1968
        %v2002 = vmul.f32 %v1998, %v1969
        %v2003 = vmul.f32 %v1998, %v1970
        %v2004 = vmul.f32 %v1998, %v1971
        %v2005 = vmul.f32 %v1998, %v1972
        %v2006 = vmul.f32 %v1998, %v1973
        %v2007 = vmul.f32 %v1998, %v1974
        %v2008 = vmul.f32 %v1998, %v1975
        %v2009 = vmul.f32 %v1998, %v1976
        %v2010 = vmul.f32 %v1998, %v1977
        %v2011 = vmul.f32 %v1998, %v1978
        %v2012 = vmul.f32 %v1998, %v1979
        %v2013 = vmul.f32 %v1998, %v1980
        %v2014 = vmul.f32 %v1998, %v1981
        %v2015 = vmul.f32 %v1998, %v1982
        %v2016 = vmul.f32 %v1998, %v1983
        %v2017 = vmul.f32 %v1998, %v1984
        %v2018 = vmul.f32 %v1998, %v1985
        %v2019 = vmul.f32 %v1998, %v1986
        %v2020 = vmul.f32 %v1998, %v1987
        %v2021 = vmul.f32 %v1998, %v1988
        %v2022 = vmul.f32 %v1998, %v1989
        %v2023 = vmul.f32 %v1998, %v1990
        %v2024 = vmul.f32 %v1998, %v1991
        %v2025 = vmul.f32 %v1998, %v1992
        %v2026 = vmul.f32 %v1998, %v1993
        %v2027 = vmul.f32 %v1998, %v1994
        %v2028 = vmul.f32 %v1998, %v1995
        %v2029 = vmul.f32 %v1998, %v1996
        %v2030 = vmul.f32 %v1998, %v1997
        %v2031 = vadd.f32 %v1829, %v1999
        %v2032 = vadd.f32 %v1830, %v2000
        %v2033 = vadd.f32 %v1831, %v2001
        %v2034 = vadd.f32 %v1832, %v2002
        %v2035 = vadd.f32 %v1833, %v2003
        %v2036 = vadd.f32 %v1834, %v2004
        %v2037 = vadd.f32 %v1835, %v2005
        %v2038 = vadd.f32 %v1836, %v2006
        %v2039 = vadd.f32 %v1837, %v2007
        %v2040 = vadd.f32 %v1838, %v2008
        %v2041 = vadd.f32 %v1839, %v2009
        %v2042 = vadd.f32 %v1840, %v2010
        %v2043 = vadd.f32 %v1841, %v2011
        %v2044 = vadd.f32 %v1842, %v2012
        %v2045 = vadd.f32 %v1843, %v2013
        %v2046 = vadd.f32 %v1844, %v2014
        %v2047 = vadd.f32 %v1845, %v2015
        %v2048 = vadd.f32 %v1846, %v2016
        %v2049 = vadd.f32 %v1847, %v2017
        %v2050 = vadd.f32 %v1848, %v2018
        %v2051 = vadd.f32 %v1849, %v2019
        %v2052 = vadd.f32 %v1850, %v2020
        %v2053 = vadd.f32 %v1851, %v2021
        %v2054 = vadd.f32 %v1852, %v2022
        %v2055 = vadd.f32 %v1853, %v2023
        %v2056 = vadd.f32 %v1854, %v2024
        %v2057 = vadd.f32 %v1855, %v2025
        %v2058 = vadd.f32 %v1856, %v2026
        %v2059 = vadd.f32 %v1857, %v2027
        %v2060 = vadd.f32 %v1858, %v2028
        %v2061 = vadd.f32 %v1859, %v2029
        %v2062 = vadd.f32 %v1860, %v2030
        %s2063 = sld [smem:[#allocation12 + $0x8]]
        %2064 = vset.pattern.permute.xlu0 8
        %2065 = vperm.xlu0 %2064, %v411
        %v2066 = vpop.permute.xlu0 %2065
        %2068 = vset.pattern.permute.xlu0 8
        %2069 = vperm.xlu0 %2068, %v412
        %v2070 = vpop.permute.xlu0 %2069
        %2072 = vset.pattern.permute.xlu0 8
        %2073 = vperm.xlu0 %2072, %v413
        %v2074 = vpop.permute.xlu0 %2073
        %2076 = vset.pattern.permute.xlu0 8
        %2077 = vperm.xlu0 %2076, %v414
        %v2078 = vpop.permute.xlu0 %2077
        %2080 = vset.pattern.permute.xlu0 8
        %2081 = vperm.xlu0 %2080, %v415
        %v2082 = vpop.permute.xlu0 %2081
        %2084 = vset.pattern.permute.xlu0 8
        %2085 = vperm.xlu0 %2084, %v416
        %v2086 = vpop.permute.xlu0 %2085
        %2088 = vset.pattern.permute.xlu0 8
        %2089 = vperm.xlu0 %2088, %v417
        %v2090 = vpop.permute.xlu0 %2089
        %2092 = vset.pattern.permute.xlu0 8
        %2093 = vperm.xlu0 %2092, %v418
        %v2094 = vpop.permute.xlu0 %2093
        %2096 = vset.pattern.permute.xlu0 8
        %2097 = vperm.xlu0 %2096, %v419
        %v2098 = vpop.permute.xlu0 %2097
        %2100 = vset.pattern.permute.xlu0 8
        %2101 = vperm.xlu0 %2100, %v420
        %v2102 = vpop.permute.xlu0 %2101
        %2104 = vset.pattern.permute.xlu0 8
        %2105 = vperm.xlu0 %2104, %v421
        %v2106 = vpop.permute.xlu0 %2105
        %2108 = vset.pattern.permute.xlu0 8
        %2109 = vperm.xlu0 %2108, %v422
        %v2110 = vpop.permute.xlu0 %2109
        %2112 = vset.pattern.permute.xlu0 8
        %2113 = vperm.xlu0 %2112, %v423
        %v2114 = vpop.permute.xlu0 %2113
        %2116 = vset.pattern.permute.xlu0 8
        %2117 = vperm.xlu0 %2116, %v424
        %v2118 = vpop.permute.xlu0 %2117
        %2120 = vset.pattern.permute.xlu0 8
        %2121 = vperm.xlu0 %2120, %v425
        %v2122 = vpop.permute.xlu0 %2121
        %2124 = vset.pattern.permute.xlu0 8
        %2125 = vperm.xlu0 %2124, %v426
        %v2126 = vpop.permute.xlu0 %2125
        %v2128 = vlaneseq
        %v2129 = vshrl.u32 %v2128, 7
        %v2130 = vsub.s32 0, %v2129
        %v2131 = vrot.slane %v429, %v2130
        %v2132 = vlaneseq
        %v2133 = vshrl.u32 %v2132, 7
        %v2134 = vsub.s32 0, %v2133
        %v2135 = vrot.slane %v430, %v2134
        %v2136 = vsub.f32 %v2066, %v2131
        %v2137 = vsub.f32 %v2066, %v2135
        %v2138 = vsub.f32 %v2070, %v2131
        %v2139 = vsub.f32 %v2070, %v2135
        %v2140 = vsub.f32 %v2074, %v2131
        %v2141 = vsub.f32 %v2074, %v2135
        %v2142 = vsub.f32 %v2078, %v2131
        %v2143 = vsub.f32 %v2078, %v2135
        %v2144 = vsub.f32 %v2082, %v2131
        %v2145 = vsub.f32 %v2082, %v2135
        %v2146 = vsub.f32 %v2086, %v2131
        %v2147 = vsub.f32 %v2086, %v2135
        %v2148 = vsub.f32 %v2090, %v2131
        %v2149 = vsub.f32 %v2090, %v2135
        %v2150 = vsub.f32 %v2094, %v2131
        %v2151 = vsub.f32 %v2094, %v2135
        %v2152 = vsub.f32 %v2098, %v2131
        %v2153 = vsub.f32 %v2098, %v2135
        %v2154 = vsub.f32 %v2102, %v2131
        %v2155 = vsub.f32 %v2102, %v2135
        %v2156 = vsub.f32 %v2106, %v2131
        %v2157 = vsub.f32 %v2106, %v2135
        %v2158 = vsub.f32 %v2110, %v2131
        %v2159 = vsub.f32 %v2110, %v2135
        %v2160 = vsub.f32 %v2114, %v2131
        %v2161 = vsub.f32 %v2114, %v2135
        %v2162 = vsub.f32 %v2118, %v2131
        %v2163 = vsub.f32 %v2118, %v2135
        %v2164 = vsub.f32 %v2122, %v2131
        %v2165 = vsub.f32 %v2122, %v2135
        %v2166 = vsub.f32 %v2126, %v2131
        %v2167 = vsub.f32 %v2126, %v2135
        %v2168 = vand.u32 2147483647, %v2136
        %v2169 = vand.u32 2147483647, %v2137
        %v2170 = vand.u32 2147483647, %v2138
        %v2171 = vand.u32 2147483647, %v2139
        %v2172 = vand.u32 2147483647, %v2140
        %v2173 = vand.u32 2147483647, %v2141
        %v2174 = vand.u32 2147483647, %v2142
        %v2175 = vand.u32 2147483647, %v2143
        %v2176 = vand.u32 2147483647, %v2144
        %v2177 = vand.u32 2147483647, %v2145
        %v2178 = vand.u32 2147483647, %v2146
        %v2179 = vand.u32 2147483647, %v2147
        %v2180 = vand.u32 2147483647, %v2148
        %v2181 = vand.u32 2147483647, %v2149
        %v2182 = vand.u32 2147483647, %v2150
        %v2183 = vand.u32 2147483647, %v2151
        %v2184 = vand.u32 2147483647, %v2152
        %v2185 = vand.u32 2147483647, %v2153
        %v2186 = vand.u32 2147483647, %v2154
        %v2187 = vand.u32 2147483647, %v2155
        %v2188 = vand.u32 2147483647, %v2156
        %v2189 = vand.u32 2147483647, %v2157
        %v2190 = vand.u32 2147483647, %v2158
        %v2191 = vand.u32 2147483647, %v2159
        %v2192 = vand.u32 2147483647, %v2160
        %v2193 = vand.u32 2147483647, %v2161
        %v2194 = vand.u32 2147483647, %v2162
        %v2195 = vand.u32 2147483647, %v2163
        %v2196 = vand.u32 2147483647, %v2164
        %v2197 = vand.u32 2147483647, %v2165
        %v2198 = vand.u32 2147483647, %v2166
        %v2199 = vand.u32 2147483647, %v2167
        %v2200 = vstv %s2063
        %v2201 = vmul.f32 %v2200, %v2168
        %v2202 = vmul.f32 %v2200, %v2169
        %v2203 = vmul.f32 %v2200, %v2170
        %v2204 = vmul.f32 %v2200, %v2171
        %v2205 = vmul.f32 %v2200, %v2172
        %v2206 = vmul.f32 %v2200, %v2173
        %v2207 = vmul.f32 %v2200, %v2174
        %v2208 = vmul.f32 %v2200, %v2175
        %v2209 = vmul.f32 %v2200, %v2176
        %v2210 = vmul.f32 %v2200, %v2177
        %v2211 = vmul.f32 %v2200, %v2178
        %v2212 = vmul.f32 %v2200, %v2179
        %v2213 = vmul.f32 %v2200, %v2180
        %v2214 = vmul.f32 %v2200, %v2181
        %v2215 = vmul.f32 %v2200, %v2182
        %v2216 = vmul.f32 %v2200, %v2183
        %v2217 = vmul.f32 %v2200, %v2184
        %v2218 = vmul.f32 %v2200, %v2185
        %v2219 = vmul.f32 %v2200, %v2186
        %v2220 = vmul.f32 %v2200, %v2187
        %v2221 = vmul.f32 %v2200, %v2188
        %v2222 = vmul.f32 %v2200, %v2189
        %v2223 = vmul.f32 %v2200, %v2190
        %v2224 = vmul.f32 %v2200, %v2191
        %v2225 = vmul.f32 %v2200, %v2192
        %v2226 = vmul.f32 %v2200, %v2193
        %v2227 = vmul.f32 %v2200, %v2194
        %v2228 = vmul.f32 %v2200, %v2195
        %v2229 = vmul.f32 %v2200, %v2196
        %v2230 = vmul.f32 %v2200, %v2197
        %v2231 = vmul.f32 %v2200, %v2198
        %v2232 = vmul.f32 %v2200, %v2199
        %v2233 = vadd.f32 %v2031, %v2201
        %v2234 = vadd.f32 %v2032, %v2202
        %v2235 = vadd.f32 %v2033, %v2203
        %v2236 = vadd.f32 %v2034, %v2204
        %v2237 = vadd.f32 %v2035, %v2205
        %v2238 = vadd.f32 %v2036, %v2206
        %v2239 = vadd.f32 %v2037, %v2207
        %v2240 = vadd.f32 %v2038, %v2208
        %v2241 = vadd.f32 %v2039, %v2209
        %v2242 = vadd.f32 %v2040, %v2210
        %v2243 = vadd.f32 %v2041, %v2211
        %v2244 = vadd.f32 %v2042, %v2212
        %v2245 = vadd.f32 %v2043, %v2213
        %v2246 = vadd.f32 %v2044, %v2214
        %v2247 = vadd.f32 %v2045, %v2215
        %v2248 = vadd.f32 %v2046, %v2216
        %v2249 = vadd.f32 %v2047, %v2217
        %v2250 = vadd.f32 %v2048, %v2218
        %v2251 = vadd.f32 %v2049, %v2219
        %v2252 = vadd.f32 %v2050, %v2220
        %v2253 = vadd.f32 %v2051, %v2221
        %v2254 = vadd.f32 %v2052, %v2222
        %v2255 = vadd.f32 %v2053, %v2223
        %v2256 = vadd.f32 %v2054, %v2224
        %v2257 = vadd.f32 %v2055, %v2225
        %v2258 = vadd.f32 %v2056, %v2226
        %v2259 = vadd.f32 %v2057, %v2227
        %v2260 = vadd.f32 %v2058, %v2228
        %v2261 = vadd.f32 %v2059, %v2229
        %v2262 = vadd.f32 %v2060, %v2230
        %v2263 = vadd.f32 %v2061, %v2231
        %v2264 = vadd.f32 %v2062, %v2232
        %s2265 = sld [smem:[#allocation12 + $0x9]]
        %2266 = vset.pattern.permute.xlu0 9
        %2267 = vperm.xlu0 %2266, %v411
        %v2268 = vpop.permute.xlu0 %2267
        %2270 = vset.pattern.permute.xlu0 9
        %2271 = vperm.xlu0 %2270, %v412
        %v2272 = vpop.permute.xlu0 %2271
        %2274 = vset.pattern.permute.xlu0 9
        %2275 = vperm.xlu0 %2274, %v413
        %v2276 = vpop.permute.xlu0 %2275
        %2278 = vset.pattern.permute.xlu0 9
        %2279 = vperm.xlu0 %2278, %v414
        %v2280 = vpop.permute.xlu0 %2279
        %2282 = vset.pattern.permute.xlu0 9
        %2283 = vperm.xlu0 %2282, %v415
        %v2284 = vpop.permute.xlu0 %2283
        %2286 = vset.pattern.permute.xlu0 9
        %2287 = vperm.xlu0 %2286, %v416
        %v2288 = vpop.permute.xlu0 %2287
        %2290 = vset.pattern.permute.xlu0 9
        %2291 = vperm.xlu0 %2290, %v417
        %v2292 = vpop.permute.xlu0 %2291
        %2294 = vset.pattern.permute.xlu0 9
        %2295 = vperm.xlu0 %2294, %v418
        %v2296 = vpop.permute.xlu0 %2295
        %2298 = vset.pattern.permute.xlu0 9
        %2299 = vperm.xlu0 %2298, %v419
        %v2300 = vpop.permute.xlu0 %2299
        %2302 = vset.pattern.permute.xlu0 9
        %2303 = vperm.xlu0 %2302, %v420
        %v2304 = vpop.permute.xlu0 %2303
        %2306 = vset.pattern.permute.xlu0 9
        %2307 = vperm.xlu0 %2306, %v421
        %v2308 = vpop.permute.xlu0 %2307
        %2310 = vset.pattern.permute.xlu0 9
        %2311 = vperm.xlu0 %2310, %v422
        %v2312 = vpop.permute.xlu0 %2311
        %2314 = vset.pattern.permute.xlu0 9
        %2315 = vperm.xlu0 %2314, %v423
        %v2316 = vpop.permute.xlu0 %2315
        %2318 = vset.pattern.permute.xlu0 9
        %2319 = vperm.xlu0 %2318, %v424
        %v2320 = vpop.permute.xlu0 %2319
        %2322 = vset.pattern.permute.xlu0 9
        %2323 = vperm.xlu0 %2322, %v425
        %v2324 = vpop.permute.xlu0 %2323
        %2326 = vset.pattern.permute.xlu0 9
        %2327 = vperm.xlu0 %2326, %v426
        %v2328 = vpop.permute.xlu0 %2327
        %v2330 = vlaneseq
        %v2331 = vshrl.u32 %v2330, 7
        %v2332 = vsub.s32 1, %v2331
        %v2333 = vrot.slane %v429, %v2332
        %v2334 = vlaneseq
        %v2335 = vshrl.u32 %v2334, 7
        %v2336 = vsub.s32 1, %v2335
        %v2337 = vrot.slane %v430, %v2336
        %v2338 = vsub.f32 %v2268, %v2333
        %v2339 = vsub.f32 %v2268, %v2337
        %v2340 = vsub.f32 %v2272, %v2333
        %v2341 = vsub.f32 %v2272, %v2337
        %v2342 = vsub.f32 %v2276, %v2333
        %v2343 = vsub.f32 %v2276, %v2337
        %v2344 = vsub.f32 %v2280, %v2333
        %v2345 = vsub.f32 %v2280, %v2337
        %v2346 = vsub.f32 %v2284, %v2333
        %v2347 = vsub.f32 %v2284, %v2337
        %v2348 = vsub.f32 %v2288, %v2333
        %v2349 = vsub.f32 %v2288, %v2337
        %v2350 = vsub.f32 %v2292, %v2333
        %v2351 = vsub.f32 %v2292, %v2337
        %v2352 = vsub.f32 %v2296, %v2333
        %v2353 = vsub.f32 %v2296, %v2337
        %v2354 = vsub.f32 %v2300, %v2333
        %v2355 = vsub.f32 %v2300, %v2337
        %v2356 = vsub.f32 %v2304, %v2333
        %v2357 = vsub.f32 %v2304, %v2337
        %v2358 = vsub.f32 %v2308, %v2333
        %v2359 = vsub.f32 %v2308, %v2337
        %v2360 = vsub.f32 %v2312, %v2333
        %v2361 = vsub.f32 %v2312, %v2337
        %v2362 = vsub.f32 %v2316, %v2333
        %v2363 = vsub.f32 %v2316, %v2337
        %v2364 = vsub.f32 %v2320, %v2333
        %v2365 = vsub.f32 %v2320, %v2337
        %v2366 = vsub.f32 %v2324, %v2333
        %v2367 = vsub.f32 %v2324, %v2337
        %v2368 = vsub.f32 %v2328, %v2333
        %v2369 = vsub.f32 %v2328, %v2337
        %v2370 = vand.u32 2147483647, %v2338
        %v2371 = vand.u32 2147483647, %v2339
        %v2372 = vand.u32 2147483647, %v2340
        %v2373 = vand.u32 2147483647, %v2341
        %v2374 = vand.u32 2147483647, %v2342
        %v2375 = vand.u32 2147483647, %v2343
        %v2376 = vand.u32 2147483647, %v2344
        %v2377 = vand.u32 2147483647, %v2345
        %v2378 = vand.u32 2147483647, %v2346
        %v2379 = vand.u32 2147483647, %v2347
        %v2380 = vand.u32 2147483647, %v2348
        %v2381 = vand.u32 2147483647, %v2349
        %v2382 = vand.u32 2147483647, %v2350
        %v2383 = vand.u32 2147483647, %v2351
        %v2384 = vand.u32 2147483647, %v2352
        %v2385 = vand.u32 2147483647, %v2353
        %v2386 = vand.u32 2147483647, %v2354
        %v2387 = vand.u32 2147483647, %v2355
        %v2388 = vand.u32 2147483647, %v2356
        %v2389 = vand.u32 2147483647, %v2357
        %v2390 = vand.u32 2147483647, %v2358
        %v2391 = vand.u32 2147483647, %v2359
        %v2392 = vand.u32 2147483647, %v2360
        %v2393 = vand.u32 2147483647, %v2361
        %v2394 = vand.u32 2147483647, %v2362
        %v2395 = vand.u32 2147483647, %v2363
        %v2396 = vand.u32 2147483647, %v2364
        %v2397 = vand.u32 2147483647, %v2365
        %v2398 = vand.u32 2147483647, %v2366
        %v2399 = vand.u32 2147483647, %v2367
        %v2400 = vand.u32 2147483647, %v2368
        %v2401 = vand.u32 2147483647, %v2369
        %v2402 = vstv %s2265
        %v2403 = vmul.f32 %v2402, %v2370
        %v2404 = vmul.f32 %v2402, %v2371
        %v2405 = vmul.f32 %v2402, %v2372
        %v2406 = vmul.f32 %v2402, %v2373
        %v2407 = vmul.f32 %v2402, %v2374
        %v2408 = vmul.f32 %v2402, %v2375
        %v2409 = vmul.f32 %v2402, %v2376
        %v2410 = vmul.f32 %v2402, %v2377
        %v2411 = vmul.f32 %v2402, %v2378
        %v2412 = vmul.f32 %v2402, %v2379
        %v2413 = vmul.f32 %v2402, %v2380
        %v2414 = vmul.f32 %v2402, %v2381
        %v2415 = vmul.f32 %v2402, %v2382
        %v2416 = vmul.f32 %v2402, %v2383
        %v2417 = vmul.f32 %v2402, %v2384
        %v2418 = vmul.f32 %v2402, %v2385
        %v2419 = vmul.f32 %v2402, %v2386
        %v2420 = vmul.f32 %v2402, %v2387
        %v2421 = vmul.f32 %v2402, %v2388
        %v2422 = vmul.f32 %v2402, %v2389
        %v2423 = vmul.f32 %v2402, %v2390
        %v2424 = vmul.f32 %v2402, %v2391
        %v2425 = vmul.f32 %v2402, %v2392
        %v2426 = vmul.f32 %v2402, %v2393
        %v2427 = vmul.f32 %v2402, %v2394
        %v2428 = vmul.f32 %v2402, %v2395
        %v2429 = vmul.f32 %v2402, %v2396
        %v2430 = vmul.f32 %v2402, %v2397
        %v2431 = vmul.f32 %v2402, %v2398
        %v2432 = vmul.f32 %v2402, %v2399
        %v2433 = vmul.f32 %v2402, %v2400
        %v2434 = vmul.f32 %v2402, %v2401
        %v2435 = vadd.f32 %v2233, %v2403
        %v2436 = vadd.f32 %v2234, %v2404
        %v2437 = vadd.f32 %v2235, %v2405
        %v2438 = vadd.f32 %v2236, %v2406
        %v2439 = vadd.f32 %v2237, %v2407
        %v2440 = vadd.f32 %v2238, %v2408
        %v2441 = vadd.f32 %v2239, %v2409
        %v2442 = vadd.f32 %v2240, %v2410
        %v2443 = vadd.f32 %v2241, %v2411
        %v2444 = vadd.f32 %v2242, %v2412
        %v2445 = vadd.f32 %v2243, %v2413
        %v2446 = vadd.f32 %v2244, %v2414
        %v2447 = vadd.f32 %v2245, %v2415
        %v2448 = vadd.f32 %v2246, %v2416
        %v2449 = vadd.f32 %v2247, %v2417
        %v2450 = vadd.f32 %v2248, %v2418
        %v2451 = vadd.f32 %v2249, %v2419
        %v2452 = vadd.f32 %v2250, %v2420
        %v2453 = vadd.f32 %v2251, %v2421
        %v2454 = vadd.f32 %v2252, %v2422
        %v2455 = vadd.f32 %v2253, %v2423
        %v2456 = vadd.f32 %v2254, %v2424
        %v2457 = vadd.f32 %v2255, %v2425
        %v2458 = vadd.f32 %v2256, %v2426
        %v2459 = vadd.f32 %v2257, %v2427
        %v2460 = vadd.f32 %v2258, %v2428
        %v2461 = vadd.f32 %v2259, %v2429
        %v2462 = vadd.f32 %v2260, %v2430
        %v2463 = vadd.f32 %v2261, %v2431
        %v2464 = vadd.f32 %v2262, %v2432
        %v2465 = vadd.f32 %v2263, %v2433
        %v2466 = vadd.f32 %v2264, %v2434
        %s2467 = sld [smem:[#allocation12 + $0xa]]
        %2468 = vset.pattern.permute.xlu0 10
        %2469 = vperm.xlu0 %2468, %v411
        %v2470 = vpop.permute.xlu0 %2469
        %2472 = vset.pattern.permute.xlu0 10
        %2473 = vperm.xlu0 %2472, %v412
        %v2474 = vpop.permute.xlu0 %2473
        %2476 = vset.pattern.permute.xlu0 10
        %2477 = vperm.xlu0 %2476, %v413
        %v2478 = vpop.permute.xlu0 %2477
        %2480 = vset.pattern.permute.xlu0 10
        %2481 = vperm.xlu0 %2480, %v414
        %v2482 = vpop.permute.xlu0 %2481
        %2484 = vset.pattern.permute.xlu0 10
        %2485 = vperm.xlu0 %2484, %v415
        %v2486 = vpop.permute.xlu0 %2485
        %2488 = vset.pattern.permute.xlu0 10
        %2489 = vperm.xlu0 %2488, %v416
        %v2490 = vpop.permute.xlu0 %2489
        %2492 = vset.pattern.permute.xlu0 10
        %2493 = vperm.xlu0 %2492, %v417
        %v2494 = vpop.permute.xlu0 %2493
        %2496 = vset.pattern.permute.xlu0 10
        %2497 = vperm.xlu0 %2496, %v418
        %v2498 = vpop.permute.xlu0 %2497
        %2500 = vset.pattern.permute.xlu0 10
        %2501 = vperm.xlu0 %2500, %v419
        %v2502 = vpop.permute.xlu0 %2501
        %2504 = vset.pattern.permute.xlu0 10
        %2505 = vperm.xlu0 %2504, %v420
        %v2506 = vpop.permute.xlu0 %2505
        %2508 = vset.pattern.permute.xlu0 10
        %2509 = vperm.xlu0 %2508, %v421
        %v2510 = vpop.permute.xlu0 %2509
        %2512 = vset.pattern.permute.xlu0 10
        %2513 = vperm.xlu0 %2512, %v422
        %v2514 = vpop.permute.xlu0 %2513
        %2516 = vset.pattern.permute.xlu0 10
        %2517 = vperm.xlu0 %2516, %v423
        %v2518 = vpop.permute.xlu0 %2517
        %2520 = vset.pattern.permute.xlu0 10
        %2521 = vperm.xlu0 %2520, %v424
        %v2522 = vpop.permute.xlu0 %2521
        %2524 = vset.pattern.permute.xlu0 10
        %2525 = vperm.xlu0 %2524, %v425
        %v2526 = vpop.permute.xlu0 %2525
        %2528 = vset.pattern.permute.xlu0 10
        %2529 = vperm.xlu0 %2528, %v426
        %v2530 = vpop.permute.xlu0 %2529
        %v2532 = vlaneseq
        %v2533 = vshrl.u32 %v2532, 7
        %v2534 = vsub.s32 2, %v2533
        %v2535 = vrot.slane %v429, %v2534
        %v2536 = vlaneseq
        %v2537 = vshrl.u32 %v2536, 7
        %v2538 = vsub.s32 2, %v2537
        %v2539 = vrot.slane %v430, %v2538
        %v2540 = vsub.f32 %v2470, %v2535
        %v2541 = vsub.f32 %v2470, %v2539
        %v2542 = vsub.f32 %v2474, %v2535
        %v2543 = vsub.f32 %v2474, %v2539
        %v2544 = vsub.f32 %v2478, %v2535
        %v2545 = vsub.f32 %v2478, %v2539
        %v2546 = vsub.f32 %v2482, %v2535
        %v2547 = vsub.f32 %v2482, %v2539
        %v2548 = vsub.f32 %v2486, %v2535
        %v2549 = vsub.f32 %v2486, %v2539
        %v2550 = vsub.f32 %v2490, %v2535
        %v2551 = vsub.f32 %v2490, %v2539
        %v2552 = vsub.f32 %v2494, %v2535
        %v2553 = vsub.f32 %v2494, %v2539
        %v2554 = vsub.f32 %v2498, %v2535
        %v2555 = vsub.f32 %v2498, %v2539
        %v2556 = vsub.f32 %v2502, %v2535
        %v2557 = vsub.f32 %v2502, %v2539
        %v2558 = vsub.f32 %v2506, %v2535
        %v2559 = vsub.f32 %v2506, %v2539
        %v2560 = vsub.f32 %v2510, %v2535
        %v2561 = vsub.f32 %v2510, %v2539
        %v2562 = vsub.f32 %v2514, %v2535
        %v2563 = vsub.f32 %v2514, %v2539
        %v2564 = vsub.f32 %v2518, %v2535
        %v2565 = vsub.f32 %v2518, %v2539
        %v2566 = vsub.f32 %v2522, %v2535
        %v2567 = vsub.f32 %v2522, %v2539
        %v2568 = vsub.f32 %v2526, %v2535
        %v2569 = vsub.f32 %v2526, %v2539
        %v2570 = vsub.f32 %v2530, %v2535
        %v2571 = vsub.f32 %v2530, %v2539
        %v2572 = vand.u32 2147483647, %v2540
        %v2573 = vand.u32 2147483647, %v2541
        %v2574 = vand.u32 2147483647, %v2542
        %v2575 = vand.u32 2147483647, %v2543
        %v2576 = vand.u32 2147483647, %v2544
        %v2577 = vand.u32 2147483647, %v2545
        %v2578 = vand.u32 2147483647, %v2546
        %v2579 = vand.u32 2147483647, %v2547
        %v2580 = vand.u32 2147483647, %v2548
        %v2581 = vand.u32 2147483647, %v2549
        %v2582 = vand.u32 2147483647, %v2550
        %v2583 = vand.u32 2147483647, %v2551
        %v2584 = vand.u32 2147483647, %v2552
        %v2585 = vand.u32 2147483647, %v2553
        %v2586 = vand.u32 2147483647, %v2554
        %v2587 = vand.u32 2147483647, %v2555
        %v2588 = vand.u32 2147483647, %v2556
        %v2589 = vand.u32 2147483647, %v2557
        %v2590 = vand.u32 2147483647, %v2558
        %v2591 = vand.u32 2147483647, %v2559
        %v2592 = vand.u32 2147483647, %v2560
        %v2593 = vand.u32 2147483647, %v2561
        %v2594 = vand.u32 2147483647, %v2562
        %v2595 = vand.u32 2147483647, %v2563
        %v2596 = vand.u32 2147483647, %v2564
        %v2597 = vand.u32 2147483647, %v2565
        %v2598 = vand.u32 2147483647, %v2566
        %v2599 = vand.u32 2147483647, %v2567
        %v2600 = vand.u32 2147483647, %v2568
        %v2601 = vand.u32 2147483647, %v2569
        %v2602 = vand.u32 2147483647, %v2570
        %v2603 = vand.u32 2147483647, %v2571
        %v2604 = vstv %s2467
        %v2605 = vmul.f32 %v2604, %v2572
        %v2606 = vmul.f32 %v2604, %v2573
        %v2607 = vmul.f32 %v2604, %v2574
        %v2608 = vmul.f32 %v2604, %v2575
        %v2609 = vmul.f32 %v2604, %v2576
        %v2610 = vmul.f32 %v2604, %v2577
        %v2611 = vmul.f32 %v2604, %v2578
        %v2612 = vmul.f32 %v2604, %v2579
        %v2613 = vmul.f32 %v2604, %v2580
        %v2614 = vmul.f32 %v2604, %v2581
        %v2615 = vmul.f32 %v2604, %v2582
        %v2616 = vmul.f32 %v2604, %v2583
        %v2617 = vmul.f32 %v2604, %v2584
        %v2618 = vmul.f32 %v2604, %v2585
        %v2619 = vmul.f32 %v2604, %v2586
        %v2620 = vmul.f32 %v2604, %v2587
        %v2621 = vmul.f32 %v2604, %v2588
        %v2622 = vmul.f32 %v2604, %v2589
        %v2623 = vmul.f32 %v2604, %v2590
        %v2624 = vmul.f32 %v2604, %v2591
        %v2625 = vmul.f32 %v2604, %v2592
        %v2626 = vmul.f32 %v2604, %v2593
        %v2627 = vmul.f32 %v2604, %v2594
        %v2628 = vmul.f32 %v2604, %v2595
        %v2629 = vmul.f32 %v2604, %v2596
        %v2630 = vmul.f32 %v2604, %v2597
        %v2631 = vmul.f32 %v2604, %v2598
        %v2632 = vmul.f32 %v2604, %v2599
        %v2633 = vmul.f32 %v2604, %v2600
        %v2634 = vmul.f32 %v2604, %v2601
        %v2635 = vmul.f32 %v2604, %v2602
        %v2636 = vmul.f32 %v2604, %v2603
        %v2637 = vadd.f32 %v2435, %v2605
        %v2638 = vadd.f32 %v2436, %v2606
        %v2639 = vadd.f32 %v2437, %v2607
        %v2640 = vadd.f32 %v2438, %v2608
        %v2641 = vadd.f32 %v2439, %v2609
        %v2642 = vadd.f32 %v2440, %v2610
        %v2643 = vadd.f32 %v2441, %v2611
        %v2644 = vadd.f32 %v2442, %v2612
        %v2645 = vadd.f32 %v2443, %v2613
        %v2646 = vadd.f32 %v2444, %v2614
        %v2647 = vadd.f32 %v2445, %v2615
        %v2648 = vadd.f32 %v2446, %v2616
        %v2649 = vadd.f32 %v2447, %v2617
        %v2650 = vadd.f32 %v2448, %v2618
        %v2651 = vadd.f32 %v2449, %v2619
        %v2652 = vadd.f32 %v2450, %v2620
        %v2653 = vadd.f32 %v2451, %v2621
        %v2654 = vadd.f32 %v2452, %v2622
        %v2655 = vadd.f32 %v2453, %v2623
        %v2656 = vadd.f32 %v2454, %v2624
        %v2657 = vadd.f32 %v2455, %v2625
        %v2658 = vadd.f32 %v2456, %v2626
        %v2659 = vadd.f32 %v2457, %v2627
        %v2660 = vadd.f32 %v2458, %v2628
        %v2661 = vadd.f32 %v2459, %v2629
        %v2662 = vadd.f32 %v2460, %v2630
        %v2663 = vadd.f32 %v2461, %v2631
        %v2664 = vadd.f32 %v2462, %v2632
        %v2665 = vadd.f32 %v2463, %v2633
        %v2666 = vadd.f32 %v2464, %v2634
        %v2667 = vadd.f32 %v2465, %v2635
        %v2668 = vadd.f32 %v2466, %v2636
        %s2669 = sld [smem:[#allocation12 + $0xb]]
        %2670 = vset.pattern.permute.xlu0 11
        %2671 = vperm.xlu0 %2670, %v411
        %v2672 = vpop.permute.xlu0 %2671
        %2674 = vset.pattern.permute.xlu0 11
        %2675 = vperm.xlu0 %2674, %v412
        %v2676 = vpop.permute.xlu0 %2675
        %2678 = vset.pattern.permute.xlu0 11
        %2679 = vperm.xlu0 %2678, %v413
        %v2680 = vpop.permute.xlu0 %2679
        %2682 = vset.pattern.permute.xlu0 11
        %2683 = vperm.xlu0 %2682, %v414
        %v2684 = vpop.permute.xlu0 %2683
        %2686 = vset.pattern.permute.xlu0 11
        %2687 = vperm.xlu0 %2686, %v415
        %v2688 = vpop.permute.xlu0 %2687
        %2690 = vset.pattern.permute.xlu0 11
        %2691 = vperm.xlu0 %2690, %v416
        %v2692 = vpop.permute.xlu0 %2691
        %2694 = vset.pattern.permute.xlu0 11
        %2695 = vperm.xlu0 %2694, %v417
        %v2696 = vpop.permute.xlu0 %2695
        %2698 = vset.pattern.permute.xlu0 11
        %2699 = vperm.xlu0 %2698, %v418
        %v2700 = vpop.permute.xlu0 %2699
        %2702 = vset.pattern.permute.xlu0 11
        %2703 = vperm.xlu0 %2702, %v419
        %v2704 = vpop.permute.xlu0 %2703
        %2706 = vset.pattern.permute.xlu0 11
        %2707 = vperm.xlu0 %2706, %v420
        %v2708 = vpop.permute.xlu0 %2707
        %2710 = vset.pattern.permute.xlu0 11
        %2711 = vperm.xlu0 %2710, %v421
        %v2712 = vpop.permute.xlu0 %2711
        %2714 = vset.pattern.permute.xlu0 11
        %2715 = vperm.xlu0 %2714, %v422
        %v2716 = vpop.permute.xlu0 %2715
        %2718 = vset.pattern.permute.xlu0 11
        %2719 = vperm.xlu0 %2718, %v423
        %v2720 = vpop.permute.xlu0 %2719
        %2722 = vset.pattern.permute.xlu0 11
        %2723 = vperm.xlu0 %2722, %v424
        %v2724 = vpop.permute.xlu0 %2723
        %2726 = vset.pattern.permute.xlu0 11
        %2727 = vperm.xlu0 %2726, %v425
        %v2728 = vpop.permute.xlu0 %2727
        %2730 = vset.pattern.permute.xlu0 11
        %2731 = vperm.xlu0 %2730, %v426
        %v2732 = vpop.permute.xlu0 %2731
        %v2734 = vlaneseq
        %v2735 = vshrl.u32 %v2734, 7
        %v2736 = vsub.s32 3, %v2735
        %v2737 = vrot.slane %v429, %v2736
        %v2738 = vlaneseq
        %v2739 = vshrl.u32 %v2738, 7
        %v2740 = vsub.s32 3, %v2739
        %v2741 = vrot.slane %v430, %v2740
        %v2742 = vsub.f32 %v2672, %v2737
        %v2743 = vsub.f32 %v2672, %v2741
        %v2744 = vsub.f32 %v2676, %v2737
        %v2745 = vsub.f32 %v2676, %v2741
        %v2746 = vsub.f32 %v2680, %v2737
        %v2747 = vsub.f32 %v2680, %v2741
        %v2748 = vsub.f32 %v2684, %v2737
        %v2749 = vsub.f32 %v2684, %v2741
        %v2750 = vsub.f32 %v2688, %v2737
        %v2751 = vsub.f32 %v2688, %v2741
        %v2752 = vsub.f32 %v2692, %v2737
        %v2753 = vsub.f32 %v2692, %v2741
        %v2754 = vsub.f32 %v2696, %v2737
        %v2755 = vsub.f32 %v2696, %v2741
        %v2756 = vsub.f32 %v2700, %v2737
        %v2757 = vsub.f32 %v2700, %v2741
        %v2758 = vsub.f32 %v2704, %v2737
        %v2759 = vsub.f32 %v2704, %v2741
        %v2760 = vsub.f32 %v2708, %v2737
        %v2761 = vsub.f32 %v2708, %v2741
        %v2762 = vsub.f32 %v2712, %v2737
        %v2763 = vsub.f32 %v2712, %v2741
        %v2764 = vsub.f32 %v2716, %v2737
        %v2765 = vsub.f32 %v2716, %v2741
        %v2766 = vsub.f32 %v2720, %v2737
        %v2767 = vsub.f32 %v2720, %v2741
        %v2768 = vsub.f32 %v2724, %v2737
        %v2769 = vsub.f32 %v2724, %v2741
        %v2770 = vsub.f32 %v2728, %v2737
        %v2771 = vsub.f32 %v2728, %v2741
        %v2772 = vsub.f32 %v2732, %v2737
        %v2773 = vsub.f32 %v2732, %v2741
        %v2774 = vand.u32 2147483647, %v2742
        %v2775 = vand.u32 2147483647, %v2743
        %v2776 = vand.u32 2147483647, %v2744
        %v2777 = vand.u32 2147483647, %v2745
        %v2778 = vand.u32 2147483647, %v2746
        %v2779 = vand.u32 2147483647, %v2747
        %v2780 = vand.u32 2147483647, %v2748
        %v2781 = vand.u32 2147483647, %v2749
        %v2782 = vand.u32 2147483647, %v2750
        %v2783 = vand.u32 2147483647, %v2751
        %v2784 = vand.u32 2147483647, %v2752
        %v2785 = vand.u32 2147483647, %v2753
        %v2786 = vand.u32 2147483647, %v2754
        %v2787 = vand.u32 2147483647, %v2755
        %v2788 = vand.u32 2147483647, %v2756
        %v2789 = vand.u32 2147483647, %v2757
        %v2790 = vand.u32 2147483647, %v2758
        %v2791 = vand.u32 2147483647, %v2759
        %v2792 = vand.u32 2147483647, %v2760
        %v2793 = vand.u32 2147483647, %v2761
        %v2794 = vand.u32 2147483647, %v2762
        %v2795 = vand.u32 2147483647, %v2763
        %v2796 = vand.u32 2147483647, %v2764
        %v2797 = vand.u32 2147483647, %v2765
        %v2798 = vand.u32 2147483647, %v2766
        %v2799 = vand.u32 2147483647, %v2767
        %v2800 = vand.u32 2147483647, %v2768
        %v2801 = vand.u32 2147483647, %v2769
        %v2802 = vand.u32 2147483647, %v2770
        %v2803 = vand.u32 2147483647, %v2771
        %v2804 = vand.u32 2147483647, %v2772
        %v2805 = vand.u32 2147483647, %v2773
        %v2806 = vstv %s2669
        %v2807 = vmul.f32 %v2806, %v2774
        %v2808 = vmul.f32 %v2806, %v2775
        %v2809 = vmul.f32 %v2806, %v2776
        %v2810 = vmul.f32 %v2806, %v2777
        %v2811 = vmul.f32 %v2806, %v2778
        %v2812 = vmul.f32 %v2806, %v2779
        %v2813 = vmul.f32 %v2806, %v2780
        %v2814 = vmul.f32 %v2806, %v2781
        %v2815 = vmul.f32 %v2806, %v2782
        %v2816 = vmul.f32 %v2806, %v2783
        %v2817 = vmul.f32 %v2806, %v2784
        %v2818 = vmul.f32 %v2806, %v2785
        %v2819 = vmul.f32 %v2806, %v2786
        %v2820 = vmul.f32 %v2806, %v2787
        %v2821 = vmul.f32 %v2806, %v2788
        %v2822 = vmul.f32 %v2806, %v2789
        %v2823 = vmul.f32 %v2806, %v2790
        %v2824 = vmul.f32 %v2806, %v2791
        %v2825 = vmul.f32 %v2806, %v2792
        %v2826 = vmul.f32 %v2806, %v2793
        %v2827 = vmul.f32 %v2806, %v2794
        %v2828 = vmul.f32 %v2806, %v2795
        %v2829 = vmul.f32 %v2806, %v2796
        %v2830 = vmul.f32 %v2806, %v2797
        %v2831 = vmul.f32 %v2806, %v2798
        %v2832 = vmul.f32 %v2806, %v2799
        %v2833 = vmul.f32 %v2806, %v2800
        %v2834 = vmul.f32 %v2806, %v2801
        %v2835 = vmul.f32 %v2806, %v2802
        %v2836 = vmul.f32 %v2806, %v2803
        %v2837 = vmul.f32 %v2806, %v2804
        %v2838 = vmul.f32 %v2806, %v2805
        %v2839 = vadd.f32 %v2637, %v2807
        %v2840 = vadd.f32 %v2638, %v2808
        %v2841 = vadd.f32 %v2639, %v2809
        %v2842 = vadd.f32 %v2640, %v2810
        %v2843 = vadd.f32 %v2641, %v2811
        %v2844 = vadd.f32 %v2642, %v2812
        %v2845 = vadd.f32 %v2643, %v2813
        %v2846 = vadd.f32 %v2644, %v2814
        %v2847 = vadd.f32 %v2645, %v2815
        %v2848 = vadd.f32 %v2646, %v2816
        %v2849 = vadd.f32 %v2647, %v2817
        %v2850 = vadd.f32 %v2648, %v2818
        %v2851 = vadd.f32 %v2649, %v2819
        %v2852 = vadd.f32 %v2650, %v2820
        %v2853 = vadd.f32 %v2651, %v2821
        %v2854 = vadd.f32 %v2652, %v2822
        %v2855 = vadd.f32 %v2653, %v2823
        %v2856 = vadd.f32 %v2654, %v2824
        %v2857 = vadd.f32 %v2655, %v2825
        %v2858 = vadd.f32 %v2656, %v2826
        %v2859 = vadd.f32 %v2657, %v2827
        %v2860 = vadd.f32 %v2658, %v2828
        %v2861 = vadd.f32 %v2659, %v2829
        %v2862 = vadd.f32 %v2660, %v2830
        %v2863 = vadd.f32 %v2661, %v2831
        %v2864 = vadd.f32 %v2662, %v2832
        %v2865 = vadd.f32 %v2663, %v2833
        %v2866 = vadd.f32 %v2664, %v2834
        %v2867 = vadd.f32 %v2665, %v2835
        %v2868 = vadd.f32 %v2666, %v2836
        %v2869 = vadd.f32 %v2667, %v2837
        %v2870 = vadd.f32 %v2668, %v2838
        %s2871 = sld [smem:[#allocation12 + $0xc]]
        %2872 = vset.pattern.permute.xlu0 12
        %2873 = vperm.xlu0 %2872, %v411
        %v2874 = vpop.permute.xlu0 %2873
        %2876 = vset.pattern.permute.xlu0 12
        %2877 = vperm.xlu0 %2876, %v412
        %v2878 = vpop.permute.xlu0 %2877
        %2880 = vset.pattern.permute.xlu0 12
        %2881 = vperm.xlu0 %2880, %v413
        %v2882 = vpop.permute.xlu0 %2881
        %2884 = vset.pattern.permute.xlu0 12
        %2885 = vperm.xlu0 %2884, %v414
        %v2886 = vpop.permute.xlu0 %2885
        %2888 = vset.pattern.permute.xlu0 12
        %2889 = vperm.xlu0 %2888, %v415
        %v2890 = vpop.permute.xlu0 %2889
        %2892 = vset.pattern.permute.xlu0 12
        %2893 = vperm.xlu0 %2892, %v416
        %v2894 = vpop.permute.xlu0 %2893
        %2896 = vset.pattern.permute.xlu0 12
        %2897 = vperm.xlu0 %2896, %v417
        %v2898 = vpop.permute.xlu0 %2897
        %2900 = vset.pattern.permute.xlu0 12
        %2901 = vperm.xlu0 %2900, %v418
        %v2902 = vpop.permute.xlu0 %2901
        %2904 = vset.pattern.permute.xlu0 12
        %2905 = vperm.xlu0 %2904, %v419
        %v2906 = vpop.permute.xlu0 %2905
        %2908 = vset.pattern.permute.xlu0 12
        %2909 = vperm.xlu0 %2908, %v420
        %v2910 = vpop.permute.xlu0 %2909
        %2912 = vset.pattern.permute.xlu0 12
        %2913 = vperm.xlu0 %2912, %v421
        %v2914 = vpop.permute.xlu0 %2913
        %2916 = vset.pattern.permute.xlu0 12
        %2917 = vperm.xlu0 %2916, %v422
        %v2918 = vpop.permute.xlu0 %2917
        %2920 = vset.pattern.permute.xlu0 12
        %2921 = vperm.xlu0 %2920, %v423
        %v2922 = vpop.permute.xlu0 %2921
        %2924 = vset.pattern.permute.xlu0 12
        %2925 = vperm.xlu0 %2924, %v424
        %v2926 = vpop.permute.xlu0 %2925
        %2928 = vset.pattern.permute.xlu0 12
        %2929 = vperm.xlu0 %2928, %v425
        %v2930 = vpop.permute.xlu0 %2929
        %2932 = vset.pattern.permute.xlu0 12
        %2933 = vperm.xlu0 %2932, %v426
        %v2934 = vpop.permute.xlu0 %2933
        %v2936 = vlaneseq
        %v2937 = vshrl.u32 %v2936, 7
        %v2938 = vsub.s32 4, %v2937
        %v2939 = vrot.slane %v429, %v2938
        %v2940 = vlaneseq
        %v2941 = vshrl.u32 %v2940, 7
        %v2942 = vsub.s32 4, %v2941
        %v2943 = vrot.slane %v430, %v2942
        %v2944 = vsub.f32 %v2874, %v2939
        %v2945 = vsub.f32 %v2874, %v2943
        %v2946 = vsub.f32 %v2878, %v2939
        %v2947 = vsub.f32 %v2878, %v2943
        %v2948 = vsub.f32 %v2882, %v2939
        %v2949 = vsub.f32 %v2882, %v2943
        %v2950 = vsub.f32 %v2886, %v2939
        %v2951 = vsub.f32 %v2886, %v2943
        %v2952 = vsub.f32 %v2890, %v2939
        %v2953 = vsub.f32 %v2890, %v2943
        %v2954 = vsub.f32 %v2894, %v2939
        %v2955 = vsub.f32 %v2894, %v2943
        %v2956 = vsub.f32 %v2898, %v2939
        %v2957 = vsub.f32 %v2898, %v2943
        %v2958 = vsub.f32 %v2902, %v2939
        %v2959 = vsub.f32 %v2902, %v2943
        %v2960 = vsub.f32 %v2906, %v2939
        %v2961 = vsub.f32 %v2906, %v2943
        %v2962 = vsub.f32 %v2910, %v2939
        %v2963 = vsub.f32 %v2910, %v2943
        %v2964 = vsub.f32 %v2914, %v2939
        %v2965 = vsub.f32 %v2914, %v2943
        %v2966 = vsub.f32 %v2918, %v2939
        %v2967 = vsub.f32 %v2918, %v2943
        %v2968 = vsub.f32 %v2922, %v2939
        %v2969 = vsub.f32 %v2922, %v2943
        %v2970 = vsub.f32 %v2926, %v2939
        %v2971 = vsub.f32 %v2926, %v2943
        %v2972 = vsub.f32 %v2930, %v2939
        %v2973 = vsub.f32 %v2930, %v2943
        %v2974 = vsub.f32 %v2934, %v2939
        %v2975 = vsub.f32 %v2934, %v2943
        %v2976 = vand.u32 2147483647, %v2944
        %v2977 = vand.u32 2147483647, %v2945
        %v2978 = vand.u32 2147483647, %v2946
        %v2979 = vand.u32 2147483647, %v2947
        %v2980 = vand.u32 2147483647, %v2948
        %v2981 = vand.u32 2147483647, %v2949
        %v2982 = vand.u32 2147483647, %v2950
        %v2983 = vand.u32 2147483647, %v2951
        %v2984 = vand.u32 2147483647, %v2952
        %v2985 = vand.u32 2147483647, %v2953
        %v2986 = vand.u32 2147483647, %v2954
        %v2987 = vand.u32 2147483647, %v2955
        %v2988 = vand.u32 2147483647, %v2956
        %v2989 = vand.u32 2147483647, %v2957
        %v2990 = vand.u32 2147483647, %v2958
        %v2991 = vand.u32 2147483647, %v2959
        %v2992 = vand.u32 2147483647, %v2960
        %v2993 = vand.u32 2147483647, %v2961
        %v2994 = vand.u32 2147483647, %v2962
        %v2995 = vand.u32 2147483647, %v2963
        %v2996 = vand.u32 2147483647, %v2964
        %v2997 = vand.u32 2147483647, %v2965
        %v2998 = vand.u32 2147483647, %v2966
        %v2999 = vand.u32 2147483647, %v2967
        %v3000 = vand.u32 2147483647, %v2968
        %v3001 = vand.u32 2147483647, %v2969
        %v3002 = vand.u32 2147483647, %v2970
        %v3003 = vand.u32 2147483647, %v2971
        %v3004 = vand.u32 2147483647, %v2972
        %v3005 = vand.u32 2147483647, %v2973
        %v3006 = vand.u32 2147483647, %v2974
        %v3007 = vand.u32 2147483647, %v2975
        %v3008 = vstv %s2871
        %v3009 = vmul.f32 %v3008, %v2976
        %v3010 = vmul.f32 %v3008, %v2977
        %v3011 = vmul.f32 %v3008, %v2978
        %v3012 = vmul.f32 %v3008, %v2979
        %v3013 = vmul.f32 %v3008, %v2980
        %v3014 = vmul.f32 %v3008, %v2981
        %v3015 = vmul.f32 %v3008, %v2982
        %v3016 = vmul.f32 %v3008, %v2983
        %v3017 = vmul.f32 %v3008, %v2984
        %v3018 = vmul.f32 %v3008, %v2985
        %v3019 = vmul.f32 %v3008, %v2986
        %v3020 = vmul.f32 %v3008, %v2987
        %v3021 = vmul.f32 %v3008, %v2988
        %v3022 = vmul.f32 %v3008, %v2989
        %v3023 = vmul.f32 %v3008, %v2990
        %v3024 = vmul.f32 %v3008, %v2991
        %v3025 = vmul.f32 %v3008, %v2992
        %v3026 = vmul.f32 %v3008, %v2993
        %v3027 = vmul.f32 %v3008, %v2994
        %v3028 = vmul.f32 %v3008, %v2995
        %v3029 = vmul.f32 %v3008, %v2996
        %v3030 = vmul.f32 %v3008, %v2997
        %v3031 = vmul.f32 %v3008, %v2998
        %v3032 = vmul.f32 %v3008, %v2999
        %v3033 = vmul.f32 %v3008, %v3000
        %v3034 = vmul.f32 %v3008, %v3001
        %v3035 = vmul.f32 %v3008, %v3002
        %v3036 = vmul.f32 %v3008, %v3003
        %v3037 = vmul.f32 %v3008, %v3004
        %v3038 = vmul.f32 %v3008, %v3005
        %v3039 = vmul.f32 %v3008, %v3006
        %v3040 = vmul.f32 %v3008, %v3007
        %v3041 = vadd.f32 %v2839, %v3009
        %v3042 = vadd.f32 %v2840, %v3010
        %v3043 = vadd.f32 %v2841, %v3011
        %v3044 = vadd.f32 %v2842, %v3012
        %v3045 = vadd.f32 %v2843, %v3013
        %v3046 = vadd.f32 %v2844, %v3014
        %v3047 = vadd.f32 %v2845, %v3015
        %v3048 = vadd.f32 %v2846, %v3016
        %v3049 = vadd.f32 %v2847, %v3017
        %v3050 = vadd.f32 %v2848, %v3018
        %v3051 = vadd.f32 %v2849, %v3019
        %v3052 = vadd.f32 %v2850, %v3020
        %v3053 = vadd.f32 %v2851, %v3021
        %v3054 = vadd.f32 %v2852, %v3022
        %v3055 = vadd.f32 %v2853, %v3023
        %v3056 = vadd.f32 %v2854, %v3024
        %v3057 = vadd.f32 %v2855, %v3025
        %v3058 = vadd.f32 %v2856, %v3026
        %v3059 = vadd.f32 %v2857, %v3027
        %v3060 = vadd.f32 %v2858, %v3028
        %v3061 = vadd.f32 %v2859, %v3029
        %v3062 = vadd.f32 %v2860, %v3030
        %v3063 = vadd.f32 %v2861, %v3031
        %v3064 = vadd.f32 %v2862, %v3032
        %v3065 = vadd.f32 %v2863, %v3033
        %v3066 = vadd.f32 %v2864, %v3034
        %v3067 = vadd.f32 %v2865, %v3035
        %v3068 = vadd.f32 %v2866, %v3036
        %v3069 = vadd.f32 %v2867, %v3037
        %v3070 = vadd.f32 %v2868, %v3038
        %v3071 = vadd.f32 %v2869, %v3039
        %v3072 = vadd.f32 %v2870, %v3040
        %s3073 = sld [smem:[#allocation12 + $0xd]]
        %3074 = vset.pattern.permute.xlu0 13
        %3075 = vperm.xlu0 %3074, %v411
        %v3076 = vpop.permute.xlu0 %3075
        %3078 = vset.pattern.permute.xlu0 13
        %3079 = vperm.xlu0 %3078, %v412
        %v3080 = vpop.permute.xlu0 %3079
        %3082 = vset.pattern.permute.xlu0 13
        %3083 = vperm.xlu0 %3082, %v413
        %v3084 = vpop.permute.xlu0 %3083
        %3086 = vset.pattern.permute.xlu0 13
        %3087 = vperm.xlu0 %3086, %v414
        %v3088 = vpop.permute.xlu0 %3087
        %3090 = vset.pattern.permute.xlu0 13
        %3091 = vperm.xlu0 %3090, %v415
        %v3092 = vpop.permute.xlu0 %3091
        %3094 = vset.pattern.permute.xlu0 13
        %3095 = vperm.xlu0 %3094, %v416
        %v3096 = vpop.permute.xlu0 %3095
        %3098 = vset.pattern.permute.xlu0 13
        %3099 = vperm.xlu0 %3098, %v417
        %v3100 = vpop.permute.xlu0 %3099
        %3102 = vset.pattern.permute.xlu0 13
        %3103 = vperm.xlu0 %3102, %v418
        %v3104 = vpop.permute.xlu0 %3103
        %3106 = vset.pattern.permute.xlu0 13
        %3107 = vperm.xlu0 %3106, %v419
        %v3108 = vpop.permute.xlu0 %3107
        %3110 = vset.pattern.permute.xlu0 13
        %3111 = vperm.xlu0 %3110, %v420
        %v3112 = vpop.permute.xlu0 %3111
        %3114 = vset.pattern.permute.xlu0 13
        %3115 = vperm.xlu0 %3114, %v421
        %v3116 = vpop.permute.xlu0 %3115
        %3118 = vset.pattern.permute.xlu0 13
        %3119 = vperm.xlu0 %3118, %v422
        %v3120 = vpop.permute.xlu0 %3119
        %3122 = vset.pattern.permute.xlu0 13
        %3123 = vperm.xlu0 %3122, %v423
        %v3124 = vpop.permute.xlu0 %3123
        %3126 = vset.pattern.permute.xlu0 13
        %3127 = vperm.xlu0 %3126, %v424
        %v3128 = vpop.permute.xlu0 %3127
        %3130 = vset.pattern.permute.xlu0 13
        %3131 = vperm.xlu0 %3130, %v425
        %v3132 = vpop.permute.xlu0 %3131
        %3134 = vset.pattern.permute.xlu0 13
        %3135 = vperm.xlu0 %3134, %v426
        %v3136 = vpop.permute.xlu0 %3135
        %v3138 = vlaneseq
        %v3139 = vshrl.u32 %v3138, 7
        %v3140 = vsub.s32 5, %v3139
        %v3141 = vrot.slane %v429, %v3140
        %v3142 = vlaneseq
        %v3143 = vshrl.u32 %v3142, 7
        %v3144 = vsub.s32 5, %v3143
        %v3145 = vrot.slane %v430, %v3144
        %v3146 = vsub.f32 %v3076, %v3141
        %v3147 = vsub.f32 %v3076, %v3145
        %v3148 = vsub.f32 %v3080, %v3141
        %v3149 = vsub.f32 %v3080, %v3145
        %v3150 = vsub.f32 %v3084, %v3141
        %v3151 = vsub.f32 %v3084, %v3145
        %v3152 = vsub.f32 %v3088, %v3141
        %v3153 = vsub.f32 %v3088, %v3145
        %v3154 = vsub.f32 %v3092, %v3141
        %v3155 = vsub.f32 %v3092, %v3145
        %v3156 = vsub.f32 %v3096, %v3141
        %v3157 = vsub.f32 %v3096, %v3145
        %v3158 = vsub.f32 %v3100, %v3141
        %v3159 = vsub.f32 %v3100, %v3145
        %v3160 = vsub.f32 %v3104, %v3141
        %v3161 = vsub.f32 %v3104, %v3145
        %v3162 = vsub.f32 %v3108, %v3141
        %v3163 = vsub.f32 %v3108, %v3145
        %v3164 = vsub.f32 %v3112, %v3141
        %v3165 = vsub.f32 %v3112, %v3145
        %v3166 = vsub.f32 %v3116, %v3141
        %v3167 = vsub.f32 %v3116, %v3145
        %v3168 = vsub.f32 %v3120, %v3141
        %v3169 = vsub.f32 %v3120, %v3145
        %v3170 = vsub.f32 %v3124, %v3141
        %v3171 = vsub.f32 %v3124, %v3145
        %v3172 = vsub.f32 %v3128, %v3141
        %v3173 = vsub.f32 %v3128, %v3145
        %v3174 = vsub.f32 %v3132, %v3141
        %v3175 = vsub.f32 %v3132, %v3145
        %v3176 = vsub.f32 %v3136, %v3141
        %v3177 = vsub.f32 %v3136, %v3145
        %v3178 = vand.u32 2147483647, %v3146
        %v3179 = vand.u32 2147483647, %v3147
        %v3180 = vand.u32 2147483647, %v3148
        %v3181 = vand.u32 2147483647, %v3149
        %v3182 = vand.u32 2147483647, %v3150
        %v3183 = vand.u32 2147483647, %v3151
        %v3184 = vand.u32 2147483647, %v3152
        %v3185 = vand.u32 2147483647, %v3153
        %v3186 = vand.u32 2147483647, %v3154
        %v3187 = vand.u32 2147483647, %v3155
        %v3188 = vand.u32 2147483647, %v3156
        %v3189 = vand.u32 2147483647, %v3157
        %v3190 = vand.u32 2147483647, %v3158
        %v3191 = vand.u32 2147483647, %v3159
        %v3192 = vand.u32 2147483647, %v3160
        %v3193 = vand.u32 2147483647, %v3161
        %v3194 = vand.u32 2147483647, %v3162
        %v3195 = vand.u32 2147483647, %v3163
        %v3196 = vand.u32 2147483647, %v3164
        %v3197 = vand.u32 2147483647, %v3165
        %v3198 = vand.u32 2147483647, %v3166
        %v3199 = vand.u32 2147483647, %v3167
        %v3200 = vand.u32 2147483647, %v3168
        %v3201 = vand.u32 2147483647, %v3169
        %v3202 = vand.u32 2147483647, %v3170
        %v3203 = vand.u32 2147483647, %v3171
        %v3204 = vand.u32 2147483647, %v3172
        %v3205 = vand.u32 2147483647, %v3173
        %v3206 = vand.u32 2147483647, %v3174
        %v3207 = vand.u32 2147483647, %v3175
        %v3208 = vand.u32 2147483647, %v3176
        %v3209 = vand.u32 2147483647, %v3177
        %v3210 = vstv %s3073
        %v3211 = vmul.f32 %v3210, %v3178
        %v3212 = vmul.f32 %v3210, %v3179
        %v3213 = vmul.f32 %v3210, %v3180
        %v3214 = vmul.f32 %v3210, %v3181
        %v3215 = vmul.f32 %v3210, %v3182
        %v3216 = vmul.f32 %v3210, %v3183
        %v3217 = vmul.f32 %v3210, %v3184
        %v3218 = vmul.f32 %v3210, %v3185
        %v3219 = vmul.f32 %v3210, %v3186
        %v3220 = vmul.f32 %v3210, %v3187
        %v3221 = vmul.f32 %v3210, %v3188
        %v3222 = vmul.f32 %v3210, %v3189
        %v3223 = vmul.f32 %v3210, %v3190
        %v3224 = vmul.f32 %v3210, %v3191
        %v3225 = vmul.f32 %v3210, %v3192
        %v3226 = vmul.f32 %v3210, %v3193
        %v3227 = vmul.f32 %v3210, %v3194
        %v3228 = vmul.f32 %v3210, %v3195
        %v3229 = vmul.f32 %v3210, %v3196
        %v3230 = vmul.f32 %v3210, %v3197
        %v3231 = vmul.f32 %v3210, %v3198
        %v3232 = vmul.f32 %v3210, %v3199
        %v3233 = vmul.f32 %v3210, %v3200
        %v3234 = vmul.f32 %v3210, %v3201
        %v3235 = vmul.f32 %v3210, %v3202
        %v3236 = vmul.f32 %v3210, %v3203
        %v3237 = vmul.f32 %v3210, %v3204
        %v3238 = vmul.f32 %v3210, %v3205
        %v3239 = vmul.f32 %v3210, %v3206
        %v3240 = vmul.f32 %v3210, %v3207
        %v3241 = vmul.f32 %v3210, %v3208
        %v3242 = vmul.f32 %v3210, %v3209
        %v3243 = vadd.f32 %v3041, %v3211
        %v3244 = vadd.f32 %v3042, %v3212
        %v3245 = vadd.f32 %v3043, %v3213
        %v3246 = vadd.f32 %v3044, %v3214
        %v3247 = vadd.f32 %v3045, %v3215
        %v3248 = vadd.f32 %v3046, %v3216
        %v3249 = vadd.f32 %v3047, %v3217
        %v3250 = vadd.f32 %v3048, %v3218
        %v3251 = vadd.f32 %v3049, %v3219
        %v3252 = vadd.f32 %v3050, %v3220
        %v3253 = vadd.f32 %v3051, %v3221
        %v3254 = vadd.f32 %v3052, %v3222
        %v3255 = vadd.f32 %v3053, %v3223
        %v3256 = vadd.f32 %v3054, %v3224
        %v3257 = vadd.f32 %v3055, %v3225
        %v3258 = vadd.f32 %v3056, %v3226
        %v3259 = vadd.f32 %v3057, %v3227
        %v3260 = vadd.f32 %v3058, %v3228
        %v3261 = vadd.f32 %v3059, %v3229
        %v3262 = vadd.f32 %v3060, %v3230
        %v3263 = vadd.f32 %v3061, %v3231
        %v3264 = vadd.f32 %v3062, %v3232
        %v3265 = vadd.f32 %v3063, %v3233
        %v3266 = vadd.f32 %v3064, %v3234
        %v3267 = vadd.f32 %v3065, %v3235
        %v3268 = vadd.f32 %v3066, %v3236
        %v3269 = vadd.f32 %v3067, %v3237
        %v3270 = vadd.f32 %v3068, %v3238
        %v3271 = vadd.f32 %v3069, %v3239
        %v3272 = vadd.f32 %v3070, %v3240
        %v3273 = vadd.f32 %v3071, %v3241
        %v3274 = vadd.f32 %v3072, %v3242
        %s3275 = sld [smem:[#allocation12 + $0xe]]
        %3276 = vset.pattern.permute.xlu0 14
        %3277 = vperm.xlu0 %3276, %v411
        %v3278 = vpop.permute.xlu0 %3277
        %3280 = vset.pattern.permute.xlu0 14
        %3281 = vperm.xlu0 %3280, %v412
        %v3282 = vpop.permute.xlu0 %3281
        %3284 = vset.pattern.permute.xlu0 14
        %3285 = vperm.xlu0 %3284, %v413
        %v3286 = vpop.permute.xlu0 %3285
        %3288 = vset.pattern.permute.xlu0 14
        %3289 = vperm.xlu0 %3288, %v414
        %v3290 = vpop.permute.xlu0 %3289
        %3292 = vset.pattern.permute.xlu0 14
        %3293 = vperm.xlu0 %3292, %v415
        %v3294 = vpop.permute.xlu0 %3293
        %3296 = vset.pattern.permute.xlu0 14
        %3297 = vperm.xlu0 %3296, %v416
        %v3298 = vpop.permute.xlu0 %3297
        %3300 = vset.pattern.permute.xlu0 14
        %3301 = vperm.xlu0 %3300, %v417
        %v3302 = vpop.permute.xlu0 %3301
        %3304 = vset.pattern.permute.xlu0 14
        %3305 = vperm.xlu0 %3304, %v418
        %v3306 = vpop.permute.xlu0 %3305
        %3308 = vset.pattern.permute.xlu0 14
        %3309 = vperm.xlu0 %3308, %v419
        %v3310 = vpop.permute.xlu0 %3309
        %3312 = vset.pattern.permute.xlu0 14
        %3313 = vperm.xlu0 %3312, %v420
        %v3314 = vpop.permute.xlu0 %3313
        %3316 = vset.pattern.permute.xlu0 14
        %3317 = vperm.xlu0 %3316, %v421
        %v3318 = vpop.permute.xlu0 %3317
        %3320 = vset.pattern.permute.xlu0 14
        %3321 = vperm.xlu0 %3320, %v422
        %v3322 = vpop.permute.xlu0 %3321
        %3324 = vset.pattern.permute.xlu0 14
        %3325 = vperm.xlu0 %3324, %v423
        %v3326 = vpop.permute.xlu0 %3325
        %3328 = vset.pattern.permute.xlu0 14
        %3329 = vperm.xlu0 %3328, %v424
        %v3330 = vpop.permute.xlu0 %3329
        %3332 = vset.pattern.permute.xlu0 14
        %3333 = vperm.xlu0 %3332, %v425
        %v3334 = vpop.permute.xlu0 %3333
        %3336 = vset.pattern.permute.xlu0 14
        %3337 = vperm.xlu0 %3336, %v426
        %v3338 = vpop.permute.xlu0 %3337
        %v3340 = vlaneseq
        %v3341 = vshrl.u32 %v3340, 7
        %v3342 = vsub.s32 6, %v3341
        %v3343 = vrot.slane %v429, %v3342
        %v3344 = vlaneseq
        %v3345 = vshrl.u32 %v3344, 7
        %v3346 = vsub.s32 6, %v3345
        %v3347 = vrot.slane %v430, %v3346
        %v3348 = vsub.f32 %v3278, %v3343
        %v3349 = vsub.f32 %v3278, %v3347
        %v3350 = vsub.f32 %v3282, %v3343
        %v3351 = vsub.f32 %v3282, %v3347
        %v3352 = vsub.f32 %v3286, %v3343
        %v3353 = vsub.f32 %v3286, %v3347
        %v3354 = vsub.f32 %v3290, %v3343
        %v3355 = vsub.f32 %v3290, %v3347
        %v3356 = vsub.f32 %v3294, %v3343
        %v3357 = vsub.f32 %v3294, %v3347
        %v3358 = vsub.f32 %v3298, %v3343
        %v3359 = vsub.f32 %v3298, %v3347
        %v3360 = vsub.f32 %v3302, %v3343
        %v3361 = vsub.f32 %v3302, %v3347
        %v3362 = vsub.f32 %v3306, %v3343
        %v3363 = vsub.f32 %v3306, %v3347
        %v3364 = vsub.f32 %v3310, %v3343
        %v3365 = vsub.f32 %v3310, %v3347
        %v3366 = vsub.f32 %v3314, %v3343
        %v3367 = vsub.f32 %v3314, %v3347
        %v3368 = vsub.f32 %v3318, %v3343
        %v3369 = vsub.f32 %v3318, %v3347
        %v3370 = vsub.f32 %v3322, %v3343
        %v3371 = vsub.f32 %v3322, %v3347
        %v3372 = vsub.f32 %v3326, %v3343
        %v3373 = vsub.f32 %v3326, %v3347
        %v3374 = vsub.f32 %v3330, %v3343
        %v3375 = vsub.f32 %v3330, %v3347
        %v3376 = vsub.f32 %v3334, %v3343
        %v3377 = vsub.f32 %v3334, %v3347
        %v3378 = vsub.f32 %v3338, %v3343
        %v3379 = vsub.f32 %v3338, %v3347
        %v3380 = vand.u32 2147483647, %v3348
        %v3381 = vand.u32 2147483647, %v3349
        %v3382 = vand.u32 2147483647, %v3350
        %v3383 = vand.u32 2147483647, %v3351
        %v3384 = vand.u32 2147483647, %v3352
        %v3385 = vand.u32 2147483647, %v3353
        %v3386 = vand.u32 2147483647, %v3354
        %v3387 = vand.u32 2147483647, %v3355
        %v3388 = vand.u32 2147483647, %v3356
        %v3389 = vand.u32 2147483647, %v3357
        %v3390 = vand.u32 2147483647, %v3358
        %v3391 = vand.u32 2147483647, %v3359
        %v3392 = vand.u32 2147483647, %v3360
        %v3393 = vand.u32 2147483647, %v3361
        %v3394 = vand.u32 2147483647, %v3362
        %v3395 = vand.u32 2147483647, %v3363
        %v3396 = vand.u32 2147483647, %v3364
        %v3397 = vand.u32 2147483647, %v3365
        %v3398 = vand.u32 2147483647, %v3366
        %v3399 = vand.u32 2147483647, %v3367
        %v3400 = vand.u32 2147483647, %v3368
        %v3401 = vand.u32 2147483647, %v3369
        %v3402 = vand.u32 2147483647, %v3370
        %v3403 = vand.u32 2147483647, %v3371
        %v3404 = vand.u32 2147483647, %v3372
        %v3405 = vand.u32 2147483647, %v3373
        %v3406 = vand.u32 2147483647, %v3374
        %v3407 = vand.u32 2147483647, %v3375
        %v3408 = vand.u32 2147483647, %v3376
        %v3409 = vand.u32 2147483647, %v3377
        %v3410 = vand.u32 2147483647, %v3378
        %v3411 = vand.u32 2147483647, %v3379
        %v3412 = vstv %s3275
        %v3413 = vmul.f32 %v3412, %v3380
        %v3414 = vmul.f32 %v3412, %v3381
        %v3415 = vmul.f32 %v3412, %v3382
        %v3416 = vmul.f32 %v3412, %v3383
        %v3417 = vmul.f32 %v3412, %v3384
        %v3418 = vmul.f32 %v3412, %v3385
        %v3419 = vmul.f32 %v3412, %v3386
        %v3420 = vmul.f32 %v3412, %v3387
        %v3421 = vmul.f32 %v3412, %v3388
        %v3422 = vmul.f32 %v3412, %v3389
        %v3423 = vmul.f32 %v3412, %v3390
        %v3424 = vmul.f32 %v3412, %v3391
        %v3425 = vmul.f32 %v3412, %v3392
        %v3426 = vmul.f32 %v3412, %v3393
        %v3427 = vmul.f32 %v3412, %v3394
        %v3428 = vmul.f32 %v3412, %v3395
        %v3429 = vmul.f32 %v3412, %v3396
        %v3430 = vmul.f32 %v3412, %v3397
        %v3431 = vmul.f32 %v3412, %v3398
        %v3432 = vmul.f32 %v3412, %v3399
        %v3433 = vmul.f32 %v3412, %v3400
        %v3434 = vmul.f32 %v3412, %v3401
        %v3435 = vmul.f32 %v3412, %v3402
        %v3436 = vmul.f32 %v3412, %v3403
        %v3437 = vmul.f32 %v3412, %v3404
        %v3438 = vmul.f32 %v3412, %v3405
        %v3439 = vmul.f32 %v3412, %v3406
        %v3440 = vmul.f32 %v3412, %v3407
        %v3441 = vmul.f32 %v3412, %v3408
        %v3442 = vmul.f32 %v3412, %v3409
        %v3443 = vmul.f32 %v3412, %v3410
        %v3444 = vmul.f32 %v3412, %v3411
        %v3445 = vadd.f32 %v3243, %v3413
        %v3446 = vadd.f32 %v3244, %v3414
        %v3447 = vadd.f32 %v3245, %v3415
        %v3448 = vadd.f32 %v3246, %v3416
        %v3449 = vadd.f32 %v3247, %v3417
        %v3450 = vadd.f32 %v3248, %v3418
        %v3451 = vadd.f32 %v3249, %v3419
        %v3452 = vadd.f32 %v3250, %v3420
        %v3453 = vadd.f32 %v3251, %v3421
        %v3454 = vadd.f32 %v3252, %v3422
        %v3455 = vadd.f32 %v3253, %v3423
        %v3456 = vadd.f32 %v3254, %v3424
        %v3457 = vadd.f32 %v3255, %v3425
        %v3458 = vadd.f32 %v3256, %v3426
        %v3459 = vadd.f32 %v3257, %v3427
        %v3460 = vadd.f32 %v3258, %v3428
        %v3461 = vadd.f32 %v3259, %v3429
        %v3462 = vadd.f32 %v3260, %v3430
        %v3463 = vadd.f32 %v3261, %v3431
        %v3464 = vadd.f32 %v3262, %v3432
        %v3465 = vadd.f32 %v3263, %v3433
        %v3466 = vadd.f32 %v3264, %v3434
        %v3467 = vadd.f32 %v3265, %v3435
        %v3468 = vadd.f32 %v3266, %v3436
        %v3469 = vadd.f32 %v3267, %v3437
        %v3470 = vadd.f32 %v3268, %v3438
        %v3471 = vadd.f32 %v3269, %v3439
        %v3472 = vadd.f32 %v3270, %v3440
        %v3473 = vadd.f32 %v3271, %v3441
        %v3474 = vadd.f32 %v3272, %v3442
        %v3475 = vadd.f32 %v3273, %v3443
        %v3476 = vadd.f32 %v3274, %v3444
        %s3477 = sld [smem:[#allocation12 + $0xf]]
        %3478 = vset.pattern.permute.xlu0 15
        %3479 = vperm.xlu0 %3478, %v411
        %v3480 = vpop.permute.xlu0 %3479
        %3482 = vset.pattern.permute.xlu0 15
        %3483 = vperm.xlu0 %3482, %v412
        %v3484 = vpop.permute.xlu0 %3483
        %3486 = vset.pattern.permute.xlu0 15
        %3487 = vperm.xlu0 %3486, %v413
        %v3488 = vpop.permute.xlu0 %3487
        %3490 = vset.pattern.permute.xlu0 15
        %3491 = vperm.xlu0 %3490, %v414
        %v3492 = vpop.permute.xlu0 %3491
        %3494 = vset.pattern.permute.xlu0 15
        %3495 = vperm.xlu0 %3494, %v415
        %v3496 = vpop.permute.xlu0 %3495
        %3498 = vset.pattern.permute.xlu0 15
        %3499 = vperm.xlu0 %3498, %v416
        %v3500 = vpop.permute.xlu0 %3499
        %3502 = vset.pattern.permute.xlu0 15
        %3503 = vperm.xlu0 %3502, %v417
        %v3504 = vpop.permute.xlu0 %3503
        %3506 = vset.pattern.permute.xlu0 15
        %3507 = vperm.xlu0 %3506, %v418
        %v3508 = vpop.permute.xlu0 %3507
        %3510 = vset.pattern.permute.xlu0 15
        %3511 = vperm.xlu0 %3510, %v419
        %v3512 = vpop.permute.xlu0 %3511
        %3514 = vset.pattern.permute.xlu0 15
        %3515 = vperm.xlu0 %3514, %v420
        %v3516 = vpop.permute.xlu0 %3515
        %3518 = vset.pattern.permute.xlu0 15
        %3519 = vperm.xlu0 %3518, %v421
        %v3520 = vpop.permute.xlu0 %3519
        %3522 = vset.pattern.permute.xlu0 15
        %3523 = vperm.xlu0 %3522, %v422
        %v3524 = vpop.permute.xlu0 %3523
        %3526 = vset.pattern.permute.xlu0 15
        %3527 = vperm.xlu0 %3526, %v423
        %v3528 = vpop.permute.xlu0 %3527
        %3530 = vset.pattern.permute.xlu0 15
        %3531 = vperm.xlu0 %3530, %v424
        %v3532 = vpop.permute.xlu0 %3531
        %3534 = vset.pattern.permute.xlu0 15
        %3535 = vperm.xlu0 %3534, %v425
        %v3536 = vpop.permute.xlu0 %3535
        %3538 = vset.pattern.permute.xlu0 15
        %3539 = vperm.xlu0 %3538, %v426
        %v3540 = vpop.permute.xlu0 %3539
        %v3542 = vlaneseq
        %v3543 = vshrl.u32 %v3542, 7
        %v3544 = vsub.s32 7, %v3543
        %v3545 = vrot.slane %v429, %v3544
        %v3546 = vlaneseq
        %v3547 = vshrl.u32 %v3546, 7
        %v3548 = vsub.s32 7, %v3547
        %v3549 = vrot.slane %v430, %v3548
        %v3550 = vsub.f32 %v3480, %v3545
        %v3551 = vsub.f32 %v3480, %v3549
        %v3552 = vsub.f32 %v3484, %v3545
        %v3553 = vsub.f32 %v3484, %v3549
        %v3554 = vsub.f32 %v3488, %v3545
        %v3555 = vsub.f32 %v3488, %v3549
        %v3556 = vsub.f32 %v3492, %v3545
        %v3557 = vsub.f32 %v3492, %v3549
        %v3558 = vsub.f32 %v3496, %v3545
        %v3559 = vsub.f32 %v3496, %v3549
        %v3560 = vsub.f32 %v3500, %v3545
        %v3561 = vsub.f32 %v3500, %v3549
        %v3562 = vsub.f32 %v3504, %v3545
        %v3563 = vsub.f32 %v3504, %v3549
        %v3564 = vsub.f32 %v3508, %v3545
        %v3565 = vsub.f32 %v3508, %v3549
        %v3566 = vsub.f32 %v3512, %v3545
        %v3567 = vsub.f32 %v3512, %v3549
        %v3568 = vsub.f32 %v3516, %v3545
        %v3569 = vsub.f32 %v3516, %v3549
        %v3570 = vsub.f32 %v3520, %v3545
        %v3571 = vsub.f32 %v3520, %v3549
        %v3572 = vsub.f32 %v3524, %v3545
        %v3573 = vsub.f32 %v3524, %v3549
        %v3574 = vsub.f32 %v3528, %v3545
        %v3575 = vsub.f32 %v3528, %v3549
        %v3576 = vsub.f32 %v3532, %v3545
        %v3577 = vsub.f32 %v3532, %v3549
        %v3578 = vsub.f32 %v3536, %v3545
        %v3579 = vsub.f32 %v3536, %v3549
        %v3580 = vsub.f32 %v3540, %v3545
        %v3581 = vsub.f32 %v3540, %v3549
        %v3582 = vand.u32 2147483647, %v3550
        %v3583 = vand.u32 2147483647, %v3551
        %v3584 = vand.u32 2147483647, %v3552
        %v3585 = vand.u32 2147483647, %v3553
        %v3586 = vand.u32 2147483647, %v3554
        %v3587 = vand.u32 2147483647, %v3555
        %v3588 = vand.u32 2147483647, %v3556
        %v3589 = vand.u32 2147483647, %v3557
        %v3590 = vand.u32 2147483647, %v3558
        %v3591 = vand.u32 2147483647, %v3559
        %v3592 = vand.u32 2147483647, %v3560
        %v3593 = vand.u32 2147483647, %v3561
        %v3594 = vand.u32 2147483647, %v3562
        %v3595 = vand.u32 2147483647, %v3563
        %v3596 = vand.u32 2147483647, %v3564
        %v3597 = vand.u32 2147483647, %v3565
        %v3598 = vand.u32 2147483647, %v3566
        %v3599 = vand.u32 2147483647, %v3567
        %v3600 = vand.u32 2147483647, %v3568
        %v3601 = vand.u32 2147483647, %v3569
        %v3602 = vand.u32 2147483647, %v3570
        %v3603 = vand.u32 2147483647, %v3571
        %v3604 = vand.u32 2147483647, %v3572
        %v3605 = vand.u32 2147483647, %v3573
        %v3606 = vand.u32 2147483647, %v3574
        %v3607 = vand.u32 2147483647, %v3575
        %v3608 = vand.u32 2147483647, %v3576
        %v3609 = vand.u32 2147483647, %v3577
        %v3610 = vand.u32 2147483647, %v3578
        %v3611 = vand.u32 2147483647, %v3579
        %v3612 = vand.u32 2147483647, %v3580
        %v3613 = vand.u32 2147483647, %v3581
        %v3614 = vstv %s3477
        %v3615 = vmul.f32 %v3614, %v3582
        %v3616 = vmul.f32 %v3614, %v3583
        %v3617 = vmul.f32 %v3614, %v3584
        %v3618 = vmul.f32 %v3614, %v3585
        %v3619 = vmul.f32 %v3614, %v3586
        %v3620 = vmul.f32 %v3614, %v3587
        %v3621 = vmul.f32 %v3614, %v3588
        %v3622 = vmul.f32 %v3614, %v3589
        %v3623 = vmul.f32 %v3614, %v3590
        %v3624 = vmul.f32 %v3614, %v3591
        %v3625 = vmul.f32 %v3614, %v3592
        %v3626 = vmul.f32 %v3614, %v3593
        %v3627 = vmul.f32 %v3614, %v3594
        %v3628 = vmul.f32 %v3614, %v3595
        %v3629 = vmul.f32 %v3614, %v3596
        %v3630 = vmul.f32 %v3614, %v3597
        %v3631 = vmul.f32 %v3614, %v3598
        %v3632 = vmul.f32 %v3614, %v3599
        %v3633 = vmul.f32 %v3614, %v3600
        %v3634 = vmul.f32 %v3614, %v3601
        %v3635 = vmul.f32 %v3614, %v3602
        %v3636 = vmul.f32 %v3614, %v3603
        %v3637 = vmul.f32 %v3614, %v3604
        %v3638 = vmul.f32 %v3614, %v3605
        %v3639 = vmul.f32 %v3614, %v3606
        %v3640 = vmul.f32 %v3614, %v3607
        %v3641 = vmul.f32 %v3614, %v3608
        %v3642 = vmul.f32 %v3614, %v3609
        %v3643 = vmul.f32 %v3614, %v3610
        %v3644 = vmul.f32 %v3614, %v3611
        %v3645 = vmul.f32 %v3614, %v3612
        %v3646 = vmul.f32 %v3614, %v3613
        %v3647 = vadd.f32 %v3445, %v3615
        %v3648 = vadd.f32 %v3446, %v3616
        %v3649 = vadd.f32 %v3447, %v3617
        %v3650 = vadd.f32 %v3448, %v3618
        %v3651 = vadd.f32 %v3449, %v3619
        %v3652 = vadd.f32 %v3450, %v3620
        %v3653 = vadd.f32 %v3451, %v3621
        %v3654 = vadd.f32 %v3452, %v3622
        %v3655 = vadd.f32 %v3453, %v3623
        %v3656 = vadd.f32 %v3454, %v3624
        %v3657 = vadd.f32 %v3455, %v3625
        %v3658 = vadd.f32 %v3456, %v3626
        %v3659 = vadd.f32 %v3457, %v3627
        %v3660 = vadd.f32 %v3458, %v3628
        %v3661 = vadd.f32 %v3459, %v3629
        %v3662 = vadd.f32 %v3460, %v3630
        %v3663 = vadd.f32 %v3461, %v3631
        %v3664 = vadd.f32 %v3462, %v3632
        %v3665 = vadd.f32 %v3463, %v3633
        %v3666 = vadd.f32 %v3464, %v3634
        %v3667 = vadd.f32 %v3465, %v3635
        %v3668 = vadd.f32 %v3466, %v3636
        %v3669 = vadd.f32 %v3467, %v3637
        %v3670 = vadd.f32 %v3468, %v3638
        %v3671 = vadd.f32 %v3469, %v3639
        %v3672 = vadd.f32 %v3470, %v3640
        %v3673 = vadd.f32 %v3471, %v3641
        %v3674 = vadd.f32 %v3472, %v3642
        %v3675 = vadd.f32 %v3473, %v3643
        %v3676 = vadd.f32 %v3474, %v3644
        %v3677 = vadd.f32 %v3475, %v3645
        %v3678 = vadd.f32 %v3476, %v3646
        %v3679 = vmax.f32 %v3647, 0.0
        %v3680 = vmax.f32 %v3648, 0.0
        %v3681 = vmax.f32 %v3649, 0.0
        %v3682 = vmax.f32 %v3650, 0.0
        %v3683 = vmax.f32 %v3651, 0.0
        %v3684 = vmax.f32 %v3652, 0.0
        %v3685 = vmax.f32 %v3653, 0.0
        %v3686 = vmax.f32 %v3654, 0.0
        %v3687 = vmax.f32 %v3655, 0.0
        %v3688 = vmax.f32 %v3656, 0.0
        %v3689 = vmax.f32 %v3657, 0.0
        %v3690 = vmax.f32 %v3658, 0.0
        %v3691 = vmax.f32 %v3659, 0.0
        %v3692 = vmax.f32 %v3660, 0.0
        %v3693 = vmax.f32 %v3661, 0.0
        %v3694 = vmax.f32 %v3662, 0.0
        %v3695 = vmax.f32 %v3663, 0.0
        %v3696 = vmax.f32 %v3664, 0.0
        %v3697 = vmax.f32 %v3665, 0.0
        %v3698 = vmax.f32 %v3666, 0.0
        %v3699 = vmax.f32 %v3667, 0.0
        %v3700 = vmax.f32 %v3668, 0.0
        %v3701 = vmax.f32 %v3669, 0.0
        %v3702 = vmax.f32 %v3670, 0.0
        %v3703 = vmax.f32 %v3671, 0.0
        %v3704 = vmax.f32 %v3672, 0.0
        %v3705 = vmax.f32 %v3673, 0.0
        %v3706 = vmax.f32 %v3674, 0.0
        %v3707 = vmax.f32 %v3675, 0.0
        %v3708 = vmax.f32 %v3676, 0.0
        %v3709 = vmax.f32 %v3677, 0.0
        %v3710 = vmax.f32 %v3678, 0.0
        %v3711 = vld [vmem:[%s354] sm:$0xff]
        %v3712 = vld [vmem:[%s354 + $0x8] sm:$0xff]
        %v3713 = vld [vmem:[%s354 + $0x10] sm:$0xff]
        %v3714 = vld [vmem:[%s354 + $0x18] sm:$0xff]
        %v3715 = vld [vmem:[%s354 + $0x20] sm:$0xff]
        %v3716 = vld [vmem:[%s354 + $0x28] sm:$0xff]
        %v3717 = vld [vmem:[%s354 + $0x30] sm:$0xff]
        %v3718 = vld [vmem:[%s354 + $0x38] sm:$0xff]
        %vm3719 = vnez %v3711
        %vm3720 = vnez %v3712
        %vm3721 = vnez %v3713
        %vm3722 = vnez %v3714
        %vm3723 = vnez %v3715
        %vm3724 = vnez %v3716
        %vm3725 = vnez %v3717
        %vm3726 = vnez %v3718
        %v3727 = vsel %vm3719, 16843009, 0
        %v3728 = vsel %vm3720, 16843009, 0
        %v3729 = vsel %vm3721, 16843009, 0
        %v3730 = vsel %vm3722, 16843009, 0
        %v3731 = vsel %vm3723, 16843009, 0
        %v3732 = vsel %vm3724, 16843009, 0
        %v3733 = vsel %vm3725, 16843009, 0
        %v3734 = vsel %vm3726, 16843009, 0
        %v3735 = vunpack.c.0.s8 %v3727
        %v3736 = vunpack.c.0.s8 %v3728
        %v3737 = vunpack.c.1.s8 %v3727
        %v3738 = vunpack.c.1.s8 %v3728
        %v3739 = vunpack.c.2.s8 %v3727
        %v3740 = vunpack.c.2.s8 %v3728
        %v3741 = vunpack.c.3.s8 %v3727
        %v3742 = vunpack.c.3.s8 %v3728
        %v3743 = vunpack.c.0.s8 %v3729
        %v3744 = vunpack.c.0.s8 %v3730
        %v3745 = vunpack.c.1.s8 %v3729
        %v3746 = vunpack.c.1.s8 %v3730
        %v3747 = vunpack.c.2.s8 %v3729
        %v3748 = vunpack.c.2.s8 %v3730
        %v3749 = vunpack.c.3.s8 %v3729
        %v3750 = vunpack.c.3.s8 %v3730
        %v3751 = vunpack.c.0.s8 %v3731
        %v3752 = vunpack.c.0.s8 %v3732
        %v3753 = vunpack.c.1.s8 %v3731
        %v3754 = vunpack.c.1.s8 %v3732
        %v3755 = vunpack.c.2.s8 %v3731
        %v3756 = vunpack.c.2.s8 %v3732
        %v3757 = vunpack.c.3.s8 %v3731
        %v3758 = vunpack.c.3.s8 %v3732
        %v3759 = vunpack.c.0.s8 %v3733
        %v3760 = vunpack.c.0.s8 %v3734
        %v3761 = vunpack.c.1.s8 %v3733
        %v3762 = vunpack.c.1.s8 %v3734
        %v3763 = vunpack.c.2.s8 %v3733
        %v3764 = vunpack.c.2.s8 %v3734
        %v3765 = vunpack.c.3.s8 %v3733
        %v3766 = vunpack.c.3.s8 %v3734
        %v3767 = vpack.c.b16 %v3736, %v3735
        %v3768 = vpack.c.b8 %v3767, %v3767
        %v3769 = vpack.c.b16 %v3738, %v3737
        %v3770 = vpack.c.b8 %v3769, %v3769
        %v3771 = vpack.c.b16 %v3740, %v3739
        %v3772 = vpack.c.b8 %v3771, %v3771
        %v3773 = vpack.c.b16 %v3742, %v3741
        %v3774 = vpack.c.b8 %v3773, %v3773
        %v3775 = vpack.c.b16 %v3744, %v3743
        %v3776 = vpack.c.b8 %v3775, %v3775
        %v3777 = vpack.c.b16 %v3746, %v3745
        %v3778 = vpack.c.b8 %v3777, %v3777
        %v3779 = vpack.c.b16 %v3748, %v3747
        %v3780 = vpack.c.b8 %v3779, %v3779
        %v3781 = vpack.c.b16 %v3750, %v3749
        %v3782 = vpack.c.b8 %v3781, %v3781
        %v3783 = vpack.c.b16 %v3752, %v3751
        %v3784 = vpack.c.b8 %v3783, %v3783
        %v3785 = vpack.c.b16 %v3754, %v3753
        %v3786 = vpack.c.b8 %v3785, %v3785
        %v3787 = vpack.c.b16 %v3756, %v3755
        %v3788 = vpack.c.b8 %v3787, %v3787
        %v3789 = vpack.c.b16 %v3758, %v3757
        %v3790 = vpack.c.b8 %v3789, %v3789
        %v3791 = vpack.c.b16 %v3760, %v3759
        %v3792 = vpack.c.b8 %v3791, %v3791
        %v3793 = vpack.c.b16 %v3762, %v3761
        %v3794 = vpack.c.b8 %v3793, %v3793
        %v3795 = vpack.c.b16 %v3764, %v3763
        %v3796 = vpack.c.b8 %v3795, %v3795
        %v3797 = vpack.c.b16 %v3766, %v3765
        %v3798 = vpack.c.b8 %v3797, %v3797
        %vm3799 = vnez %v3768
        %vm3800 = vnez %v3770
        %vm3801 = vnez %v3772
        %vm3802 = vnez %v3774
        %vm3803 = vnez %v3776
        %vm3804 = vnez %v3778
        %vm3805 = vnez %v3780
        %vm3806 = vnez %v3782
        %vm3807 = vnez %v3784
        %vm3808 = vnez %v3786
        %vm3809 = vnez %v3788
        %vm3810 = vnez %v3790
        %vm3811 = vnez %v3792
        %vm3812 = vnez %v3794
        %vm3813 = vnez %v3796
        %vm3814 = vnez %v3798
        %v3815 = vsel %vm3799, 16843009, 0
        %v3816 = vsel %vm3800, 16843009, 0
        %v3817 = vsel %vm3801, 16843009, 0
        %v3818 = vsel %vm3802, 16843009, 0
        %v3819 = vsel %vm3803, 16843009, 0
        %v3820 = vsel %vm3804, 16843009, 0
        %v3821 = vsel %vm3805, 16843009, 0
        %v3822 = vsel %vm3806, 16843009, 0
        %v3823 = vsel %vm3807, 16843009, 0
        %v3824 = vsel %vm3808, 16843009, 0
        %v3825 = vsel %vm3809, 16843009, 0
        %v3826 = vsel %vm3810, 16843009, 0
        %v3827 = vsel %vm3811, 16843009, 0
        %v3828 = vsel %vm3812, 16843009, 0
        %v3829 = vsel %vm3813, 16843009, 0
        %v3830 = vsel %vm3814, 16843009, 0
        %v3831 = vunpack.c.0.s8 %v3815
        %v3832 = vunpack.c.1.s8 %v3815
        %v3833 = vunpack.c.0.s8 %v3816
        %v3834 = vunpack.c.1.s8 %v3816
        %v3835 = vunpack.c.0.s8 %v3817
        %v3836 = vunpack.c.1.s8 %v3817
        %v3837 = vunpack.c.0.s8 %v3818
        %v3838 = vunpack.c.1.s8 %v3818
        %v3839 = vunpack.c.0.s8 %v3819
        %v3840 = vunpack.c.1.s8 %v3819
        %v3841 = vunpack.c.0.s8 %v3820
        %v3842 = vunpack.c.1.s8 %v3820
        %v3843 = vunpack.c.0.s8 %v3821
        %v3844 = vunpack.c.1.s8 %v3821
        %v3845 = vunpack.c.0.s8 %v3822
        %v3846 = vunpack.c.1.s8 %v3822
        %v3847 = vunpack.c.0.s8 %v3823
        %v3848 = vunpack.c.1.s8 %v3823
        %v3849 = vunpack.c.0.s8 %v3824
        %v3850 = vunpack.c.1.s8 %v3824
        %v3851 = vunpack.c.0.s8 %v3825
        %v3852 = vunpack.c.1.s8 %v3825
        %v3853 = vunpack.c.0.s8 %v3826
        %v3854 = vunpack.c.1.s8 %v3826
        %v3855 = vunpack.c.0.s8 %v3827
        %v3856 = vunpack.c.1.s8 %v3827
        %v3857 = vunpack.c.0.s8 %v3828
        %v3858 = vunpack.c.1.s8 %v3828
        %v3859 = vunpack.c.0.s8 %v3829
        %v3860 = vunpack.c.1.s8 %v3829
        %v3861 = vunpack.c.0.s8 %v3830
        %v3862 = vunpack.c.1.s8 %v3830
        %vm3863 = vcmp.ne.s32.totalorder %v3831, 0
        %vm3864 = vcmp.ne.s32.totalorder %v3832, 0
        %vm3865 = vcmp.ne.s32.totalorder %v3833, 0
        %vm3866 = vcmp.ne.s32.totalorder %v3834, 0
        %vm3867 = vcmp.ne.s32.totalorder %v3835, 0
        %vm3868 = vcmp.ne.s32.totalorder %v3836, 0
        %vm3869 = vcmp.ne.s32.totalorder %v3837, 0
        %vm3870 = vcmp.ne.s32.totalorder %v3838, 0
        %vm3871 = vcmp.ne.s32.totalorder %v3839, 0
        %vm3872 = vcmp.ne.s32.totalorder %v3840, 0
        %vm3873 = vcmp.ne.s32.totalorder %v3841, 0
        %vm3874 = vcmp.ne.s32.totalorder %v3842, 0
        %vm3875 = vcmp.ne.s32.totalorder %v3843, 0
        %vm3876 = vcmp.ne.s32.totalorder %v3844, 0
        %vm3877 = vcmp.ne.s32.totalorder %v3845, 0
        %vm3878 = vcmp.ne.s32.totalorder %v3846, 0
        %vm3879 = vcmp.ne.s32.totalorder %v3847, 0
        %vm3880 = vcmp.ne.s32.totalorder %v3848, 0
        %vm3881 = vcmp.ne.s32.totalorder %v3849, 0
        %vm3882 = vcmp.ne.s32.totalorder %v3850, 0
        %vm3883 = vcmp.ne.s32.totalorder %v3851, 0
        %vm3884 = vcmp.ne.s32.totalorder %v3852, 0
        %vm3885 = vcmp.ne.s32.totalorder %v3853, 0
        %vm3886 = vcmp.ne.s32.totalorder %v3854, 0
        %vm3887 = vcmp.ne.s32.totalorder %v3855, 0
        %vm3888 = vcmp.ne.s32.totalorder %v3856, 0
        %vm3889 = vcmp.ne.s32.totalorder %v3857, 0
        %vm3890 = vcmp.ne.s32.totalorder %v3858, 0
        %vm3891 = vcmp.ne.s32.totalorder %v3859, 0
        %vm3892 = vcmp.ne.s32.totalorder %v3860, 0
        %vm3893 = vcmp.ne.s32.totalorder %v3861, 0
        %vm3894 = vcmp.ne.s32.totalorder %v3862, 0
        %v3895 = vsel %vm3863, %v3679, -1e+30
        %v3896 = vsel %vm3864, %v3680, -1e+30
        %v3897 = vsel %vm3865, %v3681, -1e+30
        %v3898 = vsel %vm3866, %v3682, -1e+30
        %v3899 = vsel %vm3867, %v3683, -1e+30
        %v3900 = vsel %vm3868, %v3684, -1e+30
        %v3901 = vsel %vm3869, %v3685, -1e+30
        %v3902 = vsel %vm3870, %v3686, -1e+30
        %v3903 = vsel %vm3871, %v3687, -1e+30
        %v3904 = vsel %vm3872, %v3688, -1e+30
        %v3905 = vsel %vm3873, %v3689, -1e+30
        %v3906 = vsel %vm3874, %v3690, -1e+30
        %v3907 = vsel %vm3875, %v3691, -1e+30
        %v3908 = vsel %vm3876, %v3692, -1e+30
        %v3909 = vsel %vm3877, %v3693, -1e+30
        %v3910 = vsel %vm3878, %v3694, -1e+30
        %v3911 = vsel %vm3879, %v3695, -1e+30
        %v3912 = vsel %vm3880, %v3696, -1e+30
        %v3913 = vsel %vm3881, %v3697, -1e+30
        %v3914 = vsel %vm3882, %v3698, -1e+30
        %v3915 = vsel %vm3883, %v3699, -1e+30
        %v3916 = vsel %vm3884, %v3700, -1e+30
        %v3917 = vsel %vm3885, %v3701, -1e+30
        %v3918 = vsel %vm3886, %v3702, -1e+30
        %v3919 = vsel %vm3887, %v3703, -1e+30
        %v3920 = vsel %vm3888, %v3704, -1e+30
        %v3921 = vsel %vm3889, %v3705, -1e+30
        %v3922 = vsel %vm3890, %v3706, -1e+30
        %v3923 = vsel %vm3891, %v3707, -1e+30
        %v3924 = vsel %vm3892, %v3708, -1e+30
        %v3925 = vsel %vm3893, %v3709, -1e+30
        %v3926 = vsel %vm3894, %v3710, -1e+30
        %v3927 = vmax.f32 %v3895, %v3896
        %3928 = vmax.xlane.f32.xlu0 %v3927
        %v3929 = vpop.xlane.xlu0 %3928
        %v3930 = vmax.f32 %v3897, %v3898
        %3931 = vmax.xlane.f32.xlu0 %v3930
        %v3932 = vpop.xlane.xlu0 %3931
        %v3933 = vmax.f32 %v3899, %v3900
        %3934 = vmax.xlane.f32.xlu0 %v3933
        %v3935 = vpop.xlane.xlu0 %3934
        %v3936 = vmax.f32 %v3901, %v3902
        %3937 = vmax.xlane.f32.xlu0 %v3936
        %v3938 = vpop.xlane.xlu0 %3937
        %v3939 = vmax.f32 %v3903, %v3904
        %3940 = vmax.xlane.f32.xlu0 %v3939
        %v3941 = vpop.xlane.xlu0 %3940
        %v3942 = vmax.f32 %v3905, %v3906
        %3943 = vmax.xlane.f32.xlu0 %v3942
        %v3944 = vpop.xlane.xlu0 %3943
        %v3945 = vmax.f32 %v3907, %v3908
        %3946 = vmax.xlane.f32.xlu0 %v3945
        %v3947 = vpop.xlane.xlu0 %3946
        %v3948 = vmax.f32 %v3909, %v3910
        %3949 = vmax.xlane.f32.xlu0 %v3948
        %v3950 = vpop.xlane.xlu0 %3949
        %v3951 = vmax.f32 %v3911, %v3912
        %3952 = vmax.xlane.f32.xlu0 %v3951
        %v3953 = vpop.xlane.xlu0 %3952
        %v3954 = vmax.f32 %v3913, %v3914
        %3955 = vmax.xlane.f32.xlu0 %v3954
        %v3956 = vpop.xlane.xlu0 %3955
        %v3957 = vmax.f32 %v3915, %v3916
        %3958 = vmax.xlane.f32.xlu0 %v3957
        %v3959 = vpop.xlane.xlu0 %3958
        %v3960 = vmax.f32 %v3917, %v3918
        %3961 = vmax.xlane.f32.xlu0 %v3960
        %v3962 = vpop.xlane.xlu0 %3961
        %v3963 = vmax.f32 %v3919, %v3920
        %3964 = vmax.xlane.f32.xlu0 %v3963
        %v3965 = vpop.xlane.xlu0 %3964
        %v3966 = vmax.f32 %v3921, %v3922
        %3967 = vmax.xlane.f32.xlu0 %v3966
        %v3968 = vpop.xlane.xlu0 %3967
        %v3969 = vmax.f32 %v3923, %v3924
        %3970 = vmax.xlane.f32.xlu0 %v3969
        %v3971 = vpop.xlane.xlu0 %3970
        %v3972 = vmax.f32 %v3925, %v3926
        %3973 = vmax.xlane.f32.xlu0 %v3972
        %v3974 = vpop.xlane.xlu0 %3973
        %v3975 = vsub.f32 %v3895, %v3929
        %v3976 = vsub.f32 %v3896, %v3929
        %v3977 = vsub.f32 %v3897, %v3932
        %v3978 = vsub.f32 %v3898, %v3932
        %v3979 = vsub.f32 %v3899, %v3935
        %v3980 = vsub.f32 %v3900, %v3935
        %v3981 = vsub.f32 %v3901, %v3938
        %v3982 = vsub.f32 %v3902, %v3938
        %v3983 = vsub.f32 %v3903, %v3941
        %v3984 = vsub.f32 %v3904, %v3941
        %v3985 = vsub.f32 %v3905, %v3944
        %v3986 = vsub.f32 %v3906, %v3944
        %v3987 = vsub.f32 %v3907, %v3947
        %v3988 = vsub.f32 %v3908, %v3947
        %v3989 = vsub.f32 %v3909, %v3950
        %v3990 = vsub.f32 %v3910, %v3950
        %v3991 = vsub.f32 %v3911, %v3953
        %v3992 = vsub.f32 %v3912, %v3953
        %v3993 = vsub.f32 %v3913, %v3956
        %v3994 = vsub.f32 %v3914, %v3956
        %v3995 = vsub.f32 %v3915, %v3959
        %v3996 = vsub.f32 %v3916, %v3959
        %v3997 = vsub.f32 %v3917, %v3962
        %v3998 = vsub.f32 %v3918, %v3962
        %v3999 = vsub.f32 %v3919, %v3965
        %v4000 = vsub.f32 %v3920, %v3965
        %v4001 = vsub.f32 %v3921, %v3968
        %v4002 = vsub.f32 %v3922, %v3968
        %v4003 = vsub.f32 %v3923, %v3971
        %v4004 = vsub.f32 %v3924, %v3971
        %v4005 = vsub.f32 %v3925, %v3974
        %v4006 = vsub.f32 %v3926, %v3974
        %v4007 = vmul.f32 %v3975, 1.442695
        %v4008 = vpow.pop %v4007
        %v4009 = vmul.f32 %v3976, 1.442695
        %v4010 = vpow.pop %v4009
        %v4011 = vmul.f32 %v3977, 1.442695
        %v4012 = vpow.pop %v4011
        %v4013 = vmul.f32 %v3978, 1.442695
        %v4014 = vpow.pop %v4013
        %v4015 = vmul.f32 %v3979, 1.442695
        %v4016 = vpow.pop %v4015
        %v4017 = vmul.f32 %v3980, 1.442695
        %v4018 = vpow.pop %v4017
        %v4019 = vmul.f32 %v3981, 1.442695
        %v4020 = vpow.pop %v4019
        %v4021 = vmul.f32 %v3982, 1.442695
        %v4022 = vpow.pop %v4021
        %v4023 = vmul.f32 %v3983, 1.442695
        %v4024 = vpow.pop %v4023
        %v4025 = vmul.f32 %v3984, 1.442695
        %v4026 = vpow.pop %v4025
        %v4027 = vmul.f32 %v3985, 1.442695
        %v4028 = vpow.pop %v4027
        %v4029 = vmul.f32 %v3986, 1.442695
        %v4030 = vpow.pop %v4029
        %v4031 = vmul.f32 %v3987, 1.442695
        %v4032 = vpow.pop %v4031
        %v4033 = vmul.f32 %v3988, 1.442695
        %v4034 = vpow.pop %v4033
        %v4035 = vmul.f32 %v3989, 1.442695
        %v4036 = vpow.pop %v4035
        %v4037 = vmul.f32 %v3990, 1.442695
        %v4038 = vpow.pop %v4037
        %v4039 = vmul.f32 %v3991, 1.442695
        %v4040 = vpow.pop %v4039
        %v4041 = vmul.f32 %v3992, 1.442695
        %v4042 = vpow.pop %v4041
        %v4043 = vmul.f32 %v3993, 1.442695
        %v4044 = vpow.pop %v4043
        %v4045 = vmul.f32 %v3994, 1.442695
        %v4046 = vpow.pop %v4045
        %v4047 = vmul.f32 %v3995, 1.442695
        %v4048 = vpow.pop %v4047
        %v4049 = vmul.f32 %v3996, 1.442695
        %v4050 = vpow.pop %v4049
        %v4051 = vmul.f32 %v3997, 1.442695
        %v4052 = vpow.pop %v4051
        %v4053 = vmul.f32 %v3998, 1.442695
        %v4054 = vpow.pop %v4053
        %v4055 = vmul.f32 %v3999, 1.442695
        %v4056 = vpow.pop %v4055
        %v4057 = vmul.f32 %v4000, 1.442695
        %v4058 = vpow.pop %v4057
        %v4059 = vmul.f32 %v4001, 1.442695
        %v4060 = vpow.pop %v4059
        %v4061 = vmul.f32 %v4002, 1.442695
        %v4062 = vpow.pop %v4061
        %v4063 = vmul.f32 %v4003, 1.442695
        %v4064 = vpow.pop %v4063
        %v4065 = vmul.f32 %v4004, 1.442695
        %v4066 = vpow.pop %v4065
        %v4067 = vmul.f32 %v4005, 1.442695
        %v4068 = vpow.pop %v4067
        %v4069 = vmul.f32 %v4006, 1.442695
        %v4070 = vpow.pop %v4069
        %v4071 = vsel %vm3863, %v4008, 0.0
        %v4072 = vsel %vm3864, %v4010, 0.0
        %v4073 = vsel %vm3865, %v4012, 0.0
        %v4074 = vsel %vm3866, %v4014, 0.0
        %v4075 = vsel %vm3867, %v4016, 0.0
        %v4076 = vsel %vm3868, %v4018, 0.0
        %v4077 = vsel %vm3869, %v4020, 0.0
        %v4078 = vsel %vm3870, %v4022, 0.0
        %v4079 = vsel %vm3871, %v4024, 0.0
        %v4080 = vsel %vm3872, %v4026, 0.0
        %v4081 = vsel %vm3873, %v4028, 0.0
        %v4082 = vsel %vm3874, %v4030, 0.0
        %v4083 = vsel %vm3875, %v4032, 0.0
        %v4084 = vsel %vm3876, %v4034, 0.0
        %v4085 = vsel %vm3877, %v4036, 0.0
        %v4086 = vsel %vm3878, %v4038, 0.0
        %v4087 = vsel %vm3879, %v4040, 0.0
        %v4088 = vsel %vm3880, %v4042, 0.0
        %v4089 = vsel %vm3881, %v4044, 0.0
        %v4090 = vsel %vm3882, %v4046, 0.0
        %v4091 = vsel %vm3883, %v4048, 0.0
        %v4092 = vsel %vm3884, %v4050, 0.0
        %v4093 = vsel %vm3885, %v4052, 0.0
        %v4094 = vsel %vm3886, %v4054, 0.0
        %v4095 = vsel %vm3887, %v4056, 0.0
        %v4096 = vsel %vm3888, %v4058, 0.0
        %v4097 = vsel %vm3889, %v4060, 0.0
        %v4098 = vsel %vm3890, %v4062, 0.0
        %v4099 = vsel %vm3891, %v4064, 0.0
        %v4100 = vsel %vm3892, %v4066, 0.0
        %v4101 = vsel %vm3893, %v4068, 0.0
        %v4102 = vsel %vm3894, %v4070, 0.0
        %v4103 = vadd.f32 %v4071, %v4072
        %4104 = vadd.xlane.f32.xlu0 %v4103
        %v4105 = vpop.xlane.xlu0 %4104
        %v4106 = vadd.f32 %v4073, %v4074
        %4107 = vadd.xlane.f32.xlu0 %v4106
        %v4108 = vpop.xlane.xlu0 %4107
        %v4109 = vadd.f32 %v4075, %v4076
        %4110 = vadd.xlane.f32.xlu0 %v4109
        %v4111 = vpop.xlane.xlu0 %4110
        %v4112 = vadd.f32 %v4077, %v4078
        %4113 = vadd.xlane.f32.xlu0 %v4112
        %v4114 = vpop.xlane.xlu0 %4113
        %v4115 = vadd.f32 %v4079, %v4080
        %4116 = vadd.xlane.f32.xlu0 %v4115
        %v4117 = vpop.xlane.xlu0 %4116
        %v4118 = vadd.f32 %v4081, %v4082
        %4119 = vadd.xlane.f32.xlu0 %v4118
        %v4120 = vpop.xlane.xlu0 %4119
        %v4121 = vadd.f32 %v4083, %v4084
        %4122 = vadd.xlane.f32.xlu0 %v4121
        %v4123 = vpop.xlane.xlu0 %4122
        %v4124 = vadd.f32 %v4085, %v4086
        %4125 = vadd.xlane.f32.xlu0 %v4124
        %v4126 = vpop.xlane.xlu0 %4125
        %v4127 = vadd.f32 %v4087, %v4088
        %4128 = vadd.xlane.f32.xlu0 %v4127
        %v4129 = vpop.xlane.xlu0 %4128
        %v4130 = vadd.f32 %v4089, %v4090
        %4131 = vadd.xlane.f32.xlu0 %v4130
        %v4132 = vpop.xlane.xlu0 %4131
        %v4133 = vadd.f32 %v4091, %v4092
        %4134 = vadd.xlane.f32.xlu0 %v4133
        %v4135 = vpop.xlane.xlu0 %4134
        %v4136 = vadd.f32 %v4093, %v4094
        %4137 = vadd.xlane.f32.xlu0 %v4136
        %v4138 = vpop.xlane.xlu0 %4137
        %v4139 = vadd.f32 %v4095, %v4096
        %4140 = vadd.xlane.f32.xlu0 %v4139
        %v4141 = vpop.xlane.xlu0 %4140
        %v4142 = vadd.f32 %v4097, %v4098
        %4143 = vadd.xlane.f32.xlu0 %v4142
        %v4144 = vpop.xlane.xlu0 %4143
        %v4145 = vadd.f32 %v4099, %v4100
        %4146 = vadd.xlane.f32.xlu0 %v4145
        %v4147 = vpop.xlane.xlu0 %4146
        %v4148 = vadd.f32 %v4101, %v4102
        %4149 = vadd.xlane.f32.xlu0 %v4148
        %v4150 = vpop.xlane.xlu0 %4149
        %v4151 = vmax.f32 %v4105, 1e-30
        %v4152 = vmax.f32 %v4108, 1e-30
        %v4153 = vmax.f32 %v4111, 1e-30
        %v4154 = vmax.f32 %v4114, 1e-30
        %v4155 = vmax.f32 %v4117, 1e-30
        %v4156 = vmax.f32 %v4120, 1e-30
        %v4157 = vmax.f32 %v4123, 1e-30
        %v4158 = vmax.f32 %v4126, 1e-30
        %v4159 = vmax.f32 %v4129, 1e-30
        %v4160 = vmax.f32 %v4132, 1e-30
        %v4161 = vmax.f32 %v4135, 1e-30
        %v4162 = vmax.f32 %v4138, 1e-30
        %v4163 = vmax.f32 %v4141, 1e-30
        %v4164 = vmax.f32 %v4144, 1e-30
        %v4165 = vmax.f32 %v4147, 1e-30
        %v4166 = vmax.f32 %v4150, 1e-30
        %v4167 = vrcp.pop %v4151
        %v4168 = vrcp.pop %v4152
        %v4169 = vrcp.pop %v4153
        %v4170 = vrcp.pop %v4154
        %v4171 = vrcp.pop %v4155
        %v4172 = vrcp.pop %v4156
        %v4173 = vrcp.pop %v4157
        %v4174 = vrcp.pop %v4158
        %v4175 = vrcp.pop %v4159
        %v4176 = vrcp.pop %v4160
        %v4177 = vrcp.pop %v4161
        %v4178 = vrcp.pop %v4162
        %v4179 = vrcp.pop %v4163
        %v4180 = vrcp.pop %v4164
        %v4181 = vrcp.pop %v4165
        %v4182 = vrcp.pop %v4166
        %v4183 = vmul.f32 %v4071, %v4167
        %v4184 = vmul.f32 %v4072, %v4167
        %v4185 = vmul.f32 %v4073, %v4168
        %v4186 = vmul.f32 %v4074, %v4168
        %v4187 = vmul.f32 %v4075, %v4169
        %v4188 = vmul.f32 %v4076, %v4169
        %v4189 = vmul.f32 %v4077, %v4170
        %v4190 = vmul.f32 %v4078, %v4170
        %v4191 = vmul.f32 %v4079, %v4171
        %v4192 = vmul.f32 %v4080, %v4171
        %v4193 = vmul.f32 %v4081, %v4172
        %v4194 = vmul.f32 %v4082, %v4172
        %v4195 = vmul.f32 %v4083, %v4173
        %v4196 = vmul.f32 %v4084, %v4173
        %v4197 = vmul.f32 %v4085, %v4174
        %v4198 = vmul.f32 %v4086, %v4174
        %v4199 = vmul.f32 %v4087, %v4175
        %v4200 = vmul.f32 %v4088, %v4175
        %v4201 = vmul.f32 %v4089, %v4176
        %v4202 = vmul.f32 %v4090, %v4176
        %v4203 = vmul.f32 %v4091, %v4177
        %v4204 = vmul.f32 %v4092, %v4177
        %v4205 = vmul.f32 %v4093, %v4178
        %v4206 = vmul.f32 %v4094, %v4178
        %v4207 = vmul.f32 %v4095, %v4179
        %v4208 = vmul.f32 %v4096, %v4179
        %v4209 = vmul.f32 %v4097, %v4180
        %v4210 = vmul.f32 %v4098, %v4180
        %v4211 = vmul.f32 %v4099, %v4181
        %v4212 = vmul.f32 %v4100, %v4181
        %v4213 = vmul.f32 %v4101, %v4182
        %v4214 = vmul.f32 %v4102, %v4182
        %v4215 = vpack.c.bf16 %v4185, %v4183
        %v4216 = vpack.c.bf16 %v4186, %v4184
        %v4217 = vpack.c.bf16 %v4189, %v4187
        %v4218 = vpack.c.bf16 %v4190, %v4188
        %v4219 = vpack.c.bf16 %v4193, %v4191
        %v4220 = vpack.c.bf16 %v4194, %v4192
        %v4221 = vpack.c.bf16 %v4197, %v4195
        %v4222 = vpack.c.bf16 %v4198, %v4196
        %v4223 = vpack.c.bf16 %v4201, %v4199
        %v4224 = vpack.c.bf16 %v4202, %v4200
        %v4225 = vpack.c.bf16 %v4205, %v4203
        %v4226 = vpack.c.bf16 %v4206, %v4204
        %v4227 = vpack.c.bf16 %v4209, %v4207
        %v4228 = vpack.c.bf16 %v4210, %v4208
        %v4229 = vpack.c.bf16 %v4213, %v4211
        %v4230 = vpack.c.bf16 %v4214, %v4212
        %v4247 = vunpack.c.l.b16 %v4215
        %v4248 = vunpack.c.l.b16 %v4216
        %v4249 = vunpack.c.h.b16 %v4215
        %v4250 = vunpack.c.h.b16 %v4216
        %v4251 = vunpack.c.l.b16 %v4217
        %v4252 = vunpack.c.l.b16 %v4218
        %v4253 = vunpack.c.h.b16 %v4217
        %v4254 = vunpack.c.h.b16 %v4218
        %v4255 = vunpack.c.l.b16 %v4219
        %v4256 = vunpack.c.l.b16 %v4220
        %v4257 = vunpack.c.h.b16 %v4219
        %v4258 = vunpack.c.h.b16 %v4220
        %v4259 = vunpack.c.l.b16 %v4221
        %v4260 = vunpack.c.l.b16 %v4222
        %v4261 = vunpack.c.h.b16 %v4221
        %v4262 = vunpack.c.h.b16 %v4222
        %v4263 = vunpack.c.l.b16 %v4223
        %v4264 = vunpack.c.l.b16 %v4224
        %v4265 = vunpack.c.h.b16 %v4223
        %v4266 = vunpack.c.h.b16 %v4224
        %v4267 = vunpack.c.l.b16 %v4225
        %v4268 = vunpack.c.l.b16 %v4226
        %v4269 = vunpack.c.h.b16 %v4225
        %v4270 = vunpack.c.h.b16 %v4226
        %v4271 = vunpack.c.l.b16 %v4227
        %v4272 = vunpack.c.l.b16 %v4228
        %v4273 = vunpack.c.h.b16 %v4227
        %v4274 = vunpack.c.h.b16 %v4228
        %v4275 = vunpack.c.l.b16 %v4229
        %v4276 = vunpack.c.l.b16 %v4230
        %v4277 = vunpack.c.h.b16 %v4229
        %v4278 = vunpack.c.h.b16 %v4230
        %v4279 = vpack.c.b16 %v4248, %v4247
        %v4280 = vpack.c.b16 %v4250, %v4249
        %v4281 = vpack.c.b16 %v4252, %v4251
        %v4282 = vpack.c.b16 %v4254, %v4253
        %v4283 = vpack.c.b16 %v4256, %v4255
        %v4284 = vpack.c.b16 %v4258, %v4257
        %v4285 = vpack.c.b16 %v4260, %v4259
        %v4286 = vpack.c.b16 %v4262, %v4261
        %v4287 = vpack.c.b16 %v4264, %v4263
        %v4288 = vpack.c.b16 %v4266, %v4265
        %v4289 = vpack.c.b16 %v4268, %v4267
        %v4290 = vpack.c.b16 %v4270, %v4269
        %v4291 = vpack.c.b16 %v4272, %v4271
        %v4292 = vpack.c.b16 %v4274, %v4273
        %v4293 = vpack.c.b16 %v4276, %v4275
        %v4294 = vpack.c.b16 %v4278, %v4277
        %4311 = vst [vmem:[%s396] sm:$0xff] %v4279
        %4312 = vst [vmem:[%s396 + $0x8] sm:$0xff] %v4280
        %4313 = vst [vmem:[%s396 + $0x10] sm:$0xff] %v4281
        %4314 = vst [vmem:[%s396 + $0x18] sm:$0xff] %v4282
        %4315 = vst [vmem:[%s396 + $0x20] sm:$0xff] %v4283
        %4316 = vst [vmem:[%s396 + $0x28] sm:$0xff] %v4284
        %4317 = vst [vmem:[%s396 + $0x30] sm:$0xff] %v4285
        %4318 = vst [vmem:[%s396 + $0x38] sm:$0xff] %v4286
        %4319 = vst [vmem:[%s396 + $0x40] sm:$0xff] %v4287
        %4320 = vst [vmem:[%s396 + $0x48] sm:$0xff] %v4288
        %4321 = vst [vmem:[%s396 + $0x50] sm:$0xff] %v4289
        %4322 = vst [vmem:[%s396 + $0x58] sm:$0xff] %v4290
        %4323 = vst [vmem:[%s396 + $0x60] sm:$0xff] %v4291
        %4324 = vst [vmem:[%s396 + $0x68] sm:$0xff] %v4292
        %4325 = vst [vmem:[%s396 + $0x70] sm:$0xff] %v4293
        %4326 = vst [vmem:[%s396 + $0x78] sm:$0xff] %v4294
        %v4327 = vld [vmem:[#allocation8] sm:$0xf]
        %v4328 = vld [vmem:[#allocation8 + $0x4] sm:$0xf]
        %v4329 = vld [vmem:[#allocation8 + $0x8] sm:$0xf]
        %v4330 = vld [vmem:[#allocation8 + $0xc] sm:$0xf]
        %v4331 = vld [vmem:[#allocation8 + $0x10] sm:$0xf]
        %v4332 = vld [vmem:[#allocation8 + $0x14] sm:$0xf]
        %v4333 = vld [vmem:[#allocation8 + $0x18] sm:$0xf]
        %v4334 = vld [vmem:[#allocation8 + $0x1c] sm:$0xf]
        %v4335 = vld [vmem:[#allocation8 + $0x20] sm:$0xf]
        %v4336 = vld [vmem:[#allocation8 + $0x24] sm:$0xf]
        %v4337 = vld [vmem:[#allocation8 + $0x28] sm:$0xf]
        %v4338 = vld [vmem:[#allocation8 + $0x2c] sm:$0xf]
        %v4339 = vld [vmem:[#allocation8 + $0x30] sm:$0xf]
        %v4340 = vld [vmem:[#allocation8 + $0x34] sm:$0xf]
        %v4341 = vld [vmem:[#allocation8 + $0x38] sm:$0xf]
        %v4342 = vld [vmem:[#allocation8 + $0x3c] sm:$0xf]
        %v4343 = vld [vmem:[#allocation8 + $0x40] sm:$0xf]
        %v4344 = vld [vmem:[#allocation8 + $0x44] sm:$0xf]
        %v4345 = vld [vmem:[#allocation8 + $0x48] sm:$0xf]
        %v4346 = vld [vmem:[#allocation8 + $0x4c] sm:$0xf]
        %v4347 = vld [vmem:[#allocation8 + $0x50] sm:$0xf]
        %v4348 = vld [vmem:[#allocation8 + $0x54] sm:$0xf]
        %v4349 = vld [vmem:[#allocation8 + $0x58] sm:$0xf]
        %v4350 = vld [vmem:[#allocation8 + $0x5c] sm:$0xf]
        %v4351 = vld [vmem:[#allocation8 + $0x60] sm:$0xf]
        %v4352 = vld [vmem:[#allocation8 + $0x64] sm:$0xf]
        %v4353 = vld [vmem:[#allocation8 + $0x68] sm:$0xf]
        %v4354 = vld [vmem:[#allocation8 + $0x6c] sm:$0xf]
        %v4355 = vld [vmem:[#allocation8 + $0x70] sm:$0xf]
        %v4356 = vld [vmem:[#allocation8 + $0x74] sm:$0xf]
        %v4357 = vld [vmem:[#allocation8 + $0x78] sm:$0xf]
        %v4358 = vld [vmem:[#allocation8 + $0x7c] sm:$0xf]
        %v4391 = vunpack.c.l.b16 %v4327
        %v4392 = vunpack.c.l.b16 %v4328
        %v4393 = vunpack.c.l.b16 %v4329
        %v4394 = vunpack.c.l.b16 %v4330
        %v4395 = vunpack.c.l.b16 %v4331
        %v4396 = vunpack.c.l.b16 %v4332
        %v4397 = vunpack.c.l.b16 %v4333
        %v4398 = vunpack.c.l.b16 %v4334
        %v4399 = vunpack.c.l.b16 %v4335
        %v4400 = vunpack.c.l.b16 %v4336
        %v4401 = vunpack.c.l.b16 %v4337
        %v4402 = vunpack.c.l.b16 %v4338
        %v4403 = vunpack.c.l.b16 %v4339
        %v4404 = vunpack.c.l.b16 %v4340
        %v4405 = vunpack.c.l.b16 %v4341
        %v4406 = vunpack.c.l.b16 %v4342
        %v4407 = vunpack.c.l.b16 %v4343
        %v4408 = vunpack.c.l.b16 %v4344
        %v4409 = vunpack.c.l.b16 %v4345
        %v4410 = vunpack.c.l.b16 %v4346
        %v4411 = vunpack.c.l.b16 %v4347
        %v4412 = vunpack.c.l.b16 %v4348
        %v4413 = vunpack.c.l.b16 %v4349
        %v4414 = vunpack.c.l.b16 %v4350
        %v4415 = vunpack.c.l.b16 %v4351
        %v4416 = vunpack.c.l.b16 %v4352
        %v4417 = vunpack.c.l.b16 %v4353
        %v4418 = vunpack.c.l.b16 %v4354
        %v4419 = vunpack.c.l.b16 %v4355
        %v4420 = vunpack.c.l.b16 %v4356
        %v4421 = vunpack.c.l.b16 %v4357
        %v4422 = vunpack.c.l.b16 %v4358
        %v4423 = vpack.c.b16 %v4392, %v4391
        %v4424 = vpack.c.b16 %v4394, %v4393
        %v4425 = vpack.c.b16 %v4396, %v4395
        %v4426 = vpack.c.b16 %v4398, %v4397
        %v4427 = vpack.c.b16 %v4400, %v4399
        %v4428 = vpack.c.b16 %v4402, %v4401
        %v4429 = vpack.c.b16 %v4404, %v4403
        %v4430 = vpack.c.b16 %v4406, %v4405
        %v4431 = vpack.c.b16 %v4408, %v4407
        %v4432 = vpack.c.b16 %v4410, %v4409
        %v4433 = vpack.c.b16 %v4412, %v4411
        %v4434 = vpack.c.b16 %v4414, %v4413
        %v4435 = vpack.c.b16 %v4416, %v4415
        %v4436 = vpack.c.b16 %v4418, %v4417
        %v4437 = vpack.c.b16 %v4420, %v4419
        %v4438 = vpack.c.b16 %v4422, %v4421
        %4455 = vmatprep.subr.bf16.mxu0 0
        %4456 = vmatpush1.bf16.msra.mxu0 %v4423
        %4457 = vmatprep.subr.bf16.mxu0 0
        %4458 = vmatpush1.bf16.msra.mxu0 %v4424
        %4459 = vmatprep.subr.bf16.mxu0 0
        %4460 = vmatpush1.bf16.msra.mxu0 %v4425
        %4461 = vmatprep.subr.bf16.mxu0 0
        %4462 = vmatpush1.bf16.msra.mxu0 %v4426
        %4463 = vmatprep.subr.bf16.mxu0 0
        %4464 = vmatpush1.bf16.msra.mxu0 %v4427
        %4465 = vmatprep.subr.bf16.mxu0 0
        %4466 = vmatpush1.bf16.msra.mxu0 %v4428
        %4467 = vmatprep.subr.bf16.mxu0 0
        %4468 = vmatpush1.bf16.msra.mxu0 %v4429
        %4469 = vmatprep.subr.bf16.mxu0 0
        %4470 = vmatpush1.bf16.msra.mxu0 %v4430
        %4471 = vmatprep.subr.bf16.mxu0 0
        %4472 = vmatpush1.bf16.msra.mxu0 %v4431
        %4473 = vmatprep.subr.bf16.mxu0 0
        %4474 = vmatpush1.bf16.msra.mxu0 %v4432
        %4475 = vmatprep.subr.bf16.mxu0 0
        %4476 = vmatpush1.bf16.msra.mxu0 %v4433
        %4477 = vmatprep.subr.bf16.mxu0 0
        %4478 = vmatpush1.bf16.msra.mxu0 %v4434
        %4479 = vmatprep.subr.bf16.mxu0 0
        %4480 = vmatpush1.bf16.msra.mxu0 %v4435
        %4481 = vmatprep.subr.bf16.mxu0 0
        %4482 = vmatpush1.bf16.msra.mxu0 %v4436
        %4483 = vmatprep.subr.bf16.mxu0 0
        %4484 = vmatpush1.bf16.msra.mxu0 %v4437
        %4485 = vmatprep.subr.bf16.mxu0 0
        %4486 = vmatpush1.bf16.msra.mxu0 %v4438
        %4487 = vmatprep.mubr.bf16.mxu0 %v4216
        %4488 = vmatmul.mubr.bf16.gmra.mrb[0].mxu0 %v4215
        %v4489 = vpop.f32.mrb[0].mxu0
        %v4490 = vadd.f32 0.0, %v4489
        %v4491 = vpop.f32.mrb[0].mxu0
        %v4492 = vpop.f32.mrb[0].mxu0
        %v4493 = vadd.f32 0.0, %v4492
        %v4494 = vpop.f32.mrb[0].mxu0
        %4495 = vmatprep.mubr.bf16.mxu0 %v4218
        %4496 = vmatmul.mubr.bf16.gmra.mrb[0].mxu0 %v4217
        %v4497 = vpop.f32.mrb[0].mxu0
        %v4498 = vadd.f32 0.0, %v4497
        %v4499 = vpop.f32.mrb[0].mxu0
        %v4500 = vpop.f32.mrb[0].mxu0
        %v4501 = vadd.f32 0.0, %v4500
        %v4502 = vpop.f32.mrb[0].mxu0
        %4503 = vmatprep.mubr.bf16.mxu0 %v4220
        %4504 = vmatmul.mubr.bf16.gmra.mrb[0].mxu0 %v4219
        %v4505 = vpop.f32.mrb[0].mxu0
        %v4506 = vadd.f32 0.0, %v4505
        %v4507 = vpop.f32.mrb[0].mxu0
        %v4508 = vpop.f32.mrb[0].mxu0
        %v4509 = vadd.f32 0.0, %v4508
        %v4510 = vpop.f32.mrb[0].mxu0
        %4511 = vmatprep.mubr.bf16.mxu0 %v4222
        %4512 = vmatmul.mubr.bf16.gmra.mrb[0].mxu0 %v4221
        %v4513 = vpop.f32.mrb[0].mxu0
        %v4514 = vadd.f32 0.0, %v4513
        %v4515 = vpop.f32.mrb[0].mxu0
        %v4516 = vpop.f32.mrb[0].mxu0
        %v4517 = vadd.f32 0.0, %v4516
        %v4518 = vpop.f32.mrb[0].mxu0
        %4519 = vmatprep.mubr.bf16.mxu0 %v4224
        %4520 = vmatmul.mubr.bf16.gmra.mrb[0].mxu0 %v4223
        %v4521 = vpop.f32.mrb[0].mxu0
        %v4522 = vadd.f32 0.0, %v4521
        %v4523 = vpop.f32.mrb[0].mxu0
        %v4524 = vpop.f32.mrb[0].mxu0
        %v4525 = vadd.f32 0.0, %v4524
        %v4526 = vpop.f32.mrb[0].mxu0
        %4527 = vmatprep.mubr.bf16.mxu0 %v4226
        %4528 = vmatmul.mubr.bf16.gmra.mrb[0].mxu0 %v4225
        %v4529 = vpop.f32.mrb[0].mxu0
        %v4530 = vadd.f32 0.0, %v4529
        %v4531 = vpop.f32.mrb[0].mxu0
        %v4532 = vpop.f32.mrb[0].mxu0
        %v4533 = vadd.f32 0.0, %v4532
        %v4534 = vpop.f32.mrb[0].mxu0
        %4535 = vmatprep.mubr.bf16.mxu0 %v4228
        %4536 = vmatmul.mubr.bf16.gmra.mrb[0].mxu0 %v4227
        %v4537 = vpop.f32.mrb[0].mxu0
        %v4538 = vadd.f32 0.0, %v4537
        %v4539 = vpop.f32.mrb[0].mxu0
        %v4540 = vpop.f32.mrb[0].mxu0
        %v4541 = vadd.f32 0.0, %v4540
        %v4542 = vpop.f32.mrb[0].mxu0
        %4543 = vmatprep.mubr.bf16.mxu0 %v4230
        %4544 = vmatmul.mubr.bf16.gmra.mrb[0].mxu0 %v4229
        %v4545 = vpop.f32.mrb[0].mxu0
        %v4546 = vadd.f32 0.0, %v4545
        %v4547 = vpop.f32.mrb[0].mxu0
        %v4548 = vpop.f32.mrb[0].mxu0
        %v4549 = vadd.f32 0.0, %v4548
        %v4550 = vpop.f32.mrb[0].mxu0
        %4551 = vdwg.mxu0
        %v4552 = vmax.f32 %v4490, 0.0
        %v4553 = vmax.f32 %v4493, 0.0
        %v4554 = vmax.f32 %v4498, 0.0
        %v4555 = vmax.f32 %v4501, 0.0
        %v4556 = vmax.f32 %v4506, 0.0
        %v4557 = vmax.f32 %v4509, 0.0
        %v4558 = vmax.f32 %v4514, 0.0
        %v4559 = vmax.f32 %v4517, 0.0
        %v4560 = vmax.f32 %v4522, 0.0
        %v4561 = vmax.f32 %v4525, 0.0
        %v4562 = vmax.f32 %v4530, 0.0
        %v4563 = vmax.f32 %v4533, 0.0
        %v4564 = vmax.f32 %v4538, 0.0
        %v4565 = vmax.f32 %v4541, 0.0
        %v4566 = vmax.f32 %v4546, 0.0
        %v4567 = vmax.f32 %v4549, 0.0
        %v4568 = vpack.c.bf16 %v4553, %v4552
        %v4569 = vpack.c.bf16 %v4555, %v4554
        %v4570 = vpack.c.bf16 %v4557, %v4556
        %v4571 = vpack.c.bf16 %v4559, %v4558
        %v4572 = vpack.c.bf16 %v4561, %v4560
        %v4573 = vpack.c.bf16 %v4563, %v4562
        %v4574 = vpack.c.bf16 %v4565, %v4564
        %v4575 = vpack.c.bf16 %v4567, %v4566
        %v4576 = vld [vmem:[#allocation11] sm:$0xf]
        %v4577 = vld [vmem:[#allocation11 + $0x4] sm:$0xf]
        %v4578 = vld [vmem:[#allocation11 + $0x8] sm:$0xf]
        %v4579 = vld [vmem:[#allocation11 + $0xc] sm:$0xf]
        %v4580 = vld [vmem:[#allocation11 + $0x10] sm:$0xf]
        %v4581 = vld [vmem:[#allocation11 + $0x14] sm:$0xf]
        %v4582 = vld [vmem:[#allocation11 + $0x18] sm:$0xf]
        %v4583 = vld [vmem:[#allocation11 + $0x1c] sm:$0xf]
        %v4584 = vld [vmem:[#allocation11 + $0x20] sm:$0xf]
        %v4585 = vld [vmem:[#allocation11 + $0x24] sm:$0xf]
        %v4586 = vld [vmem:[#allocation11 + $0x28] sm:$0xf]
        %v4587 = vld [vmem:[#allocation11 + $0x2c] sm:$0xf]
        %v4588 = vld [vmem:[#allocation11 + $0x30] sm:$0xf]
        %v4589 = vld [vmem:[#allocation11 + $0x34] sm:$0xf]
        %v4590 = vld [vmem:[#allocation11 + $0x38] sm:$0xf]
        %v4591 = vld [vmem:[#allocation11 + $0x3c] sm:$0xf]
        %v4608 = vunpack.c.l.b16 %v4576
        %v4609 = vunpack.c.l.b16 %v4577
        %v4610 = vunpack.c.l.b16 %v4578
        %v4611 = vunpack.c.l.b16 %v4579
        %v4612 = vunpack.c.l.b16 %v4580
        %v4613 = vunpack.c.l.b16 %v4581
        %v4614 = vunpack.c.l.b16 %v4582
        %v4615 = vunpack.c.l.b16 %v4583
        %v4616 = vunpack.c.l.b16 %v4584
        %v4617 = vunpack.c.l.b16 %v4585
        %v4618 = vunpack.c.l.b16 %v4586
        %v4619 = vunpack.c.l.b16 %v4587
        %v4620 = vunpack.c.l.b16 %v4588
        %v4621 = vunpack.c.l.b16 %v4589
        %v4622 = vunpack.c.l.b16 %v4590
        %v4623 = vunpack.c.l.b16 %v4591
        %v4624 = vpack.c.b16 %v4609, %v4608
        %v4625 = vpack.c.b16 %v4611, %v4610
        %v4626 = vpack.c.b16 %v4613, %v4612
        %v4627 = vpack.c.b16 %v4615, %v4614
        %v4628 = vpack.c.b16 %v4617, %v4616
        %v4629 = vpack.c.b16 %v4619, %v4618
        %v4630 = vpack.c.b16 %v4621, %v4620
        %v4631 = vpack.c.b16 %v4623, %v4622
        %4640 = vmatprep.subr.bf16.mxu0 0
        %4641 = vmatpush1.bf16.msra.mxu0 %v4624
        %4642 = vmatprep.subr.bf16.mxu0 0
        %4643 = vmatpush1.bf16.msra.mxu0 %v4625
        %4644 = vmatprep.subr.bf16.mxu0 0
        %4645 = vmatpush1.bf16.msra.mxu0 %v4626
        %4646 = vmatprep.subr.bf16.mxu0 0
        %4647 = vmatpush1.bf16.msra.mxu0 %v4627
        %4648 = vmatprep.subr.bf16.mxu0 0
        %4649 = vmatpush1.bf16.msra.mxu0 %v4628
        %4650 = vmatprep.subr.bf16.mxu0 0
        %4651 = vmatpush1.bf16.msra.mxu0 %v4629
        %4652 = vmatprep.subr.bf16.mxu0 0
        %4653 = vmatpush1.bf16.msra.mxu0 %v4630
        %4654 = vmatprep.subr.bf16.mxu0 0
        %4655 = vmatpush1.bf16.msra.mxu0 %v4631
        %4656 = vmatprep.subr.bf16.mxu0 0
        %4657 = vmatpush1.bf16.msra.mxu0 0
        %4658 = vmatprep.subr.bf16.mxu0 0
        %4659 = vmatpush1.bf16.msra.mxu0 0
        %4660 = vmatprep.subr.bf16.mxu0 0
        %4661 = vmatpush1.bf16.msra.mxu0 0
        %4662 = vmatprep.subr.bf16.mxu0 0
        %4663 = vmatpush1.bf16.msra.mxu0 0
        %4664 = vmatprep.subr.bf16.mxu0 0
        %4665 = vmatpush1.bf16.msra.mxu0 0
        %4666 = vmatprep.subr.bf16.mxu0 0
        %4667 = vmatpush1.bf16.msra.mxu0 0
        %4668 = vmatprep.subr.bf16.mxu0 0
        %4669 = vmatpush1.bf16.msra.mxu0 0
        %4670 = vmatprep.subr.bf16.mxu0 0
        %4671 = vmatpush1.bf16.msra.mxu0 0
        %4672 = vmatprep.mubr.bf16.mxu0 0
        %4673 = vmatmul.mubr.bf16.gmra.mrb[0].mxu0 %v4568
        %v4674 = vpop.f32.mrb[0].mxu0
        %v4675 = vadd.f32 0.0, %v4674
        %v4676 = vpop.f32.mrb[0].mxu0
        %v4677 = vpop.f32.mrb[0].mxu0
        %v4678 = vadd.f32 0.0, %v4677
        %v4679 = vpop.f32.mrb[0].mxu0
        %4680 = vmatprep.mubr.bf16.mxu0 0
        %4681 = vmatmul.mubr.bf16.gmra.mrb[0].mxu0 %v4569
        %v4682 = vpop.f32.mrb[0].mxu0
        %v4683 = vadd.f32 0.0, %v4682
        %v4684 = vpop.f32.mrb[0].mxu0
        %v4685 = vpop.f32.mrb[0].mxu0
        %v4686 = vadd.f32 0.0, %v4685
        %v4687 = vpop.f32.mrb[0].mxu0
        %4688 = vmatprep.mubr.bf16.mxu0 0
        %4689 = vmatmul.mubr.bf16.gmra.mrb[0].mxu0 %v4570
        %v4690 = vpop.f32.mrb[0].mxu0
        %v4691 = vadd.f32 0.0, %v4690
        %v4692 = vpop.f32.mrb[0].mxu0
        %v4693 = vpop.f32.mrb[0].mxu0
        %v4694 = vadd.f32 0.0, %v4693
        %v4695 = vpop.f32.mrb[0].mxu0
        %4696 = vmatprep.mubr.bf16.mxu0 0
        %4697 = vmatmul.mubr.bf16.gmra.mrb[0].mxu0 %v4571
        %v4698 = vpop.f32.mrb[0].mxu0
        %v4699 = vadd.f32 0.0, %v4698
        %v4700 = vpop.f32.mrb[0].mxu0
        %v4701 = vpop.f32.mrb[0].mxu0
        %v4702 = vadd.f32 0.0, %v4701
        %v4703 = vpop.f32.mrb[0].mxu0
        %4704 = vmatprep.mubr.bf16.mxu0 0
        %4705 = vmatmul.mubr.bf16.gmra.mrb[0].mxu0 %v4572
        %v4706 = vpop.f32.mrb[0].mxu0
        %v4707 = vadd.f32 0.0, %v4706
        %v4708 = vpop.f32.mrb[0].mxu0
        %v4709 = vpop.f32.mrb[0].mxu0
        %v4710 = vadd.f32 0.0, %v4709
        %v4711 = vpop.f32.mrb[0].mxu0
        %4712 = vmatprep.mubr.bf16.mxu0 0
        %4713 = vmatmul.mubr.bf16.gmra.mrb[0].mxu0 %v4573
        %v4714 = vpop.f32.mrb[0].mxu0
        %v4715 = vadd.f32 0.0, %v4714
        %v4716 = vpop.f32.mrb[0].mxu0
        %v4717 = vpop.f32.mrb[0].mxu0
        %v4718 = vadd.f32 0.0, %v4717
        %v4719 = vpop.f32.mrb[0].mxu0
        %4720 = vmatprep.mubr.bf16.mxu0 0
        %4721 = vmatmul.mubr.bf16.gmra.mrb[0].mxu0 %v4574
        %v4722 = vpop.f32.mrb[0].mxu0
        %v4723 = vadd.f32 0.0, %v4722
        %v4724 = vpop.f32.mrb[0].mxu0
        %v4725 = vpop.f32.mrb[0].mxu0
        %v4726 = vadd.f32 0.0, %v4725
        %v4727 = vpop.f32.mrb[0].mxu0
        %4728 = vmatprep.mubr.bf16.mxu0 0
        %4729 = vmatmul.mubr.bf16.gmra.mrb[0].mxu0 %v4575
        %v4730 = vpop.f32.mrb[0].mxu0
        %v4731 = vadd.f32 0.0, %v4730
        %v4732 = vpop.f32.mrb[0].mxu0
        %v4733 = vpop.f32.mrb[0].mxu0
        %v4734 = vadd.f32 0.0, %v4733
        %v4735 = vpop.f32.mrb[0].mxu0
        %4736 = vdwg.mxu0
        %v4737 = vpack.c.bf16 %v4678, %v4675
        %v4738 = vpack.c.bf16 %v4686, %v4683
        %v4739 = vpack.c.bf16 %v4694, %v4691
        %v4740 = vpack.c.bf16 %v4702, %v4699
        %v4741 = vpack.c.bf16 %v4710, %v4707
        %v4742 = vpack.c.bf16 %v4718, %v4715
        %v4743 = vpack.c.bf16 %v4726, %v4723
        %v4744 = vpack.c.bf16 %v4734, %v4731
        %v4753 = vunpack.c.l.b16 %v4737
        %v4754 = vunpack.c.h.b16 %v4737
        %v4755 = vunpack.c.l.b16 %v4738
        %v4756 = vunpack.c.h.b16 %v4738
        %v4757 = vunpack.c.l.b16 %v4739
        %v4758 = vunpack.c.h.b16 %v4739
        %v4759 = vunpack.c.l.b16 %v4740
        %v4760 = vunpack.c.h.b16 %v4740
        %v4761 = vunpack.c.l.b16 %v4741
        %v4762 = vunpack.c.h.b16 %v4741
        %v4763 = vunpack.c.l.b16 %v4742
        %v4764 = vunpack.c.h.b16 %v4742
        %v4765 = vunpack.c.l.b16 %v4743
        %v4766 = vunpack.c.h.b16 %v4743
        %v4767 = vunpack.c.l.b16 %v4744
        %v4768 = vunpack.c.h.b16 %v4744
        %v4769 = vpack.c.b16 %v4753, %v4753
        %v4770 = vpack.c.b16 %v4754, %v4754
        %v4771 = vpack.c.b16 %v4755, %v4755
        %v4772 = vpack.c.b16 %v4756, %v4756
        %v4773 = vpack.c.b16 %v4757, %v4757
        %v4774 = vpack.c.b16 %v4758, %v4758
        %v4775 = vpack.c.b16 %v4759, %v4759
        %v4776 = vpack.c.b16 %v4760, %v4760
        %v4777 = vpack.c.b16 %v4761, %v4761
        %v4778 = vpack.c.b16 %v4762, %v4762
        %v4779 = vpack.c.b16 %v4763, %v4763
        %v4780 = vpack.c.b16 %v4764, %v4764
        %v4781 = vpack.c.b16 %v4765, %v4765
        %v4782 = vpack.c.b16 %v4766, %v4766
        %v4783 = vpack.c.b16 %v4767, %v4767
        %v4784 = vpack.c.b16 %v4768, %v4768
        %4801 = vst [vmem:[%s403] sm:$0xf] %v4769
        %4802 = vst [vmem:[%s403 + $0x4] sm:$0xf] %v4770
        %4803 = vst [vmem:[%s403 + $0x8] sm:$0xf] %v4771
        %4804 = vst [vmem:[%s403 + $0xc] sm:$0xf] %v4772
        %4805 = vst [vmem:[%s403 + $0x10] sm:$0xf] %v4773
        %4806 = vst [vmem:[%s403 + $0x14] sm:$0xf] %v4774
        %4807 = vst [vmem:[%s403 + $0x18] sm:$0xf] %v4775
        %4808 = vst [vmem:[%s403 + $0x1c] sm:$0xf] %v4776
        %4809 = vst [vmem:[%s403 + $0x20] sm:$0xf] %v4777
        %4810 = vst [vmem:[%s403 + $0x24] sm:$0xf] %v4778
        %4811 = vst [vmem:[%s403 + $0x28] sm:$0xf] %v4779
        %4812 = vst [vmem:[%s403 + $0x2c] sm:$0xf] %v4780
        %4813 = vst [vmem:[%s403 + $0x30] sm:$0xf] %v4781
        %4814 = vst [vmem:[%s403 + $0x34] sm:$0xf] %v4782
        %4815 = vst [vmem:[%s403 + $0x38] sm:$0xf] %v4783
        %4816 = vst [vmem:[%s403 + $0x3c] sm:$0xf] %v4784
        %s4817 = sand.u32 %s177, 1
        %s4818 = scalar_lea.sflag [#allocation4], %s4817
        %s4819 = sand.u32 %s177, 1
        %s4820 = smul.addr %s4819, 128
        %s4821 = scalar_lea.vmem [#allocation13], %s4820
        %s4822 = sand.u32 %s203, 1
        %s4823 = scalar_lea.sflag [#allocation15], %s4822
        %s4824 = sand.u32 %s203, 1
        %s4825 = smul.addr %s4824, 64
        %s4826 = scalar_lea.vmem [#allocation14], %s4825
        // Predicated region
        $region69: #{sglcn_forward.4} parent=43 // pred_check
          %p4827 = pneg %p187
        $region70: #{sglcn_forward.4} parent=43 // pred_check_branch
          %4829 = sbr.rel (%p4827) target = $region72
        $region71: #{sglcn_forward.4} parent=43 // pred_region
          %s4830 = smul.u32 16, %s33
          %s4832 = ssub.s32 2048, 2048
          %4833 = vsyncadd %s4818, %s4832
          %s4834 = smul.addr %s4830, 2
          %s4835 = smul.addr %s4834, 64
          %s4836 = scalar_lea.hbm %s6, %s4835
          %s4837 = sshll.u32 %s4821, 4
          %s4838 = int_to_ptr.vmem [resolvable:$true] %s4837
          %4843 = dma.vmem_to_hbm [thread:$0]  %s4838, 2048, %s4836, %s4818, 128, 128, 8
        $region72: #{sglcn_forward.4} parent=43 // pred_fallthru
          _
        // Predicated region
        $region73: #{sglcn_forward.4} parent=43 // pred_check
          %p4844 = pneg %p213
        $region74: #{sglcn_forward.4} parent=43 // pred_check_branch
          %4846 = sbr.rel (%p4844) target = $region76
        $region75: #{sglcn_forward.4} parent=43 // pred_region
          %s4847 = smul.u32 16, %s33
          %s4849 = ssub.s32 1024, 1024
          %4850 = vsyncadd %s4823, %s4849
          %s4851 = smul.addr %s4847, 64
          %s4852 = scalar_lea.hbm %s7, %s4851
          %s4853 = sshll.u32 %s4826, 4
          %s4854 = int_to_ptr.vmem [resolvable:$true] %s4853
          %4859 = dma.vmem_to_hbm [thread:$0]  %s4854, 1024, %s4852, %s4823, 64, 64, 4
        $region76: #{sglcn_forward.4} parent=43 // pred_fallthru
          _
      $region44: #{sglcn_forward.4} parent=5 // pred_fallthru
        _
      %p4860 = scmp.le.s32.totalorder 2, %s28
      // Predicated region
      $region77: #{sglcn_forward.4} parent=5 // pred_check
        %p4861 = pneg %p4860
      $region78: #{sglcn_forward.4} parent=5 // pred_check_branch
        %4863 = sbr.rel (%p4861) target = $region80
      $region79: #{sglcn_forward.4} parent=5 // pred_region
        %s4864 = ssub.s32 %s28, 2
        // Predicated region
        $region81: #{sglcn_forward.4} parent=79 // pred_check
          %p4865 = pneg %p193
        $region82: #{sglcn_forward.4} parent=79 // pred_check_branch
          %4867 = sbr.rel (%p4865) target = $region84
        $region83: #{sglcn_forward.4} parent=79 // pred_region
          %s4868 = sand.u32 %s178, 1
          %s4869 = scalar_lea.sflag [#allocation4], %s4868
          %s4870 = sand.u32 %s178, 1
          %s4871 = smul.addr %s4870, 128
          %s4872 = scalar_lea.vmem [#allocation13], %s4871
          %4873 = dma.done %s4869, 2048
        $region84: #{sglcn_forward.4} parent=79 // pred_fallthru
          _
        // Predicated region
        $region85: #{sglcn_forward.4} parent=79 // pred_check
          %p4874 = pneg %p219
        $region86: #{sglcn_forward.4} parent=79 // pred_check_branch
          %4876 = sbr.rel (%p4874) target = $region88
        $region87: #{sglcn_forward.4} parent=79 // pred_region
          %s4877 = sand.u32 %s204, 1
          %s4878 = scalar_lea.sflag [#allocation15], %s4877
          %s4879 = sand.u32 %s204, 1
          %s4880 = smul.addr %s4879, 64
          %s4881 = scalar_lea.vmem [#allocation14], %s4880
          %4882 = dma.done %s4878, 1024
        $region88: #{sglcn_forward.4} parent=79 // pred_fallthru
          _
      $region80: #{sglcn_forward.4} parent=5 // pred_fallthru
        _
    $region6: #{sglcn_forward.4} parent=1 // loop_footer
      %s32 = sadd.s32 1, %s28
    $region7: #{sglcn_forward.4} parent=1 // loop_footer_branch
      %27 = sbr.rel target = $region3
    $region8: #{sglcn_forward.4} parent=1 // loop_exit
      _
    %4883 = vsyncpa [#allocation3], 1
    %s4884 = scalar_lea.sflag [#allocation3], 1
    %4885 = vsyncpa %s4884, 1
    %4886 = vsyncpa [#allocation7], 1
    %4887 = vsyncpa [#allocation10], 1
    %s4888 = scalar_lea.sflag [#allocation10], 1
    %4889 = vsyncpa %s4888, 1
    %4890 = vsyncpa [#allocation4], 1
    %s4891 = scalar_lea.sflag [#allocation4], 1
    %4892 = vsyncpa %s4891, 1
    %4893 = vsyncpa [#allocation15], 1
    %s4894 = scalar_lea.sflag [#allocation15], 1
    %4895 = vsyncpa %s4894, 1
    %4896 = vsyncpa [#allocation5], 1
    %s4897 = scalar_lea.sflag [#allocation5], 1
    %4898 = vsyncpa %s4897, 1

</llo_original>
